<compile_context>
chip_gen: v7x
topology: tpu7x:2x2x1
jax: 0.10.0
libtpu: 0.0.40
codegen_flags: <defaults>
</compile_context>

<pallas_src>
import functools

import numpy as np
import jax
import jax.numpy as jnp
from jax import lax
from jax.experimental import pallas as pl
from jax.experimental.pallas import tpu as pltpu

EPS = 1e-5


# ----------------------------------------------------------------------------
# Fused kernel: bn1+relu+pad -> conv3x3(bn2-folded) -> +b -> relu -> conv1x1 -> +b
# ----------------------------------------------------------------------------
def _seg_head_kernel(x_ref, s1_ref, o1_ref, w1_ref, b1_ref, w2t_ref, b2_ref,
                     o_ref, xp_ref, *, H, W, Ci, Cm, Co):
    """Per-grid-step refs:
         x_ref  : (1, H, W, Ci)      bf16  raw input (NHWC)
         s1_ref : (1, 1, Ci)         f32   bn1 scale
         o1_ref : (1, 1, Ci)         f32   bn1 offset
         w1_ref : (3, 3, Ci, Cm)     bf16  conv1 weight with bn2 scale folded in
         b1_ref : (1, Cm)            f32   folded bn2 bias
         w2t_ref: (Co, Cm)           bf16  conv2 (1x1) weight
         b2_ref : (Co, 1)            f32   conv2 bias (column for lane broadcast)
         o_ref  : (1, Co, H*W)       f32   transposed, lane-dense output
         xp_ref : (H+2, W+2, Ci)     f32   VMEM scratch: padded relu(bn1(x))
    """
    # ---- BN1 + ReLU prologue into the zero-padded scratch tile -------------
    xp_ref[...] = jnp.zeros_like(xp_ref)
    x = x_ref[0].astype(jnp.float32)                              # (H, W, Ci)
    a = jnp.maximum(x * s1_ref[...] + o1_ref[...], 0.0)
    xp_ref[1:H + 1, 1:W + 1, :] = a

    # ---- 3x3 conv as 9 shifted-slice MXU matmuls, f32 accumulation ---------
    acc = jnp.zeros((H * W, Cm), jnp.float32)
    for di in range(3):                                           # static, unrolled
        for dj in range(3):
            patch = xp_ref[di:di + H, dj:dj + W, :].reshape(H * W, Ci)
            acc = acc + jnp.dot(patch.astype(jnp.bfloat16),
                                w1_ref[di, dj],
                                preferred_element_type=jnp.float32)

    # ---- folded BN2 bias + ReLU ---------------------------------------------
    z = jnp.maximum(acc + b1_ref[...], 0.0).astype(jnp.bfloat16)  # (H*W, Cm)

    # ---- 1x1 conv, computed transposed: (Co, Cm) x (H*W, Cm)^T -> (Co, H*W) --
    out_t = lax.dot_general(w2t_ref[...], z,
                            dimension_numbers=(((1,), (1,)), ((), ())),
                            preferred_element_type=jnp.float32)
    o_ref[0] = out_t + b2_ref[...]                                # lane-dense store


# ----------------------------------------------------------------------------
# SegHead forward (NCHW in / NCHW out, matching the PyTorch module)
# ----------------------------------------------------------------------------
def seg_head_forward(params, x_nchw, scale_factor=None):
    N, Ci, H, W = x_nchw.shape
    w1 = params['conv1_w']                                        # (Cm, Ci, 3, 3)
    w2 = params['conv2_w']                                        # (Co, Cm, 1, 1)
    Cm = w1.shape[0]
    Co = w2.shape[0]

    bn1, bn2 = params['bn1'], params['bn2']
    s1 = bn1['gamma'] * lax.rsqrt(bn1['var'] + EPS)
    o1 = bn1['beta'] - bn1['mean'] * s1
    s2 = bn2['gamma'] * lax.rsqrt(bn2['var'] + EPS)

    # One fused host op: NCHW->NHWC relayout + bf16 cast. Everything else is
    # tiny per-channel vectors / weights computed once.
    x_nhwc = jnp.transpose(x_nchw, (0, 2, 3, 1)).astype(jnp.bfloat16)
    s1v = s1.reshape(1, 1, Ci).astype(jnp.float32)
    o1v = o1.reshape(1, 1, Ci).astype(jnp.float32)
    # Fold BN2 scale into conv1 weight columns; reorder to (3, 3, Ci, Cm).
    w1m = (jnp.transpose(w1, (2, 3, 1, 0)) *
           s2[None, None, None, :]).astype(jnp.bfloat16)
    b1 = (bn2['beta'] - bn2['mean'] * s2).reshape(1, Cm).astype(jnp.float32)
    w2t = w2.reshape(Co, Cm).astype(jnp.bfloat16)                 # (Co, Cm)
    b2 = params['conv2_b'].reshape(Co, 1).astype(jnp.float32)

    kernel = functools.partial(_seg_head_kernel, H=H, W=W, Ci=Ci, Cm=Cm, Co=Co)
    out_flat = pl.pallas_call(
        kernel,
        out_shape=jax.ShapeDtypeStruct((N, Co, H * W), jnp.float32),
        grid=(N,),
        in_specs=[
            pl.BlockSpec((1, H, W, Ci), lambda n: (n, 0, 0, 0)),
            pl.BlockSpec((1, 1, Ci), lambda n: (0, 0, 0)),
            pl.BlockSpec((1, 1, Ci), lambda n: (0, 0, 0)),
            pl.BlockSpec((3, 3, Ci, Cm), lambda n: (0, 0, 0, 0)),
            pl.BlockSpec((1, Cm), lambda n: (0, 0)),
            pl.BlockSpec((Co, Cm), lambda n: (0, 0)),
            pl.BlockSpec((Co, 1), lambda n: (0, 0)),
        ],
        out_specs=pl.BlockSpec((1, Co, H * W), lambda n: (n, 0, 0)),
        scratch_shapes=[pltpu.VMEM((H + 2, W + 2, Ci), jnp.float32)],
        compiler_params=pltpu.CompilerParams(
            dimension_semantics=("parallel",)),
    )(x_nhwc, s1v, o1v, w1m, b1, w2t, b2)

    out = out_flat.reshape(N, Co, H, W)                           # free reshape, NCHW
    if scale_factor is not None:
        # F.interpolate(bilinear, align_corners=False) == half-pixel sampling,
        # matching jax.image.resize 'bilinear'.
        out = jax.image.resize(
            out, (N, Co, H * scale_factor, W * scale_factor), method='bilinear')
    return out


# ----------------------------------------------------------------------------
# Pure-JAX reference (for correctness checking)
# ----------------------------------------------------------------------------
def seg_head_ref(params, x, scale_factor=None):
    def bn(v, p):
        s = p['gamma'] * lax.rsqrt(p['var'] + EPS)
        b = p['beta'] - p['mean'] * s
        return v * s[None, :, None, None] + b[None, :, None, None]

    h = jax.nn.relu(bn(x, params['bn1']))
    h = lax.conv_general_dilated(h, params['conv1_w'], (1, 1), ((1, 1), (1, 1)),
                                 dimension_numbers=('NCHW', 'OIHW', 'NCHW'),
                                 precision=lax.Precision.HIGHEST)
    h = jax.nn.relu(bn(h, params['bn2']))
    out = lax.conv_general_dilated(h, params['conv2_w'], (1, 1), ((0, 0), (0, 0)),
                                   dimension_numbers=('NCHW', 'OIHW', 'NCHW'),
                                   precision=lax.Precision.HIGHEST)
    out = out + params['conv2_b'][None, :, None, None]
    if scale_factor is not None:
        N, C, H, W = out.shape
        out = jax.image.resize(out, (N, C, H * scale_factor, W * scale_factor),
                               method='bilinear')
    return out


# ----------------------------------------------------------------------------
# Deterministic synthetic parameters
# ----------------------------------------------------------------------------
def make_params(key, inplanes, interplanes, outplanes):
    ks = jax.random.split(key, 5)

    def bn(c, k):
        k1, k2, k3, k4 = jax.random.split(k, 4)
        return {'gamma': 1.0 + 0.1 * jax.random.normal(k1, (c,), jnp.float32),
                'beta': 0.1 * jax.random.normal(k2, (c,), jnp.float32),
                'mean': 0.1 * jax.random.normal(k3, (c,), jnp.float32),
                'var': jax.random.uniform(k4, (c,), jnp.float32, 0.5, 1.5)}

    fan1 = inplanes * 9
    fan2 = interplanes
    return {
        'bn1': bn(inplanes, ks[0]),
        'conv1_w': (1.0 / np.sqrt(fan1)) * jax.random.normal(
            ks[1], (interplanes, inplanes, 3, 3), jnp.float32),
        'bn2': bn(interplanes, ks[2]),
        'conv2_w': (1.0 / np.sqrt(fan2)) * jax.random.normal(
            ks[3], (outplanes, interplanes, 1, 1), jnp.float32),
        'conv2_b': 0.1 * jax.random.normal(ks[4], (outplanes,), jnp.float32),
    }


# ----------------------------------------------------------------------------
if __name__ == "__main__":
    N, Ci, H, W = 2, 32, 16, 16        # batch, inplanes, spatial
    Cm, Co = 64, 19                    # interplanes, outplanes (seg classes)

    key = jax.random.PRNGKey(0)
    kp, kx = jax.random.split(key)
    params = make_params(kp, Ci, Cm, Co)
    x = jax.random.normal(kx, (N, Ci, H, W), jnp.float32)

    # scale_factor=None path
    fwd = jax.jit(functools.partial(seg_head_forward, params))
    out = jax.block_until_ready(fwd(x))
    assert out.shape == (N, Co, H, W)
    assert bool(jnp.all(jnp.isfinite(out)))

    ref = jax.block_until_ready(jax.jit(functools.partial(seg_head_ref, params))(x))
    np.testing.assert_allclose(np.asarray(out), np.asarray(ref),
                               rtol=5e-2, atol=5e-2)

    # scale_factor path (bilinear upsample, align_corners=False semantics)
    fwd2 = jax.jit(functools.partial(seg_head_forward, params, scale_factor=2))
    out2 = jax.block_until_ready(fwd2(x))
    assert out2.shape == (N, Co, 2 * H, 2 * W)
    assert bool(jnp.all(jnp.isfinite(out2)))

    print("KERNEL_OK")
</pallas_src>

<mosaic_0001>
module attributes {stable_mosaic.version = 11 : i64} {
  func.func @_seg_head_kernel(%arg0: i32, %arg1: memref<1x16x16x32xbf16, #tpu.memory_space<vmem>>, %arg2: memref<1x1x32xf32, #tpu.memory_space<vmem>>, %arg3: memref<1x1x32xf32, #tpu.memory_space<vmem>>, %arg4: memref<3x3x32x64xbf16, #tpu.memory_space<vmem>>, %arg5: memref<1x64xf32, #tpu.memory_space<vmem>>, %arg6: memref<19x64xbf16, #tpu.memory_space<vmem>>, %arg7: memref<19x1xf32, #tpu.memory_space<vmem>>, %arg8: memref<1x19x256xf32, #tpu.memory_space<vmem>>, %arg9: memref<18x18x32xf32, #tpu.memory_space<vmem>>) attributes {dimension_semantics = [#tpu.dimension_semantics<parallel>], iteration_bounds = array<i64: 2>, scalar_prefetch = 0 : i64, scratch_operands = 1 : i64, tpu.core_type = #tpu.core_type<tc>, window_params = [{transform_indices = @transform_0, window_bounds = array<i64: 1, 16, 16, 32>}, {pipeline_mode = #tpu.pipeline_mode<synchronous>, transform_indices = @transform_1, window_bounds = array<i64: 1, 1, 32>}, {pipeline_mode = #tpu.pipeline_mode<synchronous>, transform_indices = @transform_2, window_bounds = array<i64: 1, 1, 32>}, {pipeline_mode = #tpu.pipeline_mode<synchronous>, transform_indices = @transform_3, window_bounds = array<i64: 3, 3, 32, 64>}, {pipeline_mode = #tpu.pipeline_mode<synchronous>, transform_indices = @transform_4, window_bounds = array<i64: 1, 64>}, {pipeline_mode = #tpu.pipeline_mode<synchronous>, transform_indices = @transform_5, window_bounds = array<i64: 19, 64>}, {pipeline_mode = #tpu.pipeline_mode<synchronous>, transform_indices = @transform_6, window_bounds = array<i64: 19, 1>}, {transform_indices = @transform_7, window_bounds = array<i64: 1, 19, 256>}]} {
    %cst = arith.constant 0.000000e+00 : f32
    %0 = vector.broadcast %cst : f32 to vector<18x18x32xf32>
    %c0 = arith.constant 0 : index
    %c0_0 = arith.constant 0 : index
    %c0_1 = arith.constant 0 : index
    %1 = vector.load %arg9[%c0, %c0_0, %c0_1] : memref<18x18x32xf32, #tpu.memory_space<vmem>>, vector<18x18x32xf32>
    tpu.vector_store %arg9[%c0, %c0_0, %c0_1], %0 {strides = array<i32>} : memref<18x18x32xf32, #tpu.memory_space<vmem>>, vector<18x18x32xf32>,
    %c0_2 = arith.constant 0 : index
    %c0_3 = arith.constant 0 : index
    %c0_4 = arith.constant 0 : index
    %c0_5 = arith.constant 0 : index
    %2 = vector.load %arg1[%c0_2, %c0_3, %c0_4, %c0_5] : memref<1x16x16x32xbf16, #tpu.memory_space<vmem>>, vector<1x16x16x32xbf16>
    %3 = vector.shape_cast %2 : vector<1x16x16x32xbf16> to vector<16x16x32xbf16>
    %4 = arith.extf %3 : vector<16x16x32xbf16> to vector<16x16x32xf32>
    %c0_6 = arith.constant 0 : index
    %c0_7 = arith.constant 0 : index
    %c0_8 = arith.constant 0 : index
    %5 = vector.load %arg2[%c0_6, %c0_7, %c0_8] : memref<1x1x32xf32, #tpu.memory_space<vmem>>, vector<1x1x32xf32>
    %6 = vector.broadcast %5 : vector<1x1x32xf32> to vector<16x16x32xf32>
    %7 = arith.mulf %4, %6 : vector<16x16x32xf32>
    %c0_9 = arith.constant 0 : index
    %c0_10 = arith.constant 0 : index
    %c0_11 = arith.constant 0 : index
    %8 = vector.load %arg3[%c0_9, %c0_10, %c0_11] : memref<1x1x32xf32, #tpu.memory_space<vmem>>, vector<1x1x32xf32>
    %9 = vector.broadcast %8 : vector<1x1x32xf32> to vector<16x16x32xf32>
    %10 = arith.addf %7, %9 : vector<16x16x32xf32>
    %cst_12 = arith.constant 0.000000e+00 : f32
    %11 = vector.broadcast %cst_12 : f32 to vector<16x16x32xf32>
    %12 = arith.maximumf %10, %11 : vector<16x16x32xf32>
    %c1 = arith.constant 1 : index
    %c1_13 = arith.constant 1 : index
    %c0_14 = arith.constant 0 : index
    %13 = vector.load %arg9[%c1, %c1_13, %c0_14] : memref<18x18x32xf32, #tpu.memory_space<vmem>>, vector<16x16x32xf32>
    tpu.vector_store %arg9[%c1, %c1_13, %c0_14], %12 {strides = array<i32>} : memref<18x18x32xf32, #tpu.memory_space<vmem>>, vector<16x16x32xf32>,
    %cst_15 = arith.constant 0.000000e+00 : f32
    %14 = vector.broadcast %cst_15 : f32 to vector<256x64xf32>
    %c0_16 = arith.constant 0 : index
    %c0_17 = arith.constant 0 : index
    %c0_18 = arith.constant 0 : index
    %15 = vector.load %arg9[%c0_16, %c0_17, %c0_18] : memref<18x18x32xf32, #tpu.memory_space<vmem>>, vector<16x16x32xf32>
    %16 = vector.shape_cast %15 : vector<16x16x32xf32> to vector<256x32xf32>
    %17 = arith.truncf %16 : vector<256x32xf32> to vector<256x32xbf16>
    %c0_19 = arith.constant 0 : index
    %c0_20 = arith.constant 0 : index
    %c0_21 = arith.constant 0 : index
    %c0_22 = arith.constant 0 : index
    %18 = vector.load %arg4[%c0_19, %c0_20, %c0_21, %c0_22] : memref<3x3x32x64xbf16, #tpu.memory_space<vmem>>, vector<1x1x32x64xbf16>
    %19 = vector.shape_cast %18 : vector<1x1x32x64xbf16> to vector<32x64xbf16>
    %cst_23 = arith.constant dense<0.000000e+00> : vector<256x64xf32>
    %20 = tpu.matmul %17, %19, %cst_23 {dimension_numbers = #tpu.dot_dimension_numbers<[1], [0], [0], [1], [0, 0, 1, 1], [], []>} : vector<256x32xbf16>, vector<32x64xbf16>, vector<256x64xf32> -> vector<256x64xf32>
    %21 = arith.addf %14, %20 : vector<256x64xf32>
    %c0_24 = arith.constant 0 : index
    %c1_25 = arith.constant 1 : index
    %c0_26 = arith.constant 0 : index
    %22 = vector.load %arg9[%c0_24, %c1_25, %c0_26] : memref<18x18x32xf32, #tpu.memory_space<vmem>>, vector<16x16x32xf32>
    %23 = vector.shape_cast %22 : vector<16x16x32xf32> to vector<256x32xf32>
    %24 = arith.truncf %23 : vector<256x32xf32> to vector<256x32xbf16>
    %c0_27 = arith.constant 0 : index
    %c1_28 = arith.constant 1 : index
    %c0_29 = arith.constant 0 : index
    %c0_30 = arith.constant 0 : index
    %25 = vector.load %arg4[%c0_27, %c1_28, %c0_29, %c0_30] : memref<3x3x32x64xbf16, #tpu.memory_space<vmem>>, vector<1x1x32x64xbf16>
    %26 = vector.shape_cast %25 : vector<1x1x32x64xbf16> to vector<32x64xbf16>
    %cst_31 = arith.constant dense<0.000000e+00> : vector<256x64xf32>
    %27 = tpu.matmul %24, %26, %cst_31 {dimension_numbers = #tpu.dot_dimension_numbers<[1], [0], [0], [1], [0, 0, 1, 1], [], []>} : vector<256x32xbf16>, vector<32x64xbf16>, vector<256x64xf32> -> vector<256x64xf32>
    %28 = arith.addf %21, %27 : vector<256x64xf32>
    %c0_32 = arith.constant 0 : index
    %c2 = arith.constant 2 : index
    %c0_33 = arith.constant 0 : index
    %29 = vector.load %arg9[%c0_32, %c2, %c0_33] : memref<18x18x32xf32, #tpu.memory_space<vmem>>, vector<16x16x32xf32>
    %30 = vector.shape_cast %29 : vector<16x16x32xf32> to vector<256x32xf32>
    %31 = arith.truncf %30 : vector<256x32xf32> to vector<256x32xbf16>
    %c0_34 = arith.constant 0 : index
    %c2_35 = arith.constant 2 : index
    %c0_36 = arith.constant 0 : index
    %c0_37 = arith.constant 0 : index
    %32 = vector.load %arg4[%c0_34, %c2_35, %c0_36, %c0_37] : memref<3x3x32x64xbf16, #tpu.memory_space<vmem>>, vector<1x1x32x64xbf16>
    %33 = vector.shape_cast %32 : vector<1x1x32x64xbf16> to vector<32x64xbf16>
    %cst_38 = arith.constant dense<0.000000e+00> : vector<256x64xf32>
    %34 = tpu.matmul %31, %33, %cst_38 {dimension_numbers = #tpu.dot_dimension_numbers<[1], [0], [0], [1], [0, 0, 1, 1], [], []>} : vector<256x32xbf16>, vector<32x64xbf16>, vector<256x64xf32> -> vector<256x64xf32>
    %35 = arith.addf %28, %34 : vector<256x64xf32>
    %c1_39 = arith.constant 1 : index
    %c0_40 = arith.constant 0 : index
    %c0_41 = arith.constant 0 : index
    %36 = vector.load %arg9[%c1_39, %c0_40, %c0_41] : memref<18x18x32xf32, #tpu.memory_space<vmem>>, vector<16x16x32xf32>
    %37 = vector.shape_cast %36 : vector<16x16x32xf32> to vector<256x32xf32>
    %38 = arith.truncf %37 : vector<256x32xf32> to vector<256x32xbf16>
    %c1_42 = arith.constant 1 : index
    %c0_43 = arith.constant 0 : index
    %c0_44 = arith.constant 0 : index
    %c0_45 = arith.constant 0 : index
    %39 = vector.load %arg4[%c1_42, %c0_43, %c0_44, %c0_45] : memref<3x3x32x64xbf16, #tpu.memory_space<vmem>>, vector<1x1x32x64xbf16>
    %40 = vector.shape_cast %39 : vector<1x1x32x64xbf16> to vector<32x64xbf16>
    %cst_46 = arith.constant dense<0.000000e+00> : vector<256x64xf32>
    %41 = tpu.matmul %38, %40, %cst_46 {dimension_numbers = #tpu.dot_dimension_numbers<[1], [0], [0], [1], [0, 0, 1, 1], [], []>} : vector<256x32xbf16>, vector<32x64xbf16>, vector<256x64xf32> -> vector<256x64xf32>
    %42 = arith.addf %35, %41 : vector<256x64xf32>
    %c1_47 = arith.constant 1 : index
    %c1_48 = arith.constant 1 : index
    %c0_49 = arith.constant 0 : index
    %43 = vector.load %arg9[%c1_47, %c1_48, %c0_49] : memref<18x18x32xf32, #tpu.memory_space<vmem>>, vector<16x16x32xf32>
    %44 = vector.shape_cast %43 : vector<16x16x32xf32> to vector<256x32xf32>
    %45 = arith.truncf %44 : vector<256x32xf32> to vector<256x32xbf16>
    %c1_50 = arith.constant 1 : index
    %c1_51 = arith.constant 1 : index
    %c0_52 = arith.constant 0 : index
    %c0_53 = arith.constant 0 : index
    %46 = vector.load %arg4[%c1_50, %c1_51, %c0_52, %c0_53] : memref<3x3x32x64xbf16, #tpu.memory_space<vmem>>, vector<1x1x32x64xbf16>
    %47 = vector.shape_cast %46 : vector<1x1x32x64xbf16> to vector<32x64xbf16>
    %cst_54 = arith.constant dense<0.000000e+00> : vector<256x64xf32>
    %48 = tpu.matmul %45, %47, %cst_54 {dimension_numbers = #tpu.dot_dimension_numbers<[1], [0], [0], [1], [0, 0, 1, 1], [], []>} : vector<256x32xbf16>, vector<32x64xbf16>, vector<256x64xf32> -> vector<256x64xf32>
    %49 = arith.addf %42, %48 : vector<256x64xf32>
    %c1_55 = arith.constant 1 : index
    %c2_56 = arith.constant 2 : index
    %c0_57 = arith.constant 0 : index
    %50 = vector.load %arg9[%c1_55, %c2_56, %c0_57] : memref<18x18x32xf32, #tpu.memory_space<vmem>>, vector<16x16x32xf32>
    %51 = vector.shape_cast %50 : vector<16x16x32xf32> to vector<256x32xf32>
    %52 = arith.truncf %51 : vector<256x32xf32> to vector<256x32xbf16>
    %c1_58 = arith.constant 1 : index
    %c2_59 = arith.constant 2 : index
    %c0_60 = arith.constant 0 : index
    %c0_61 = arith.constant 0 : index
    %53 = vector.load %arg4[%c1_58, %c2_59, %c0_60, %c0_61] : memref<3x3x32x64xbf16, #tpu.memory_space<vmem>>, vector<1x1x32x64xbf16>
    %54 = vector.shape_cast %53 : vector<1x1x32x64xbf16> to vector<32x64xbf16>
    %cst_62 = arith.constant dense<0.000000e+00> : vector<256x64xf32>
    %55 = tpu.matmul %52, %54, %cst_62 {dimension_numbers = #tpu.dot_dimension_numbers<[1], [0], [0], [1], [0, 0, 1, 1], [], []>} : vector<256x32xbf16>, vector<32x64xbf16>, vector<256x64xf32> -> vector<256x64xf32>
    %56 = arith.addf %49, %55 : vector<256x64xf32>
    %c2_63 = arith.constant 2 : index
    %c0_64 = arith.constant 0 : index
    %c0_65 = arith.constant 0 : index
    %57 = vector.load %arg9[%c2_63, %c0_64, %c0_65] : memref<18x18x32xf32, #tpu.memory_space<vmem>>, vector<16x16x32xf32>
    %58 = vector.shape_cast %57 : vector<16x16x32xf32> to vector<256x32xf32>
    %59 = arith.truncf %58 : vector<256x32xf32> to vector<256x32xbf16>
    %c2_66 = arith.constant 2 : index
    %c0_67 = arith.constant 0 : index
    %c0_68 = arith.constant 0 : index
    %c0_69 = arith.constant 0 : index
    %60 = vector.load %arg4[%c2_66, %c0_67, %c0_68, %c0_69] : memref<3x3x32x64xbf16, #tpu.memory_space<vmem>>, vector<1x1x32x64xbf16>
    %61 = vector.shape_cast %60 : vector<1x1x32x64xbf16> to vector<32x64xbf16>
    %cst_70 = arith.constant dense<0.000000e+00> : vector<256x64xf32>
    %62 = tpu.matmul %59, %61, %cst_70 {dimension_numbers = #tpu.dot_dimension_numbers<[1], [0], [0], [1], [0, 0, 1, 1], [], []>} : vector<256x32xbf16>, vector<32x64xbf16>, vector<256x64xf32> -> vector<256x64xf32>
    %63 = arith.addf %56, %62 : vector<256x64xf32>
    %c2_71 = arith.constant 2 : index
    %c1_72 = arith.constant 1 : index
    %c0_73 = arith.constant 0 : index
    %64 = vector.load %arg9[%c2_71, %c1_72, %c0_73] : memref<18x18x32xf32, #tpu.memory_space<vmem>>, vector<16x16x32xf32>
    %65 = vector.shape_cast %64 : vector<16x16x32xf32> to vector<256x32xf32>
    %66 = arith.truncf %65 : vector<256x32xf32> to vector<256x32xbf16>
    %c2_74 = arith.constant 2 : index
    %c1_75 = arith.constant 1 : index
    %c0_76 = arith.constant 0 : index
    %c0_77 = arith.constant 0 : index
    %67 = vector.load %arg4[%c2_74, %c1_75, %c0_76, %c0_77] : memref<3x3x32x64xbf16, #tpu.memory_space<vmem>>, vector<1x1x32x64xbf16>
    %68 = vector.shape_cast %67 : vector<1x1x32x64xbf16> to vector<32x64xbf16>
    %cst_78 = arith.constant dense<0.000000e+00> : vector<256x64xf32>
    %69 = tpu.matmul %66, %68, %cst_78 {dimension_numbers = #tpu.dot_dimension_numbers<[1], [0], [0], [1], [0, 0, 1, 1], [], []>} : vector<256x32xbf16>, vector<32x64xbf16>, vector<256x64xf32> -> vector<256x64xf32>
    %70 = arith.addf %63, %69 : vector<256x64xf32>
    %c2_79 = arith.constant 2 : index
    %c2_80 = arith.constant 2 : index
    %c0_81 = arith.constant 0 : index
    %71 = vector.load %arg9[%c2_79, %c2_80, %c0_81] : memref<18x18x32xf32, #tpu.memory_space<vmem>>, vector<16x16x32xf32>
    %72 = vector.shape_cast %71 : vector<16x16x32xf32> to vector<256x32xf32>
    %73 = arith.truncf %72 : vector<256x32xf32> to vector<256x32xbf16>
    %c2_82 = arith.constant 2 : index
    %c2_83 = arith.constant 2 : index
    %c0_84 = arith.constant 0 : index
    %c0_85 = arith.constant 0 : index
    %74 = vector.load %arg4[%c2_82, %c2_83, %c0_84, %c0_85] : memref<3x3x32x64xbf16, #tpu.memory_space<vmem>>, vector<1x1x32x64xbf16>
    %75 = vector.shape_cast %74 : vector<1x1x32x64xbf16> to vector<32x64xbf16>
    %cst_86 = arith.constant dense<0.000000e+00> : vector<256x64xf32>
    %76 = tpu.matmul %73, %75, %cst_86 {dimension_numbers = #tpu.dot_dimension_numbers<[1], [0], [0], [1], [0, 0, 1, 1], [], []>} : vector<256x32xbf16>, vector<32x64xbf16>, vector<256x64xf32> -> vector<256x64xf32>
    %77 = arith.addf %70, %76 : vector<256x64xf32>
    %c0_87 = arith.constant 0 : index
    %c0_88 = arith.constant 0 : index
    %78 = vector.load %arg5[%c0_87, %c0_88] : memref<1x64xf32, #tpu.memory_space<vmem>>, vector<1x64xf32>
    %79 = vector.broadcast %78 : vector<1x64xf32> to vector<256x64xf32>
    %80 = arith.addf %77, %79 : vector<256x64xf32>
    %cst_89 = arith.constant 0.000000e+00 : f32
    %81 = vector.broadcast %cst_89 : f32 to vector<256x64xf32>
    %82 = arith.maximumf %80, %81 : vector<256x64xf32>
    %83 = arith.truncf %82 : vector<256x64xf32> to vector<256x64xbf16>
    %c0_90 = arith.constant 0 : index
    %c0_91 = arith.constant 0 : index
    %84 = vector.load %arg6[%c0_90, %c0_91] : memref<19x64xbf16, #tpu.memory_space<vmem>>, vector<19x64xbf16>
    %cst_92 = arith.constant dense<0.000000e+00> : vector<19x256xf32>
    %85 = tpu.matmul %84, %83, %cst_92 {dimension_numbers = #tpu.dot_dimension_numbers<[1], [1], [0], [0], [0, 0, 1, 0], [], []>} : vector<19x64xbf16>, vector<256x64xbf16>, vector<19x256xf32> -> vector<19x256xf32>
    %c0_93 = arith.constant 0 : index
    %c0_94 = arith.constant 0 : index
    %86 = vector.load %arg7[%c0_93, %c0_94] : memref<19x1xf32, #tpu.memory_space<vmem>>, vector<19x1xf32>
    %87 = vector.broadcast %86 : vector<19x1xf32> to vector<19x256xf32>
    %88 = arith.addf %85, %87 : vector<19x256xf32>
    %c0_95 = arith.constant 0 : index
    %c0_96 = arith.constant 0 : index
    %c0_97 = arith.constant 0 : index
    %89 = vector.load %arg8[%c0_95, %c0_96, %c0_97] : memref<1x19x256xf32, #tpu.memory_space<vmem>>, vector<1x19x256xf32>
    %90 = vector.shape_cast %89 : vector<1x19x256xf32> to vector<19x256xf32>
    %91 = vector.shape_cast %88 : vector<19x256xf32> to vector<1x19x256xf32>
    tpu.vector_store %arg8[%c0_95, %c0_96, %c0_97], %91 {strides = array<i32>} : memref<1x19x256xf32, #tpu.memory_space<vmem>>, vector<1x19x256xf32>,
    return
  }
  func.func @transform_0(%arg0: i32) -> (i32, i32, i32, i32) {
    %c0_i32 = arith.constant 0 : i32
    %c0_i32_0 = arith.constant 0 : i32
    %c0_i32_1 = arith.constant 0 : i32
    %c0_i32_2 = arith.constant 0 : i32
    return %arg0, %c0_i32, %c0_i32_0, %c0_i32_1 : i32, i32, i32, i32
  }
  func.func @transform_1(%arg0: i32) -> (i32, i32, i32) {
    %c0_i32 = arith.constant 0 : i32
    %c0_i32_0 = arith.constant 0 : i32
    %c0_i32_1 = arith.constant 0 : i32
    %c0_i32_2 = arith.constant 0 : i32
    return %c0_i32, %c0_i32_0, %c0_i32_1 : i32, i32, i32
  }
  func.func @transform_2(%arg0: i32) -> (i32, i32, i32) {
    %c0_i32 = arith.constant 0 : i32
    %c0_i32_0 = arith.constant 0 : i32
    %c0_i32_1 = arith.constant 0 : i32
    %c0_i32_2 = arith.constant 0 : i32
    return %c0_i32, %c0_i32_0, %c0_i32_1 : i32, i32, i32
  }
  func.func @transform_3(%arg0: i32) -> (i32, i32, i32, i32) {
    %c0_i32 = arith.constant 0 : i32
    %c0_i32_0 = arith.constant 0 : i32
    %c0_i32_1 = arith.constant 0 : i32
    %c0_i32_2 = arith.constant 0 : i32
    %c0_i32_3 = arith.constant 0 : i32
    return %c0_i32, %c0_i32_0, %c0_i32_1, %c0_i32_2 : i32, i32, i32, i32
  }
  func.func @transform_4(%arg0: i32) -> (i32, i32) {
    %c0_i32 = arith.constant 0 : i32
    %c0_i32_0 = arith.constant 0 : i32
    %c0_i32_1 = arith.constant 0 : i32
    return %c0_i32, %c0_i32_0 : i32, i32
  }
  func.func @transform_5(%arg0: i32) -> (i32, i32) {
    %c0_i32 = arith.constant 0 : i32
    %c0_i32_0 = arith.constant 0 : i32
    %c0_i32_1 = arith.constant 0 : i32
    return %c0_i32, %c0_i32_0 : i32, i32
  }
  func.func @transform_6(%arg0: i32) -> (i32, i32) {
    %c0_i32 = arith.constant 0 : i32
    %c0_i32_0 = arith.constant 0 : i32
    %c0_i32_1 = arith.constant 0 : i32
    return %c0_i32, %c0_i32_0 : i32, i32
  }
  func.func @transform_7(%arg0: i32) -> (i32, i32, i32) {
    %c0_i32 = arith.constant 0 : i32
    %c0_i32_0 = arith.constant 0 : i32
    %c0_i32_1 = arith.constant 0 : i32
    return %arg0, %c0_i32, %c0_i32_0 : i32, i32, i32
  }
}

</mosaic_0001>

<llo_original>
// kernel: seg_head_forward.1
$region0: #{seg_head_forward.1}
  #allocation0 [shape = 'u32[]', space=smem, size = 0x4, offset = 0x4, fixed_abs, tag = 'smem constant byte address 0x4 - core index']
  #allocation1 [shape = 'u32[144,128]{1,0:T(1,128)}', space=vmem, size = 0x12000, scoped, tag = 'internal scratch']
  #allocation2 [shape = 'f32[18,18,32]{2,1,0:T(8,128)}', space=vmem, size = 0x36000, scoped, tag = 'scratch operand']
  %s0 = inlined_call_operand.vmem [shape: bf16[2,16,16,32], index: 0, kind: input, shape index: {}]
  %s1 = inlined_call_operand.vmem [shape: f32[1,1,32], index: 1, kind: input, shape index: {}]
  %s2 = inlined_call_operand.vmem [shape: f32[1,1,32], index: 2, kind: input, shape index: {}]
  %s3 = inlined_call_operand.vmem [shape: bf16[3,3,32,64], index: 3, kind: input, shape index: {}]
  %s4 = inlined_call_operand.vmem [shape: f32[1,64], index: 4, kind: input, shape index: {}]
  %s5 = inlined_call_operand.vmem [shape: bf16[19,64], index: 5, kind: input, shape index: {}]
  %s6 = inlined_call_operand.vmem [shape: f32[19,1], index: 6, kind: input, shape index: {}]
  %s7 = inlined_call_operand.vmem [shape: f32[2,19,256], index: 7, kind: output, shape index: {}]
  %s8 = sld [smem:[#allocation0]]
  $region61: #{seg_head_forward.1} parent=0
    _
  %s10 = ssub.s32 1, %s8
  %s11 = scalar_select 0, %s10, %s8
  loop: start=0, step=1, limit=4
  $region2: #{seg_head_forward.1} parent=0 // loop_pre_header
    _
  $region3: #{seg_head_forward.1} parent=0 // loop_header
    %s13 = sphi 0, %s17
    %p14 = scmp.ge.s32.totalorder %s13, 4
    %s23 = sphi 0, %s25
    %s26 = sphi 0, %s23
    %s27 = sphi 0, %s26
    %s43 = sphi 0, %s27
    %s47 = sphi 0, %s47
    %s49 = sphi 0, %s47
    %s50 = sphi 0, %s49
    %s64 = sphi 0, %s50
    %s68 = sphi 0, %s68
    %s70 = sphi 0, %s68
    %s71 = sphi 0, %s70
    %s85 = sphi 0, %s71
    %s89 = sphi 0, %s89
    %s91 = sphi 0, %s89
    %s92 = sphi 0, %s91
    %s106 = sphi 0, %s92
    %s110 = sphi 0, %s110
    %s112 = sphi 0, %s110
    %s113 = sphi 0, %s112
    %s127 = sphi 0, %s113
    %s131 = sphi 0, %s131
    %s133 = sphi 0, %s131
    %s134 = sphi 0, %s133
    %s148 = sphi 0, %s134
    %s152 = sphi 0, %s152
    %s154 = sphi 0, %s152
    %s155 = sphi 0, %s154
    %s169 = sphi 0, %s155
    %s175 = sphi 0, %s177
    %s178 = sphi 0, %s175
    %s179 = sphi 0, %s178
    %s195 = sphi 0, %s179
  $region4: #{seg_head_forward.1} parent=0 // loop_header_branch
    %16 = sbr.rel (%p14) target = $region8
  $region5: #{seg_head_forward.1} parent=0 // loop_body
    %s18 = ssub.s32 %s13, 1
    %s19 = ssub.s32 %s13, 2
    %s20 = sadd.s32 %s13, 1
    %s21 = ssub.s32 %s13, %s20
    %p22 = scmp.eq.s32.totalorder %s21, 0
    %s24 = sadd.s32 %s23, 1
    %s25 = scalar_select %p22, %s23, %s24
    %p28 = pneg %p22
    %p29 = scmp.eq.s32.totalorder %s13, 1
    %p30 = por %p28, %p29
    %p31 = scmp.ne.s32.totalorder %s23, %s26
    %p32 = scmp.eq.s32.totalorder %s13, 0
    %p33 = por %p31, %p32
    %p34 = scmp.ne.s32.totalorder %s23, %s26
    %p35 = scmp.eq.s32.totalorder %s18, 1
    %p36 = por %p34, %p35
    %p37 = scmp.ne.s32.totalorder %s26, %s27
    %p38 = scmp.eq.s32.totalorder %s18, 0
    %p39 = por %p37, %p38
    %p40 = scmp.ne.s32.totalorder %s26, %s27
    %p41 = scmp.eq.s32.totalorder %s19, 1
    %p42 = por %p40, %p41
    %p44 = scmp.ne.s32.totalorder %s27, %s43
    %p45 = scmp.eq.s32.totalorder %s19, 0
    %p46 = por %p44, %p45
    %s48 = sadd.s32 %s47, 1
    %p51 = scmp.eq.s32.totalorder %s13, 1
    %p52 = scmp.ne.s32.totalorder %s47, %s49
    %p53 = scmp.eq.s32.totalorder %s13, 0
    %p54 = por %p52, %p53
    %p55 = scmp.ne.s32.totalorder %s47, %s49
    %p56 = scmp.eq.s32.totalorder %s18, 1
    %p57 = por %p55, %p56
    %p58 = scmp.ne.s32.totalorder %s49, %s50
    %p59 = scmp.eq.s32.totalorder %s18, 0
    %p60 = por %p58, %p59
    %p61 = scmp.ne.s32.totalorder %s49, %s50
    %p62 = scmp.eq.s32.totalorder %s19, 1
    %p63 = por %p61, %p62
    %p65 = scmp.ne.s32.totalorder %s50, %s64
    %p66 = scmp.eq.s32.totalorder %s19, 0
    %p67 = por %p65, %p66
    %s69 = sadd.s32 %s68, 1
    %p72 = scmp.eq.s32.totalorder %s13, 1
    %p73 = scmp.ne.s32.totalorder %s68, %s70
    %p74 = scmp.eq.s32.totalorder %s13, 0
    %p75 = por %p73, %p74
    %p76 = scmp.ne.s32.totalorder %s68, %s70
    %p77 = scmp.eq.s32.totalorder %s18, 1
    %p78 = por %p76, %p77
    %p79 = scmp.ne.s32.totalorder %s70, %s71
    %p80 = scmp.eq.s32.totalorder %s18, 0
    %p81 = por %p79, %p80
    %p82 = scmp.ne.s32.totalorder %s70, %s71
    %p83 = scmp.eq.s32.totalorder %s19, 1
    %p84 = por %p82, %p83
    %p86 = scmp.ne.s32.totalorder %s71, %s85
    %p87 = scmp.eq.s32.totalorder %s19, 0
    %p88 = por %p86, %p87
    %s90 = sadd.s32 %s89, 1
    %p93 = scmp.eq.s32.totalorder %s13, 1
    %p94 = scmp.ne.s32.totalorder %s89, %s91
    %p95 = scmp.eq.s32.totalorder %s13, 0
    %p96 = por %p94, %p95
    %p97 = scmp.ne.s32.totalorder %s89, %s91
    %p98 = scmp.eq.s32.totalorder %s18, 1
    %p99 = por %p97, %p98
    %p100 = scmp.ne.s32.totalorder %s91, %s92
    %p101 = scmp.eq.s32.totalorder %s18, 0
    %p102 = por %p100, %p101
    %p103 = scmp.ne.s32.totalorder %s91, %s92
    %p104 = scmp.eq.s32.totalorder %s19, 1
    %p105 = por %p103, %p104
    %p107 = scmp.ne.s32.totalorder %s92, %s106
    %p108 = scmp.eq.s32.totalorder %s19, 0
    %p109 = por %p107, %p108
    %s111 = sadd.s32 %s110, 1
    %p114 = scmp.eq.s32.totalorder %s13, 1
    %p115 = scmp.ne.s32.totalorder %s110, %s112
    %p116 = scmp.eq.s32.totalorder %s13, 0
    %p117 = por %p115, %p116
    %p118 = scmp.ne.s32.totalorder %s110, %s112
    %p119 = scmp.eq.s32.totalorder %s18, 1
    %p120 = por %p118, %p119
    %p121 = scmp.ne.s32.totalorder %s112, %s113
    %p122 = scmp.eq.s32.totalorder %s18, 0
    %p123 = por %p121, %p122
    %p124 = scmp.ne.s32.totalorder %s112, %s113
    %p125 = scmp.eq.s32.totalorder %s19, 1
    %p126 = por %p124, %p125
    %p128 = scmp.ne.s32.totalorder %s113, %s127
    %p129 = scmp.eq.s32.totalorder %s19, 0
    %p130 = por %p128, %p129
    %s132 = sadd.s32 %s131, 1
    %p135 = scmp.eq.s32.totalorder %s13, 1
    %p136 = scmp.ne.s32.totalorder %s131, %s133
    %p137 = scmp.eq.s32.totalorder %s13, 0
    %p138 = por %p136, %p137
    %p139 = scmp.ne.s32.totalorder %s131, %s133
    %p140 = scmp.eq.s32.totalorder %s18, 1
    %p141 = por %p139, %p140
    %p142 = scmp.ne.s32.totalorder %s133, %s134
    %p143 = scmp.eq.s32.totalorder %s18, 0
    %p144 = por %p142, %p143
    %p145 = scmp.ne.s32.totalorder %s133, %s134
    %p146 = scmp.eq.s32.totalorder %s19, 1
    %p147 = por %p145, %p146
    %p149 = scmp.ne.s32.totalorder %s134, %s148
    %p150 = scmp.eq.s32.totalorder %s19, 0
    %p151 = por %p149, %p150
    %s153 = sadd.s32 %s152, 1
    %p156 = scmp.eq.s32.totalorder %s13, 1
    %p157 = scmp.ne.s32.totalorder %s152, %s154
    %p158 = scmp.eq.s32.totalorder %s13, 0
    %p159 = por %p157, %p158
    %p160 = scmp.ne.s32.totalorder %s152, %s154
    %p161 = scmp.eq.s32.totalorder %s18, 1
    %p162 = por %p160, %p161
    %p163 = scmp.ne.s32.totalorder %s154, %s155
    %p164 = scmp.eq.s32.totalorder %s18, 0
    %p165 = por %p163, %p164
    %p166 = scmp.ne.s32.totalorder %s154, %s155
    %p167 = scmp.eq.s32.totalorder %s19, 1
    %p168 = por %p166, %p167
    %p170 = scmp.ne.s32.totalorder %s155, %s169
    %p171 = scmp.eq.s32.totalorder %s19, 0
    %p172 = por %p170, %p171
    %s173 = ssub.s32 %s13, %s20
    %p174 = scmp.eq.s32.totalorder %s173, 0
    %s176 = sadd.s32 %s175, 1
    %s177 = scalar_select %p174, %s175, %s176
    %p180 = pneg %p174
    %p181 = scmp.eq.s32.totalorder %s13, 1
    %p182 = por %p180, %p181
    %p183 = scmp.ne.s32.totalorder %s175, %s178
    %p184 = scmp.eq.s32.totalorder %s13, 0
    %p185 = por %p183, %p184
    %p186 = scmp.ne.s32.totalorder %s175, %s178
    %p187 = scmp.eq.s32.totalorder %s18, 1
    %p188 = por %p186, %p187
    %p189 = scmp.ne.s32.totalorder %s178, %s179
    %p190 = scmp.eq.s32.totalorder %s18, 0
    %p191 = por %p189, %p190
    %p192 = scmp.ne.s32.totalorder %s178, %s179
    %p193 = scmp.eq.s32.totalorder %s19, 1
    %p194 = por %p192, %p193
    %p196 = scmp.ne.s32.totalorder %s179, %s195
    %p197 = scmp.eq.s32.totalorder %s19, 0
    %p198 = por %p196, %p197
    %p199 = scmp.le.s32.totalorder 1, %s13
    %p200 = scmp.lt.s32.totalorder %s13, 3
    %p201 = pnand %p199, %p200
    %p202 = pneg %p201
    // Predicated region
    $region9: #{seg_head_forward.1} parent=5 // pred_check
      _
    $region10: #{seg_head_forward.1} parent=5 // pred_check_branch
      %204 = sbr.rel (%p201) target = $region12
    $region11: #{seg_head_forward.1} parent=5 // pred_region
      %s205 = ssub.s32 %s13, 1
      // Predicated region
      $region13: #{seg_head_forward.1} parent=11 // pred_check
        %p206 = pneg %p60
      $region14: #{seg_head_forward.1} parent=11 // pred_check_branch
        %208 = sbr.rel (%p206) target = $region16
      $region15: #{seg_head_forward.1} parent=11 // pred_region
        _
      $region16: #{seg_head_forward.1} parent=11 // pred_fallthru
        _
      // Predicated region
      $region17: #{seg_head_forward.1} parent=11 // pred_check
        %p209 = pneg %p81
      $region18: #{seg_head_forward.1} parent=11 // pred_check_branch
        %211 = sbr.rel (%p209) target = $region20
      $region19: #{seg_head_forward.1} parent=11 // pred_region
        _
      $region20: #{seg_head_forward.1} parent=11 // pred_fallthru
        _
      // Predicated region
      $region21: #{seg_head_forward.1} parent=11 // pred_check
        %p212 = pneg %p102
      $region22: #{seg_head_forward.1} parent=11 // pred_check_branch
        %214 = sbr.rel (%p212) target = $region24
      $region23: #{seg_head_forward.1} parent=11 // pred_region
        _
      $region24: #{seg_head_forward.1} parent=11 // pred_fallthru
        _
      // Predicated region
      $region25: #{seg_head_forward.1} parent=11 // pred_check
        %p215 = pneg %p123
      $region26: #{seg_head_forward.1} parent=11 // pred_check_branch
        %217 = sbr.rel (%p215) target = $region28
      $region27: #{seg_head_forward.1} parent=11 // pred_region
        _
      $region28: #{seg_head_forward.1} parent=11 // pred_fallthru
        _
      // Predicated region
      $region29: #{seg_head_forward.1} parent=11 // pred_check
        %p218 = pneg %p144
      $region30: #{seg_head_forward.1} parent=11 // pred_check_branch
        %220 = sbr.rel (%p218) target = $region32
      $region31: #{seg_head_forward.1} parent=11 // pred_region
        _
      $region32: #{seg_head_forward.1} parent=11 // pred_fallthru
        _
      // Predicated region
      $region33: #{seg_head_forward.1} parent=11 // pred_check
        %p221 = pneg %p165
      $region34: #{seg_head_forward.1} parent=11 // pred_check_branch
        %223 = sbr.rel (%p221) target = $region36
      $region35: #{seg_head_forward.1} parent=11 // pred_region
        _
      $region36: #{seg_head_forward.1} parent=11 // pred_fallthru
        _
    $region12: #{seg_head_forward.1} parent=5 // pred_fallthru
      _
    %p224 = scmp.lt.s32.totalorder %s13, 2
    // Predicated region
    $region37: #{seg_head_forward.1} parent=5 // pred_check
      %p225 = pneg %p224
    $region38: #{seg_head_forward.1} parent=5 // pred_check_branch
      %227 = sbr.rel (%p225) target = $region40
    $region39: #{seg_head_forward.1} parent=5 // pred_region
      // Predicated region
      $region41: #{seg_head_forward.1} parent=39 // pred_check
        %p228 = pneg %p33
      $region42: #{seg_head_forward.1} parent=39 // pred_check_branch
        %230 = sbr.rel (%p228) target = $region44
      $region43: #{seg_head_forward.1} parent=39 // pred_region
        %p231 = scmp.lt.s32.totalorder %s13, 1
        %s232 = scalar_select %p231, %s13, 1
        %s233 = smul.addr %s232, 32
        %s234 = smul.addr %s233, 4
        %s235 = scalar_lea.vmem %s0, %s234
      $region44: #{seg_head_forward.1} parent=39 // pred_fallthru
        _
    $region40: #{seg_head_forward.1} parent=5 // pred_fallthru
      _
    %p236 = scmp.le.s32.totalorder 1, %s13
    %p237 = scmp.lt.s32.totalorder %s13, 3
    %p238 = pnand %p236, %p237
    %p239 = pneg %p238
    // Predicated region
    $region45: #{seg_head_forward.1} parent=5 // pred_check
      _
    $region46: #{seg_head_forward.1} parent=5 // pred_check_branch
      %241 = sbr.rel (%p238) target = $region48
    $region47: #{seg_head_forward.1} parent=5 // pred_region
      %s242 = ssub.s32 %s13, 1
      %p243 = scmp.lt.s32.totalorder %s18, 1
      %s244 = scalar_select %p243, %s18, 1
      %s245 = smul.addr %s244, 32
      %s246 = smul.addr %s245, 4
      %s247 = scalar_lea.vmem %s0, %s246
      %p248 = pneg %p39
      %p249 = pneg %p36
      %p250 = pneg %p60
      %p251 = pneg %p57
      %p252 = pneg %p81
      %p253 = pneg %p78
      %p254 = pneg %p102
      %p255 = pneg %p99
      %p256 = pneg %p123
      %p257 = pneg %p120
      %p258 = pneg %p144
      %p259 = pneg %p141
      %p260 = pneg %p165
      %p261 = pneg %p162
      %p262 = pneg %p191
      %p263 = pneg %p188
      %p264 = scmp.lt.s32.totalorder %s18, 1
      %s265 = scalar_select %p264, %s18, 1
      %s266 = smul.addr %s265, 6
      %s267 = smul.addr %s266, 8
      %s268 = scalar_lea.vmem %s7, %s267
      %p269 = scmp.lt.s32.totalorder %s18, 1
      %s270 = scalar_select %p269, %s18, 1
      %s271 = smul.addr %s270, 32
      %s272 = smul.addr %s271, 4
      %s273 = scalar_lea.vmem %s0, %s272
      %p274 = scmp.lt.s32.totalorder %s18, 1
      %s275 = scalar_select %p274, %s18, 1
      %s276 = smul.addr %s275, 6
      %s277 = smul.addr %s276, 8
      %s278 = scalar_lea.vmem %s7, %s277
      %vm280 = vcmask 261120
      %281 = vst.msk [vmem:[#allocation2] sm:$0xff] %vm280, 0.0
      %282 = vst.msk [vmem:[#allocation2 + $0x8] sm:$0xff] %vm280, 0.0
      %vm283 = vcmask 254976
      %284 = vst.msk [vmem:[#allocation2 + $0x10] sm:$0x3] %vm283, 0.0
      %285 = vst.msk [vmem:[#allocation2 + $0x18] sm:$0xff] %vm280, 0.0
      %286 = vst.msk [vmem:[#allocation2 + $0x20] sm:$0xff] %vm280, 0.0
      %287 = vst.msk [vmem:[#allocation2 + $0x28] sm:$0x3] %vm283, 0.0
      %288 = vst.msk [vmem:[#allocation2 + $0x30] sm:$0xff] %vm280, 0.0
      %289 = vst.msk [vmem:[#allocation2 + $0x38] sm:$0xff] %vm280, 0.0
      %290 = vst.msk [vmem:[#allocation2 + $0x40] sm:$0x3] %vm283, 0.0
      %291 = vst.msk [vmem:[#allocation2 + $0x48] sm:$0xff] %vm280, 0.0
      %292 = vst.msk [vmem:[#allocation2 + $0x50] sm:$0xff] %vm280, 0.0
      %293 = vst.msk [vmem:[#allocation2 + $0x58] sm:$0x3] %vm283, 0.0
      %294 = vst.msk [vmem:[#allocation2 + $0x60] sm:$0xff] %vm280, 0.0
      %295 = vst.msk [vmem:[#allocation2 + $0x68] sm:$0xff] %vm280, 0.0
      %296 = vst.msk [vmem:[#allocation2 + $0x70] sm:$0x3] %vm283, 0.0
      %297 = vst.msk [vmem:[#allocation2 + $0x78] sm:$0xff] %vm280, 0.0
      %298 = vst.msk [vmem:[#allocation2 + $0x80] sm:$0xff] %vm280, 0.0
      %299 = vst.msk [vmem:[#allocation2 + $0x88] sm:$0x3] %vm283, 0.0
      %300 = vst.msk [vmem:[#allocation2 + $0x90] sm:$0xff] %vm280, 0.0
      %301 = vst.msk [vmem:[#allocation2 + $0x98] sm:$0xff] %vm280, 0.0
      %302 = vst.msk [vmem:[#allocation2 + $0xa0] sm:$0x3] %vm283, 0.0
      %303 = vst.msk [vmem:[#allocation2 + $0xa8] sm:$0xff] %vm280, 0.0
      %304 = vst.msk [vmem:[#allocation2 + $0xb0] sm:$0xff] %vm280, 0.0
      %305 = vst.msk [vmem:[#allocation2 + $0xb8] sm:$0x3] %vm283, 0.0
      %306 = vst.msk [vmem:[#allocation2 + $0xc0] sm:$0xff] %vm280, 0.0
      %307 = vst.msk [vmem:[#allocation2 + $0xc8] sm:$0xff] %vm280, 0.0
      %308 = vst.msk [vmem:[#allocation2 + $0xd0] sm:$0x3] %vm283, 0.0
      %309 = vst.msk [vmem:[#allocation2 + $0xd8] sm:$0xff] %vm280, 0.0
      %310 = vst.msk [vmem:[#allocation2 + $0xe0] sm:$0xff] %vm280, 0.0
      %311 = vst.msk [vmem:[#allocation2 + $0xe8] sm:$0x3] %vm283, 0.0
      %312 = vst.msk [vmem:[#allocation2 + $0xf0] sm:$0xff] %vm280, 0.0
      %313 = vst.msk [vmem:[#allocation2 + $0xf8] sm:$0xff] %vm280, 0.0
      %314 = vst.msk [vmem:[#allocation2 + $0x100] sm:$0x3] %vm283, 0.0
      %315 = vst.msk [vmem:[#allocation2 + $0x108] sm:$0xff] %vm280, 0.0
      %316 = vst.msk [vmem:[#allocation2 + $0x110] sm:$0xff] %vm280, 0.0
      %317 = vst.msk [vmem:[#allocation2 + $0x118] sm:$0x3] %vm283, 0.0
      %318 = vst.msk [vmem:[#allocation2 + $0x120] sm:$0xff] %vm280, 0.0
      %319 = vst.msk [vmem:[#allocation2 + $0x128] sm:$0xff] %vm280, 0.0
      %320 = vst.msk [vmem:[#allocation2 + $0x130] sm:$0x3] %vm283, 0.0
      %321 = vst.msk [vmem:[#allocation2 + $0x138] sm:$0xff] %vm280, 0.0
      %322 = vst.msk [vmem:[#allocation2 + $0x140] sm:$0xff] %vm280, 0.0
      %323 = vst.msk [vmem:[#allocation2 + $0x148] sm:$0x3] %vm283, 0.0
      %324 = vst.msk [vmem:[#allocation2 + $0x150] sm:$0xff] %vm280, 0.0
      %325 = vst.msk [vmem:[#allocation2 + $0x158] sm:$0xff] %vm280, 0.0
      %326 = vst.msk [vmem:[#allocation2 + $0x160] sm:$0x3] %vm283, 0.0
      %327 = vst.msk [vmem:[#allocation2 + $0x168] sm:$0xff] %vm280, 0.0
      %328 = vst.msk [vmem:[#allocation2 + $0x170] sm:$0xff] %vm280, 0.0
      %329 = vst.msk [vmem:[#allocation2 + $0x178] sm:$0x3] %vm283, 0.0
      %330 = vst.msk [vmem:[#allocation2 + $0x180] sm:$0xff] %vm280, 0.0
      %331 = vst.msk [vmem:[#allocation2 + $0x188] sm:$0xff] %vm280, 0.0
      %332 = vst.msk [vmem:[#allocation2 + $0x190] sm:$0x3] %vm283, 0.0
      %333 = vst.msk [vmem:[#allocation2 + $0x198] sm:$0xff] %vm280, 0.0
      %334 = vst.msk [vmem:[#allocation2 + $0x1a0] sm:$0xff] %vm280, 0.0
      %335 = vst.msk [vmem:[#allocation2 + $0x1a8] sm:$0x3] %vm283, 0.0
      %v336 = vld [vmem:[%s273] sm:$0xf]
      %v337 = vld [vmem:[%s273 + $0x4] sm:$0xf]
      %v338 = vld [vmem:[%s273 + $0x8] sm:$0xf]
      %v339 = vld [vmem:[%s273 + $0xc] sm:$0xf]
      %v340 = vld [vmem:[%s273 + $0x10] sm:$0xf]
      %v341 = vld [vmem:[%s273 + $0x14] sm:$0xf]
      %v342 = vld [vmem:[%s273 + $0x18] sm:$0xf]
      %v343 = vld [vmem:[%s273 + $0x1c] sm:$0xf]
      %v344 = vld [vmem:[%s273 + $0x20] sm:$0xf]
      %v345 = vld [vmem:[%s273 + $0x24] sm:$0xf]
      %v346 = vld [vmem:[%s273 + $0x28] sm:$0xf]
      %v347 = vld [vmem:[%s273 + $0x2c] sm:$0xf]
      %v348 = vld [vmem:[%s273 + $0x30] sm:$0xf]
      %v349 = vld [vmem:[%s273 + $0x34] sm:$0xf]
      %v350 = vld [vmem:[%s273 + $0x38] sm:$0xf]
      %v351 = vld [vmem:[%s273 + $0x3c] sm:$0xf]
      %v352 = vld [vmem:[%s273 + $0x40] sm:$0xf]
      %v353 = vld [vmem:[%s273 + $0x44] sm:$0xf]
      %v354 = vld [vmem:[%s273 + $0x48] sm:$0xf]
      %v355 = vld [vmem:[%s273 + $0x4c] sm:$0xf]
      %v356 = vld [vmem:[%s273 + $0x50] sm:$0xf]
      %v357 = vld [vmem:[%s273 + $0x54] sm:$0xf]
      %v358 = vld [vmem:[%s273 + $0x58] sm:$0xf]
      %v359 = vld [vmem:[%s273 + $0x5c] sm:$0xf]
      %v360 = vld [vmem:[%s273 + $0x60] sm:$0xf]
      %v361 = vld [vmem:[%s273 + $0x64] sm:$0xf]
      %v362 = vld [vmem:[%s273 + $0x68] sm:$0xf]
      %v363 = vld [vmem:[%s273 + $0x6c] sm:$0xf]
      %v364 = vld [vmem:[%s273 + $0x70] sm:$0xf]
      %v365 = vld [vmem:[%s273 + $0x74] sm:$0xf]
      %v366 = vld [vmem:[%s273 + $0x78] sm:$0xf]
      %v367 = vld [vmem:[%s273 + $0x7c] sm:$0xf]
      %v368 = vunpack.c.l.bf16 %v336
      %v369 = vunpack.c.l.bf16 %v337
      %v370 = vunpack.c.l.bf16 %v338
      %v371 = vunpack.c.l.bf16 %v339
      %v372 = vunpack.c.l.bf16 %v340
      %v373 = vunpack.c.l.bf16 %v341
      %v374 = vunpack.c.l.bf16 %v342
      %v375 = vunpack.c.l.bf16 %v343
      %v376 = vunpack.c.l.bf16 %v344
      %v377 = vunpack.c.l.bf16 %v345
      %v378 = vunpack.c.l.bf16 %v346
      %v379 = vunpack.c.l.bf16 %v347
      %v380 = vunpack.c.l.bf16 %v348
      %v381 = vunpack.c.l.bf16 %v349
      %v382 = vunpack.c.l.bf16 %v350
      %v383 = vunpack.c.l.bf16 %v351
      %v384 = vunpack.c.l.bf16 %v352
      %v385 = vunpack.c.l.bf16 %v353
      %v386 = vunpack.c.l.bf16 %v354
      %v387 = vunpack.c.l.bf16 %v355
      %v388 = vunpack.c.l.bf16 %v356
      %v389 = vunpack.c.l.bf16 %v357
      %v390 = vunpack.c.l.bf16 %v358
      %v391 = vunpack.c.l.bf16 %v359
      %v392 = vunpack.c.l.bf16 %v360
      %v393 = vunpack.c.l.bf16 %v361
      %v394 = vunpack.c.l.bf16 %v362
      %v395 = vunpack.c.l.bf16 %v363
      %v396 = vunpack.c.l.bf16 %v364
      %v397 = vunpack.c.l.bf16 %v365
      %v398 = vunpack.c.l.bf16 %v366
      %v399 = vunpack.c.l.bf16 %v367
      %v400 = vld [vmem:[%s1] sm:$0x1]
      %v402 = vlaneseq
      %v403 = vshrl.u32 %v402, 7
      %v404 = vsub.s32 0, %v403
      %v405 = vrot.slane %v400, %v404
      %v407 = vmul.f32 %v368, %v405
      %v408 = vmul.f32 %v369, %v405
      %v409 = vmul.f32 %v370, %v405
      %v410 = vmul.f32 %v371, %v405
      %v411 = vmul.f32 %v372, %v405
      %v412 = vmul.f32 %v373, %v405
      %v413 = vmul.f32 %v374, %v405
      %v414 = vmul.f32 %v375, %v405
      %v415 = vmul.f32 %v376, %v405
      %v416 = vmul.f32 %v377, %v405
      %v417 = vmul.f32 %v378, %v405
      %v418 = vmul.f32 %v379, %v405
      %v419 = vmul.f32 %v380, %v405
      %v420 = vmul.f32 %v381, %v405
      %v421 = vmul.f32 %v382, %v405
      %v422 = vmul.f32 %v383, %v405
      %v423 = vmul.f32 %v384, %v405
      %v424 = vmul.f32 %v385, %v405
      %v425 = vmul.f32 %v386, %v405
      %v426 = vmul.f32 %v387, %v405
      %v427 = vmul.f32 %v388, %v405
      %v428 = vmul.f32 %v389, %v405
      %v429 = vmul.f32 %v390, %v405
      %v430 = vmul.f32 %v391, %v405
      %v431 = vmul.f32 %v392, %v405
      %v432 = vmul.f32 %v393, %v405
      %v433 = vmul.f32 %v394, %v405
      %v434 = vmul.f32 %v395, %v405
      %v435 = vmul.f32 %v396, %v405
      %v436 = vmul.f32 %v397, %v405
      %v437 = vmul.f32 %v398, %v405
      %v438 = vmul.f32 %v399, %v405
      %v439 = vld [vmem:[%s2] sm:$0x1]
      %v441 = vlaneseq
      %v442 = vshrl.u32 %v441, 7
      %v443 = vsub.s32 0, %v442
      %v444 = vrot.slane %v439, %v443
      %v446 = vadd.f32 %v407, %v444
      %v447 = vadd.f32 %v408, %v444
      %v448 = vadd.f32 %v409, %v444
      %v449 = vadd.f32 %v410, %v444
      %v450 = vadd.f32 %v411, %v444
      %v451 = vadd.f32 %v412, %v444
      %v452 = vadd.f32 %v413, %v444
      %v453 = vadd.f32 %v414, %v444
      %v454 = vadd.f32 %v415, %v444
      %v455 = vadd.f32 %v416, %v444
      %v456 = vadd.f32 %v417, %v444
      %v457 = vadd.f32 %v418, %v444
      %v458 = vadd.f32 %v419, %v444
      %v459 = vadd.f32 %v420, %v444
      %v460 = vadd.f32 %v421, %v444
      %v461 = vadd.f32 %v422, %v444
      %v462 = vadd.f32 %v423, %v444
      %v463 = vadd.f32 %v424, %v444
      %v464 = vadd.f32 %v425, %v444
      %v465 = vadd.f32 %v426, %v444
      %v466 = vadd.f32 %v427, %v444
      %v467 = vadd.f32 %v428, %v444
      %v468 = vadd.f32 %v429, %v444
      %v469 = vadd.f32 %v430, %v444
      %v470 = vadd.f32 %v431, %v444
      %v471 = vadd.f32 %v432, %v444
      %v472 = vadd.f32 %v433, %v444
      %v473 = vadd.f32 %v434, %v444
      %v474 = vadd.f32 %v435, %v444
      %v475 = vadd.f32 %v436, %v444
      %v476 = vadd.f32 %v437, %v444
      %v477 = vadd.f32 %v438, %v444
      %v478 = vmax.f32 %v446, 0.0
      %v479 = vmax.f32 %v447, 0.0
      %v480 = vmax.f32 %v448, 0.0
      %v481 = vmax.f32 %v449, 0.0
      %v482 = vmax.f32 %v450, 0.0
      %v483 = vmax.f32 %v451, 0.0
      %v484 = vmax.f32 %v452, 0.0
      %v485 = vmax.f32 %v453, 0.0
      %v486 = vmax.f32 %v454, 0.0
      %v487 = vmax.f32 %v455, 0.0
      %v488 = vmax.f32 %v456, 0.0
      %v489 = vmax.f32 %v457, 0.0
      %v490 = vmax.f32 %v458, 0.0
      %v491 = vmax.f32 %v459, 0.0
      %v492 = vmax.f32 %v460, 0.0
      %v493 = vmax.f32 %v461, 0.0
      %v494 = vmax.f32 %v462, 0.0
      %v495 = vmax.f32 %v463, 0.0
      %v496 = vmax.f32 %v464, 0.0
      %v497 = vmax.f32 %v465, 0.0
      %v498 = vmax.f32 %v466, 0.0
      %v499 = vmax.f32 %v467, 0.0
      %v500 = vmax.f32 %v468, 0.0
      %v501 = vmax.f32 %v469, 0.0
      %v502 = vmax.f32 %v470, 0.0
      %v503 = vmax.f32 %v471, 0.0
      %v504 = vmax.f32 %v472, 0.0
      %v505 = vmax.f32 %v473, 0.0
      %v506 = vmax.f32 %v474, 0.0
      %v507 = vmax.f32 %v475, 0.0
      %v508 = vmax.f32 %v476, 0.0
      %v509 = vmax.f32 %v477, 0.0
      %s510 = scalar_lea.vmem [#allocation2], 24
      %511 = vst.msk [vmem:[%s510 + $0x1] sm:$0xff] %vm280, %v478
      %512 = vst.msk [vmem:[%s510 + $0x9] sm:$0xff] %vm280, %v479
      %513 = vst.msk [vmem:[%s510 + $0x19] sm:$0xff] %vm280, %v480
      %514 = vst.msk [vmem:[%s510 + $0x21] sm:$0xff] %vm280, %v481
      %515 = vst.msk [vmem:[%s510 + $0x31] sm:$0xff] %vm280, %v482
      %516 = vst.msk [vmem:[%s510 + $0x39] sm:$0xff] %vm280, %v483
      %517 = vst.msk [vmem:[%s510 + $0x49] sm:$0xff] %vm280, %v484
      %518 = vst.msk [vmem:[%s510 + $0x51] sm:$0xff] %vm280, %v485
      %519 = vst.msk [vmem:[%s510 + $0x61] sm:$0xff] %vm280, %v486
      %520 = vst.msk [vmem:[%s510 + $0x69] sm:$0xff] %vm280, %v487
      %521 = vst.msk [vmem:[%s510 + $0x79] sm:$0xff] %vm280, %v488
      %522 = vst.msk [vmem:[%s510 + $0x81] sm:$0xff] %vm280, %v489
      %523 = vst.msk [vmem:[%s510 + $0x91] sm:$0xff] %vm280, %v490
      %524 = vst.msk [vmem:[%s510 + $0x99] sm:$0xff] %vm280, %v491
      %525 = vst.msk [vmem:[%s510 + $0xa9] sm:$0xff] %vm280, %v492
      %526 = vst.msk [vmem:[%s510 + $0xb1] sm:$0xff] %vm280, %v493
      %527 = vst.msk [vmem:[%s510 + $0xc1] sm:$0xff] %vm280, %v494
      %528 = vst.msk [vmem:[%s510 + $0xc9] sm:$0xff] %vm280, %v495
      %529 = vst.msk [vmem:[%s510 + $0xd9] sm:$0xff] %vm280, %v496
      %530 = vst.msk [vmem:[%s510 + $0xe1] sm:$0xff] %vm280, %v497
      %531 = vst.msk [vmem:[%s510 + $0xf1] sm:$0xff] %vm280, %v498
      %532 = vst.msk [vmem:[%s510 + $0xf9] sm:$0xff] %vm280, %v499
      %533 = vst.msk [vmem:[%s510 + $0x109] sm:$0xff] %vm280, %v500
      %534 = vst.msk [vmem:[%s510 + $0x111] sm:$0xff] %vm280, %v501
      %535 = vst.msk [vmem:[%s510 + $0x121] sm:$0xff] %vm280, %v502
      %536 = vst.msk [vmem:[%s510 + $0x129] sm:$0xff] %vm280, %v503
      %537 = vst.msk [vmem:[%s510 + $0x139] sm:$0xff] %vm280, %v504
      %538 = vst.msk [vmem:[%s510 + $0x141] sm:$0xff] %vm280, %v505
      %539 = vst.msk [vmem:[%s510 + $0x151] sm:$0xff] %vm280, %v506
      %540 = vst.msk [vmem:[%s510 + $0x159] sm:$0xff] %vm280, %v507
      %541 = vst.msk [vmem:[%s510 + $0x169] sm:$0xff] %vm280, %v508
      %542 = vst.msk [vmem:[%s510 + $0x171] sm:$0xff] %vm280, %v509
      %v543 = vld [vmem:[#allocation2] sm:$0xff]
      %v544 = vld [vmem:[#allocation2 + $0x8] sm:$0xff]
      %v545 = vld [vmem:[#allocation2 + $0x18] sm:$0xff]
      %v546 = vld [vmem:[#allocation2 + $0x20] sm:$0xff]
      %v547 = vld [vmem:[#allocation2 + $0x30] sm:$0xff]
      %v548 = vld [vmem:[#allocation2 + $0x38] sm:$0xff]
      %v549 = vld [vmem:[#allocation2 + $0x48] sm:$0xff]
      %v550 = vld [vmem:[#allocation2 + $0x50] sm:$0xff]
      %v551 = vld [vmem:[#allocation2 + $0x60] sm:$0xff]
      %v552 = vld [vmem:[#allocation2 + $0x68] sm:$0xff]
      %v553 = vld [vmem:[#allocation2 + $0x78] sm:$0xff]
      %v554 = vld [vmem:[#allocation2 + $0x80] sm:$0xff]
      %v555 = vld [vmem:[#allocation2 + $0x90] sm:$0xff]
      %v556 = vld [vmem:[#allocation2 + $0x98] sm:$0xff]
      %v557 = vld [vmem:[#allocation2 + $0xa8] sm:$0xff]
      %v558 = vld [vmem:[#allocation2 + $0xb0] sm:$0xff]
      %v559 = vld [vmem:[#allocation2 + $0xc0] sm:$0xff]
      %v560 = vld [vmem:[#allocation2 + $0xc8] sm:$0xff]
      %v561 = vld [vmem:[#allocation2 + $0xd8] sm:$0xff]
      %v562 = vld [vmem:[#allocation2 + $0xe0] sm:$0xff]
      %v563 = vld [vmem:[#allocation2 + $0xf0] sm:$0xff]
      %v564 = vld [vmem:[#allocation2 + $0xf8] sm:$0xff]
      %v565 = vld [vmem:[#allocation2 + $0x108] sm:$0xff]
      %v566 = vld [vmem:[#allocation2 + $0x110] sm:$0xff]
      %v567 = vld [vmem:[#allocation2 + $0x120] sm:$0xff]
      %v568 = vld [vmem:[#allocation2 + $0x128] sm:$0xff]
      %v569 = vld [vmem:[#allocation2 + $0x138] sm:$0xff]
      %v570 = vld [vmem:[#allocation2 + $0x140] sm:$0xff]
      %v571 = vld [vmem:[#allocation2 + $0x150] sm:$0xff]
      %v572 = vld [vmem:[#allocation2 + $0x158] sm:$0xff]
      %v573 = vld [vmem:[#allocation2 + $0x168] sm:$0xff]
      %v574 = vld [vmem:[#allocation2 + $0x170] sm:$0xff]
      %v575 = vpack.c.bf16 %v544, %v543
      %v576 = vpack.c.bf16 %v546, %v545
      %v577 = vpack.c.bf16 %v548, %v547
      %v578 = vpack.c.bf16 %v550, %v549
      %v579 = vpack.c.bf16 %v552, %v551
      %v580 = vpack.c.bf16 %v554, %v553
      %v581 = vpack.c.bf16 %v556, %v555
      %v582 = vpack.c.bf16 %v558, %v557
      %v583 = vpack.c.bf16 %v560, %v559
      %v584 = vpack.c.bf16 %v562, %v561
      %v585 = vpack.c.bf16 %v564, %v563
      %v586 = vpack.c.bf16 %v566, %v565
      %v587 = vpack.c.bf16 %v568, %v567
      %v588 = vpack.c.bf16 %v570, %v569
      %v589 = vpack.c.bf16 %v572, %v571
      %v590 = vpack.c.bf16 %v574, %v573
      %v591 = vld [vmem:[%s3] sm:$0xf]
      %v592 = vld [vmem:[%s3 + $0x4] sm:$0xf]
      %v593 = vld [vmem:[%s3 + $0x8] sm:$0xf]
      %v594 = vld [vmem:[%s3 + $0xc] sm:$0xf]
      %v595 = vld [vmem:[#allocation2 + $0x1] sm:$0xff]
      %v596 = vld [vmem:[#allocation2 + $0x9] sm:$0xff]
      %v597 = vld [vmem:[#allocation2 + $0x19] sm:$0xff]
      %v598 = vld [vmem:[#allocation2 + $0x21] sm:$0xff]
      %v599 = vld [vmem:[#allocation2 + $0x31] sm:$0xff]
      %v600 = vld [vmem:[#allocation2 + $0x39] sm:$0xff]
      %v601 = vld [vmem:[#allocation2 + $0x49] sm:$0xff]
      %v602 = vld [vmem:[#allocation2 + $0x51] sm:$0xff]
      %v603 = vld [vmem:[#allocation2 + $0x61] sm:$0xff]
      %v604 = vld [vmem:[#allocation2 + $0x69] sm:$0xff]
      %v605 = vld [vmem:[#allocation2 + $0x79] sm:$0xff]
      %v606 = vld [vmem:[#allocation2 + $0x81] sm:$0xff]
      %v607 = vld [vmem:[#allocation2 + $0x91] sm:$0xff]
      %v608 = vld [vmem:[#allocation2 + $0x99] sm:$0xff]
      %v609 = vld [vmem:[#allocation2 + $0xa9] sm:$0xff]
      %v610 = vld [vmem:[#allocation2 + $0xb1] sm:$0xff]
      %v611 = vld [vmem:[#allocation2 + $0xc1] sm:$0xff]
      %v612 = vld [vmem:[#allocation2 + $0xc9] sm:$0xff]
      %v613 = vld [vmem:[#allocation2 + $0xd9] sm:$0xff]
      %v614 = vld [vmem:[#allocation2 + $0xe1] sm:$0xff]
      %v615 = vld [vmem:[#allocation2 + $0xf1] sm:$0xff]
      %v616 = vld [vmem:[#allocation2 + $0xf9] sm:$0xff]
      %v617 = vld [vmem:[#allocation2 + $0x109] sm:$0xff]
      %v618 = vld [vmem:[#allocation2 + $0x111] sm:$0xff]
      %v619 = vld [vmem:[#allocation2 + $0x121] sm:$0xff]
      %v620 = vld [vmem:[#allocation2 + $0x129] sm:$0xff]
      %v621 = vld [vmem:[#allocation2 + $0x139] sm:$0xff]
      %v622 = vld [vmem:[#allocation2 + $0x141] sm:$0xff]
      %v623 = vld [vmem:[#allocation2 + $0x151] sm:$0xff]
      %v624 = vld [vmem:[#allocation2 + $0x159] sm:$0xff]
      %v625 = vld [vmem:[#allocation2 + $0x169] sm:$0xff]
      %v626 = vld [vmem:[#allocation2 + $0x171] sm:$0xff]
      %v627 = vpack.c.bf16 %v596, %v595
      %v628 = vpack.c.bf16 %v598, %v597
      %v629 = vpack.c.bf16 %v600, %v599
      %v630 = vpack.c.bf16 %v602, %v601
      %v631 = vpack.c.bf16 %v604, %v603
      %v632 = vpack.c.bf16 %v606, %v605
      %v633 = vpack.c.bf16 %v608, %v607
      %v634 = vpack.c.bf16 %v610, %v609
      %v635 = vpack.c.bf16 %v612, %v611
      %v636 = vpack.c.bf16 %v614, %v613
      %v637 = vpack.c.bf16 %v616, %v615
      %v638 = vpack.c.bf16 %v618, %v617
      %v639 = vpack.c.bf16 %v620, %v619
      %v640 = vpack.c.bf16 %v622, %v621
      %v641 = vpack.c.bf16 %v624, %v623
      %v642 = vpack.c.bf16 %v626, %v625
      %s643 = scalar_lea.vmem %s3, 16
      %v644 = vld [vmem:[%s643] sm:$0xf]
      %v645 = vld [vmem:[%s643 + $0x4] sm:$0xf]
      %v646 = vld [vmem:[%s643 + $0x8] sm:$0xf]
      %v647 = vld [vmem:[%s643 + $0xc] sm:$0xf]
      %v652 = vunpack.c.l.b16 %v644
      %v653 = vunpack.c.l.b16 %v645
      %v654 = vunpack.c.l.b16 %v646
      %v655 = vunpack.c.l.b16 %v647
      %v656 = vpack.c.b16 %v653, %v652
      %v657 = vpack.c.b16 %v655, %v654
      %v661 = vsel %vm280, %v627, 0
      %v664 = vsel %vm280, %v628, 0
      %v667 = vsel %vm280, %v629, 0
      %v670 = vsel %vm280, %v630, 0
      %v673 = vsel %vm280, %v631, 0
      %v676 = vsel %vm280, %v632, 0
      %v679 = vsel %vm280, %v633, 0
      %v682 = vsel %vm280, %v634, 0
      %v685 = vsel %vm280, %v635, 0
      %v688 = vsel %vm280, %v636, 0
      %v691 = vsel %vm280, %v637, 0
      %v694 = vsel %vm280, %v638, 0
      %v697 = vsel %vm280, %v639, 0
      %v700 = vsel %vm280, %v640, 0
      %v703 = vsel %vm280, %v641, 0
      %v706 = vsel %vm280, %v642, 0
      %708 = vmatprep.subr.bf16.mxu0 0
      %709 = vmatpush1.bf16.msra.mxu0 %v656
      %710 = vmatprep.subr.bf16.mxu0 0
      %711 = vmatpush1.bf16.msra.mxu0 %v657
      %712 = vmatprep.subr.bf16.mxu0 0
      %713 = vmatpush1.bf16.msra.mxu0 0
      %714 = vmatprep.subr.bf16.mxu0 0
      %715 = vmatpush1.bf16.msra.mxu0 0
      %716 = vmatprep.subr.bf16.mxu0 0
      %717 = vmatpush1.bf16.msra.mxu0 0
      %718 = vmatprep.subr.bf16.mxu0 0
      %719 = vmatpush1.bf16.msra.mxu0 0
      %720 = vmatprep.subr.bf16.mxu0 0
      %721 = vmatpush1.bf16.msra.mxu0 0
      %722 = vmatprep.subr.bf16.mxu0 0
      %723 = vmatpush1.bf16.msra.mxu0 0
      %724 = vmatprep.subr.bf16.mxu0 0
      %725 = vmatpush1.bf16.msra.mxu0 0
      %726 = vmatprep.subr.bf16.mxu0 0
      %727 = vmatpush1.bf16.msra.mxu0 0
      %728 = vmatprep.subr.bf16.mxu0 0
      %729 = vmatpush1.bf16.msra.mxu0 0
      %730 = vmatprep.subr.bf16.mxu0 0
      %731 = vmatpush1.bf16.msra.mxu0 0
      %732 = vmatprep.subr.bf16.mxu0 0
      %733 = vmatpush1.bf16.msra.mxu0 0
      %734 = vmatprep.subr.bf16.mxu0 0
      %735 = vmatpush1.bf16.msra.mxu0 0
      %736 = vmatprep.subr.bf16.mxu0 0
      %737 = vmatpush1.bf16.msra.mxu0 0
      %738 = vmatprep.subr.bf16.mxu0 0
      %739 = vmatpush1.bf16.msra.mxu0 0
      %740 = vmatprep.mubr.bf16.mxu0 0
      %741 = vmatmul.mubr.bf16.gmra.mrb[0].mxu0 %v661
      %v742 = vpop.f32.mrb[0].mxu0
      %v743 = vadd.f32 0.0, %v742
      %v744 = vpop.f32.mrb[0].mxu0
      %v745 = vpop.f32.mrb[0].mxu0
      %v746 = vadd.f32 0.0, %v745
      %v747 = vpop.f32.mrb[0].mxu0
      %748 = vmatprep.mubr.bf16.mxu0 0
      %749 = vmatmul.mubr.bf16.gmra.mrb[0].mxu0 %v664
      %v750 = vpop.f32.mrb[0].mxu0
      %v751 = vadd.f32 0.0, %v750
      %v752 = vpop.f32.mrb[0].mxu0
      %v753 = vpop.f32.mrb[0].mxu0
      %v754 = vadd.f32 0.0, %v753
      %v755 = vpop.f32.mrb[0].mxu0
      %756 = vmatprep.mubr.bf16.mxu0 0
      %757 = vmatmul.mubr.bf16.gmra.mrb[0].mxu0 %v667
      %v758 = vpop.f32.mrb[0].mxu0
      %v759 = vadd.f32 0.0, %v758
      %v760 = vpop.f32.mrb[0].mxu0
      %v761 = vpop.f32.mrb[0].mxu0
      %v762 = vadd.f32 0.0, %v761
      %v763 = vpop.f32.mrb[0].mxu0
      %764 = vmatprep.mubr.bf16.mxu0 0
      %765 = vmatmul.mubr.bf16.gmra.mrb[0].mxu0 %v670
      %v766 = vpop.f32.mrb[0].mxu0
      %v767 = vadd.f32 0.0, %v766
      %v768 = vpop.f32.mrb[0].mxu0
      %v769 = vpop.f32.mrb[0].mxu0
      %v770 = vadd.f32 0.0, %v769
      %v771 = vpop.f32.mrb[0].mxu0
      %772 = vmatprep.mubr.bf16.mxu0 0
      %773 = vmatmul.mubr.bf16.gmra.mrb[0].mxu0 %v673
      %v774 = vpop.f32.mrb[0].mxu0
      %v775 = vadd.f32 0.0, %v774
      %v776 = vpop.f32.mrb[0].mxu0
      %v777 = vpop.f32.mrb[0].mxu0
      %v778 = vadd.f32 0.0, %v777
      %v779 = vpop.f32.mrb[0].mxu0
      %780 = vmatprep.mubr.bf16.mxu0 0
      %781 = vmatmul.mubr.bf16.gmra.mrb[0].mxu0 %v676
      %v782 = vpop.f32.mrb[0].mxu0
      %v783 = vadd.f32 0.0, %v782
      %v784 = vpop.f32.mrb[0].mxu0
      %v785 = vpop.f32.mrb[0].mxu0
      %v786 = vadd.f32 0.0, %v785
      %v787 = vpop.f32.mrb[0].mxu0
      %788 = vmatprep.mubr.bf16.mxu0 0
      %789 = vmatmul.mubr.bf16.gmra.mrb[0].mxu0 %v679
      %v790 = vpop.f32.mrb[0].mxu0
      %v791 = vadd.f32 0.0, %v790
      %v792 = vpop.f32.mrb[0].mxu0
      %v793 = vpop.f32.mrb[0].mxu0
      %v794 = vadd.f32 0.0, %v793
      %v795 = vpop.f32.mrb[0].mxu0
      %796 = vmatprep.mubr.bf16.mxu0 0
      %797 = vmatmul.mubr.bf16.gmra.mrb[0].mxu0 %v682
      %v798 = vpop.f32.mrb[0].mxu0
      %v799 = vadd.f32 0.0, %v798
      %v800 = vpop.f32.mrb[0].mxu0
      %v801 = vpop.f32.mrb[0].mxu0
      %v802 = vadd.f32 0.0, %v801
      %v803 = vpop.f32.mrb[0].mxu0
      %804 = vmatprep.mubr.bf16.mxu0 0
      %805 = vmatmul.mubr.bf16.gmra.mrb[0].mxu0 %v685
      %v806 = vpop.f32.mrb[0].mxu0
      %v807 = vadd.f32 0.0, %v806
      %v808 = vpop.f32.mrb[0].mxu0
      %v809 = vpop.f32.mrb[0].mxu0
      %v810 = vadd.f32 0.0, %v809
      %v811 = vpop.f32.mrb[0].mxu0
      %812 = vmatprep.mubr.bf16.mxu0 0
      %813 = vmatmul.mubr.bf16.gmra.mrb[0].mxu0 %v688
      %v814 = vpop.f32.mrb[0].mxu0
      %v815 = vadd.f32 0.0, %v814
      %v816 = vpop.f32.mrb[0].mxu0
      %v817 = vpop.f32.mrb[0].mxu0
      %v818 = vadd.f32 0.0, %v817
      %v819 = vpop.f32.mrb[0].mxu0
      %820 = vmatprep.mubr.bf16.mxu0 0
      %821 = vmatmul.mubr.bf16.gmra.mrb[0].mxu0 %v691
      %v822 = vpop.f32.mrb[0].mxu0
      %v823 = vadd.f32 0.0, %v822
      %v824 = vpop.f32.mrb[0].mxu0
      %v825 = vpop.f32.mrb[0].mxu0
      %v826 = vadd.f32 0.0, %v825
      %v827 = vpop.f32.mrb[0].mxu0
      %828 = vmatprep.mubr.bf16.mxu0 0
      %829 = vmatmul.mubr.bf16.gmra.mrb[0].mxu0 %v694
      %v830 = vpop.f32.mrb[0].mxu0
      %v831 = vadd.f32 0.0, %v830
      %v832 = vpop.f32.mrb[0].mxu0
      %v833 = vpop.f32.mrb[0].mxu0
      %v834 = vadd.f32 0.0, %v833
      %v835 = vpop.f32.mrb[0].mxu0
      %836 = vmatprep.mubr.bf16.mxu0 0
      %837 = vmatmul.mubr.bf16.gmra.mrb[0].mxu0 %v697
      %v838 = vpop.f32.mrb[0].mxu0
      %v839 = vadd.f32 0.0, %v838
      %v840 = vpop.f32.mrb[0].mxu0
      %v841 = vpop.f32.mrb[0].mxu0
      %v842 = vadd.f32 0.0, %v841
      %v843 = vpop.f32.mrb[0].mxu0
      %844 = vmatprep.mubr.bf16.mxu0 0
      %845 = vmatmul.mubr.bf16.gmra.mrb[0].mxu0 %v700
      %v846 = vpop.f32.mrb[0].mxu0
      %v847 = vadd.f32 0.0, %v846
      %v848 = vpop.f32.mrb[0].mxu0
      %v849 = vpop.f32.mrb[0].mxu0
      %v850 = vadd.f32 0.0, %v849
      %v851 = vpop.f32.mrb[0].mxu0
      %852 = vmatprep.mubr.bf16.mxu0 0
      %853 = vmatmul.mubr.bf16.gmra.mrb[0].mxu0 %v703
      %v854 = vpop.f32.mrb[0].mxu0
      %v855 = vadd.f32 0.0, %v854
      %v856 = vpop.f32.mrb[0].mxu0
      %v857 = vpop.f32.mrb[0].mxu0
      %v858 = vadd.f32 0.0, %v857
      %v859 = vpop.f32.mrb[0].mxu0
      %860 = vmatprep.mubr.bf16.mxu0 0
      %861 = vmatmul.mubr.bf16.gmra.mrb[0].mxu0 %v706
      %v862 = vpop.f32.mrb[0].mxu0
      %v863 = vadd.f32 0.0, %v862
      %v864 = vpop.f32.mrb[0].mxu0
      %v865 = vpop.f32.mrb[0].mxu0
      %v866 = vadd.f32 0.0, %v865
      %v867 = vpop.f32.mrb[0].mxu0
      %868 = vdwg.mxu0
      %v873 = vunpack.c.l.b16 %v591
      %v874 = vunpack.c.l.b16 %v592
      %v875 = vunpack.c.l.b16 %v593
      %v876 = vunpack.c.l.b16 %v594
      %v877 = vpack.c.b16 %v874, %v873
      %v878 = vpack.c.b16 %v876, %v875
      %v882 = vsel %vm280, %v575, 0
      %v885 = vsel %vm280, %v576, 0
      %v888 = vsel %vm280, %v577, 0
      %v891 = vsel %vm280, %v578, 0
      %v894 = vsel %vm280, %v579, 0
      %v897 = vsel %vm280, %v580, 0
      %v900 = vsel %vm280, %v581, 0
      %v903 = vsel %vm280, %v582, 0
      %v906 = vsel %vm280, %v583, 0
      %v909 = vsel %vm280, %v584, 0
      %v912 = vsel %vm280, %v585, 0
      %v915 = vsel %vm280, %v586, 0
      %v918 = vsel %vm280, %v587, 0
      %v921 = vsel %vm280, %v588, 0
      %v924 = vsel %vm280, %v589, 0
      %v927 = vsel %vm280, %v590, 0
      %929 = vmatprep.subr.bf16.mxu0 0
      %930 = vmatpush1.bf16.msra.mxu0 %v877
      %931 = vmatprep.subr.bf16.mxu0 0
      %932 = vmatpush1.bf16.msra.mxu0 %v878
      %933 = vmatprep.subr.bf16.mxu0 0
      %934 = vmatpush1.bf16.msra.mxu0 0
      %935 = vmatprep.subr.bf16.mxu0 0
      %936 = vmatpush1.bf16.msra.mxu0 0
      %937 = vmatprep.subr.bf16.mxu0 0
      %938 = vmatpush1.bf16.msra.mxu0 0
      %939 = vmatprep.subr.bf16.mxu0 0
      %940 = vmatpush1.bf16.msra.mxu0 0
      %941 = vmatprep.subr.bf16.mxu0 0
      %942 = vmatpush1.bf16.msra.mxu0 0
      %943 = vmatprep.subr.bf16.mxu0 0
      %944 = vmatpush1.bf16.msra.mxu0 0
      %945 = vmatprep.subr.bf16.mxu0 0
      %946 = vmatpush1.bf16.msra.mxu0 0
      %947 = vmatprep.subr.bf16.mxu0 0
      %948 = vmatpush1.bf16.msra.mxu0 0
      %949 = vmatprep.subr.bf16.mxu0 0
      %950 = vmatpush1.bf16.msra.mxu0 0
      %951 = vmatprep.subr.bf16.mxu0 0
      %952 = vmatpush1.bf16.msra.mxu0 0
      %953 = vmatprep.subr.bf16.mxu0 0
      %954 = vmatpush1.bf16.msra.mxu0 0
      %955 = vmatprep.subr.bf16.mxu0 0
      %956 = vmatpush1.bf16.msra.mxu0 0
      %957 = vmatprep.subr.bf16.mxu0 0
      %958 = vmatpush1.bf16.msra.mxu0 0
      %959 = vmatprep.subr.bf16.mxu0 0
      %960 = vmatpush1.bf16.msra.mxu0 0
      %961 = vmatprep.mubr.bf16.mxu0 0
      %962 = vmatmul.mubr.bf16.gmra.mrb[0].mxu0 %v882
      %v963 = vpop.f32.mrb[0].mxu0
      %v964 = vadd.f32 %v743, %v963
      %v965 = vpop.f32.mrb[0].mxu0
      %v966 = vpop.f32.mrb[0].mxu0
      %v967 = vadd.f32 %v746, %v966
      %v968 = vpop.f32.mrb[0].mxu0
      %969 = vmatprep.mubr.bf16.mxu0 0
      %970 = vmatmul.mubr.bf16.gmra.mrb[0].mxu0 %v885
      %v971 = vpop.f32.mrb[0].mxu0
      %v972 = vadd.f32 %v751, %v971
      %v973 = vpop.f32.mrb[0].mxu0
      %v974 = vpop.f32.mrb[0].mxu0
      %v975 = vadd.f32 %v754, %v974
      %v976 = vpop.f32.mrb[0].mxu0
      %977 = vmatprep.mubr.bf16.mxu0 0
      %978 = vmatmul.mubr.bf16.gmra.mrb[0].mxu0 %v888
      %v979 = vpop.f32.mrb[0].mxu0
      %v980 = vadd.f32 %v759, %v979
      %v981 = vpop.f32.mrb[0].mxu0
      %v982 = vpop.f32.mrb[0].mxu0
      %v983 = vadd.f32 %v762, %v982
      %v984 = vpop.f32.mrb[0].mxu0
      %985 = vmatprep.mubr.bf16.mxu0 0
      %986 = vmatmul.mubr.bf16.gmra.mrb[0].mxu0 %v891
      %v987 = vpop.f32.mrb[0].mxu0
      %v988 = vadd.f32 %v767, %v987
      %v989 = vpop.f32.mrb[0].mxu0
      %v990 = vpop.f32.mrb[0].mxu0
      %v991 = vadd.f32 %v770, %v990
      %v992 = vpop.f32.mrb[0].mxu0
      %993 = vmatprep.mubr.bf16.mxu0 0
      %994 = vmatmul.mubr.bf16.gmra.mrb[0].mxu0 %v894
      %v995 = vpop.f32.mrb[0].mxu0
      %v996 = vadd.f32 %v775, %v995
      %v997 = vpop.f32.mrb[0].mxu0
      %v998 = vpop.f32.mrb[0].mxu0
      %v999 = vadd.f32 %v778, %v998
      %v1000 = vpop.f32.mrb[0].mxu0
      %1001 = vmatprep.mubr.bf16.mxu0 0
      %1002 = vmatmul.mubr.bf16.gmra.mrb[0].mxu0 %v897
      %v1003 = vpop.f32.mrb[0].mxu0
      %v1004 = vadd.f32 %v783, %v1003
      %v1005 = vpop.f32.mrb[0].mxu0
      %v1006 = vpop.f32.mrb[0].mxu0
      %v1007 = vadd.f32 %v786, %v1006
      %v1008 = vpop.f32.mrb[0].mxu0
      %1009 = vmatprep.mubr.bf16.mxu0 0
      %1010 = vmatmul.mubr.bf16.gmra.mrb[0].mxu0 %v900
      %v1011 = vpop.f32.mrb[0].mxu0
      %v1012 = vadd.f32 %v791, %v1011
      %v1013 = vpop.f32.mrb[0].mxu0
      %v1014 = vpop.f32.mrb[0].mxu0
      %v1015 = vadd.f32 %v794, %v1014
      %v1016 = vpop.f32.mrb[0].mxu0
      %1017 = vmatprep.mubr.bf16.mxu0 0
      %1018 = vmatmul.mubr.bf16.gmra.mrb[0].mxu0 %v903
      %v1019 = vpop.f32.mrb[0].mxu0
      %v1020 = vadd.f32 %v799, %v1019
      %v1021 = vpop.f32.mrb[0].mxu0
      %v1022 = vpop.f32.mrb[0].mxu0
      %v1023 = vadd.f32 %v802, %v1022
      %v1024 = vpop.f32.mrb[0].mxu0
      %1025 = vmatprep.mubr.bf16.mxu0 0
      %1026 = vmatmul.mubr.bf16.gmra.mrb[0].mxu0 %v906
      %v1027 = vpop.f32.mrb[0].mxu0
      %v1028 = vadd.f32 %v807, %v1027
      %v1029 = vpop.f32.mrb[0].mxu0
      %v1030 = vpop.f32.mrb[0].mxu0
      %v1031 = vadd.f32 %v810, %v1030
      %v1032 = vpop.f32.mrb[0].mxu0
      %1033 = vmatprep.mubr.bf16.mxu0 0
      %1034 = vmatmul.mubr.bf16.gmra.mrb[0].mxu0 %v909
      %v1035 = vpop.f32.mrb[0].mxu0
      %v1036 = vadd.f32 %v815, %v1035
      %v1037 = vpop.f32.mrb[0].mxu0
      %v1038 = vpop.f32.mrb[0].mxu0
      %v1039 = vadd.f32 %v818, %v1038
      %v1040 = vpop.f32.mrb[0].mxu0
      %1041 = vmatprep.mubr.bf16.mxu0 0
      %1042 = vmatmul.mubr.bf16.gmra.mrb[0].mxu0 %v912
      %v1043 = vpop.f32.mrb[0].mxu0
      %v1044 = vadd.f32 %v823, %v1043
      %v1045 = vpop.f32.mrb[0].mxu0
      %v1046 = vpop.f32.mrb[0].mxu0
      %v1047 = vadd.f32 %v826, %v1046
      %v1048 = vpop.f32.mrb[0].mxu0
      %1049 = vmatprep.mubr.bf16.mxu0 0
      %1050 = vmatmul.mubr.bf16.gmra.mrb[0].mxu0 %v915
      %v1051 = vpop.f32.mrb[0].mxu0
      %v1052 = vadd.f32 %v831, %v1051
      %v1053 = vpop.f32.mrb[0].mxu0
      %v1054 = vpop.f32.mrb[0].mxu0
      %v1055 = vadd.f32 %v834, %v1054
      %v1056 = vpop.f32.mrb[0].mxu0
      %1057 = vmatprep.mubr.bf16.mxu0 0
      %1058 = vmatmul.mubr.bf16.gmra.mrb[0].mxu0 %v918
      %v1059 = vpop.f32.mrb[0].mxu0
      %v1060 = vadd.f32 %v839, %v1059
      %v1061 = vpop.f32.mrb[0].mxu0
      %v1062 = vpop.f32.mrb[0].mxu0
      %v1063 = vadd.f32 %v842, %v1062
      %v1064 = vpop.f32.mrb[0].mxu0
      %1065 = vmatprep.mubr.bf16.mxu0 0
      %1066 = vmatmul.mubr.bf16.gmra.mrb[0].mxu0 %v921
      %v1067 = vpop.f32.mrb[0].mxu0
      %v1068 = vadd.f32 %v847, %v1067
      %v1069 = vpop.f32.mrb[0].mxu0
      %v1070 = vpop.f32.mrb[0].mxu0
      %v1071 = vadd.f32 %v850, %v1070
      %v1072 = vpop.f32.mrb[0].mxu0
      %1073 = vmatprep.mubr.bf16.mxu0 0
      %1074 = vmatmul.mubr.bf16.gmra.mrb[0].mxu0 %v924
      %v1075 = vpop.f32.mrb[0].mxu0
      %v1076 = vadd.f32 %v855, %v1075
      %v1077 = vpop.f32.mrb[0].mxu0
      %v1078 = vpop.f32.mrb[0].mxu0
      %v1079 = vadd.f32 %v858, %v1078
      %v1080 = vpop.f32.mrb[0].mxu0
      %1081 = vmatprep.mubr.bf16.mxu0 0
      %1082 = vmatmul.mubr.bf16.gmra.mrb[0].mxu0 %v927
      %v1083 = vpop.f32.mrb[0].mxu0
      %v1084 = vadd.f32 %v863, %v1083
      %v1085 = vpop.f32.mrb[0].mxu0
      %v1086 = vpop.f32.mrb[0].mxu0
      %v1087 = vadd.f32 %v866, %v1086
      %v1088 = vpop.f32.mrb[0].mxu0
      %1089 = vdwg.mxu0
      %v1090 = vld [vmem:[#allocation2 + $0x2] sm:$0xff]
      %v1091 = vld [vmem:[#allocation2 + $0xa] sm:$0xff]
      %v1092 = vld [vmem:[#allocation2 + $0x1a] sm:$0xff]
      %v1093 = vld [vmem:[#allocation2 + $0x22] sm:$0xff]
      %v1094 = vld [vmem:[#allocation2 + $0x32] sm:$0xff]
      %v1095 = vld [vmem:[#allocation2 + $0x3a] sm:$0xff]
      %v1096 = vld [vmem:[#allocation2 + $0x4a] sm:$0xff]
      %v1097 = vld [vmem:[#allocation2 + $0x52] sm:$0xff]
      %v1098 = vld [vmem:[#allocation2 + $0x62] sm:$0xff]
      %v1099 = vld [vmem:[#allocation2 + $0x6a] sm:$0xff]
      %v1100 = vld [vmem:[#allocation2 + $0x7a] sm:$0xff]
      %v1101 = vld [vmem:[#allocation2 + $0x82] sm:$0xff]
      %v1102 = vld [vmem:[#allocation2 + $0x92] sm:$0xff]
      %v1103 = vld [vmem:[#allocation2 + $0x9a] sm:$0xff]
      %v1104 = vld [vmem:[#allocation2 + $0xaa] sm:$0xff]
      %v1105 = vld [vmem:[#allocation2 + $0xb2] sm:$0xff]
      %v1106 = vld [vmem:[#allocation2 + $0xc2] sm:$0xff]
      %v1107 = vld [vmem:[#allocation2 + $0xca] sm:$0xff]
      %v1108 = vld [vmem:[#allocation2 + $0xda] sm:$0xff]
      %v1109 = vld [vmem:[#allocation2 + $0xe2] sm:$0xff]
      %v1110 = vld [vmem:[#allocation2 + $0xf2] sm:$0xff]
      %v1111 = vld [vmem:[#allocation2 + $0xfa] sm:$0xff]
      %v1112 = vld [vmem:[#allocation2 + $0x10a] sm:$0xff]
      %v1113 = vld [vmem:[#allocation2 + $0x112] sm:$0xff]
      %v1114 = vld [vmem:[#allocation2 + $0x122] sm:$0xff]
      %v1115 = vld [vmem:[#allocation2 + $0x12a] sm:$0xff]
      %v1116 = vld [vmem:[#allocation2 + $0x13a] sm:$0xff]
      %v1117 = vld [vmem:[#allocation2 + $0x142] sm:$0xff]
      %v1118 = vld [vmem:[#allocation2 + $0x152] sm:$0xff]
      %v1119 = vld [vmem:[#allocation2 + $0x15a] sm:$0xff]
      %v1120 = vld [vmem:[#allocation2 + $0x16a] sm:$0xff]
      %v1121 = vld [vmem:[#allocation2 + $0x172] sm:$0xff]
      %v1122 = vpack.c.bf16 %v1091, %v1090
      %v1123 = vpack.c.bf16 %v1093, %v1092
      %v1124 = vpack.c.bf16 %v1095, %v1094
      %v1125 = vpack.c.bf16 %v1097, %v1096
      %v1126 = vpack.c.bf16 %v1099, %v1098
      %v1127 = vpack.c.bf16 %v1101, %v1100
      %v1128 = vpack.c.bf16 %v1103, %v1102
      %v1129 = vpack.c.bf16 %v1105, %v1104
      %v1130 = vpack.c.bf16 %v1107, %v1106
      %v1131 = vpack.c.bf16 %v1109, %v1108
      %v1132 = vpack.c.bf16 %v1111, %v1110
      %v1133 = vpack.c.bf16 %v1113, %v1112
      %v1134 = vpack.c.bf16 %v1115, %v1114
      %v1135 = vpack.c.bf16 %v1117, %v1116
      %v1136 = vpack.c.bf16 %v1119, %v1118
      %v1137 = vpack.c.bf16 %v1121, %v1120
      %s1138 = scalar_lea.vmem %s3, 32
      %v1139 = vld [vmem:[%s1138] sm:$0xf]
      %v1140 = vld [vmem:[%s1138 + $0x4] sm:$0xf]
      %v1141 = vld [vmem:[%s1138 + $0x8] sm:$0xf]
      %v1142 = vld [vmem:[%s1138 + $0xc] sm:$0xf]
      %v1147 = vunpack.c.l.b16 %v1139
      %v1148 = vunpack.c.l.b16 %v1140
      %v1149 = vunpack.c.l.b16 %v1141
      %v1150 = vunpack.c.l.b16 %v1142
      %v1151 = vpack.c.b16 %v1148, %v1147
      %v1152 = vpack.c.b16 %v1150, %v1149
      %v1156 = vsel %vm280, %v1122, 0
      %v1159 = vsel %vm280, %v1123, 0
      %v1162 = vsel %vm280, %v1124, 0
      %v1165 = vsel %vm280, %v1125, 0
      %v1168 = vsel %vm280, %v1126, 0
      %v1171 = vsel %vm280, %v1127, 0
      %v1174 = vsel %vm280, %v1128, 0
      %v1177 = vsel %vm280, %v1129, 0
      %v1180 = vsel %vm280, %v1130, 0
      %v1183 = vsel %vm280, %v1131, 0
      %v1186 = vsel %vm280, %v1132, 0
      %v1189 = vsel %vm280, %v1133, 0
      %v1192 = vsel %vm280, %v1134, 0
      %v1195 = vsel %vm280, %v1135, 0
      %v1198 = vsel %vm280, %v1136, 0
      %v1201 = vsel %vm280, %v1137, 0
      %1203 = vmatprep.subr.bf16.mxu0 0
      %1204 = vmatpush1.bf16.msra.mxu0 %v1151
      %1205 = vmatprep.subr.bf16.mxu0 0
      %1206 = vmatpush1.bf16.msra.mxu0 %v1152
      %1207 = vmatprep.subr.bf16.mxu0 0
      %1208 = vmatpush1.bf16.msra.mxu0 0
      %1209 = vmatprep.subr.bf16.mxu0 0
      %1210 = vmatpush1.bf16.msra.mxu0 0
      %1211 = vmatprep.subr.bf16.mxu0 0
      %1212 = vmatpush1.bf16.msra.mxu0 0
      %1213 = vmatprep.subr.bf16.mxu0 0
      %1214 = vmatpush1.bf16.msra.mxu0 0
      %1215 = vmatprep.subr.bf16.mxu0 0
      %1216 = vmatpush1.bf16.msra.mxu0 0
      %1217 = vmatprep.subr.bf16.mxu0 0
      %1218 = vmatpush1.bf16.msra.mxu0 0
      %1219 = vmatprep.subr.bf16.mxu0 0
      %1220 = vmatpush1.bf16.msra.mxu0 0
      %1221 = vmatprep.subr.bf16.mxu0 0
      %1222 = vmatpush1.bf16.msra.mxu0 0
      %1223 = vmatprep.subr.bf16.mxu0 0
      %1224 = vmatpush1.bf16.msra.mxu0 0
      %1225 = vmatprep.subr.bf16.mxu0 0
      %1226 = vmatpush1.bf16.msra.mxu0 0
      %1227 = vmatprep.subr.bf16.mxu0 0
      %1228 = vmatpush1.bf16.msra.mxu0 0
      %1229 = vmatprep.subr.bf16.mxu0 0
      %1230 = vmatpush1.bf16.msra.mxu0 0
      %1231 = vmatprep.subr.bf16.mxu0 0
      %1232 = vmatpush1.bf16.msra.mxu0 0
      %1233 = vmatprep.subr.bf16.mxu0 0
      %1234 = vmatpush1.bf16.msra.mxu0 0
      %1235 = vmatprep.mubr.bf16.mxu0 0
      %1236 = vmatmul.mubr.bf16.gmra.mrb[0].mxu0 %v1156
      %v1237 = vpop.f32.mrb[0].mxu0
      %v1238 = vadd.f32 0.0, %v1237
      %v1239 = vpop.f32.mrb[0].mxu0
      %v1240 = vpop.f32.mrb[0].mxu0
      %v1241 = vadd.f32 0.0, %v1240
      %v1242 = vpop.f32.mrb[0].mxu0
      %1243 = vmatprep.mubr.bf16.mxu0 0
      %1244 = vmatmul.mubr.bf16.gmra.mrb[0].mxu0 %v1159
      %v1245 = vpop.f32.mrb[0].mxu0
      %v1246 = vadd.f32 0.0, %v1245
      %v1247 = vpop.f32.mrb[0].mxu0
      %v1248 = vpop.f32.mrb[0].mxu0
      %v1249 = vadd.f32 0.0, %v1248
      %v1250 = vpop.f32.mrb[0].mxu0
      %1251 = vmatprep.mubr.bf16.mxu0 0
      %1252 = vmatmul.mubr.bf16.gmra.mrb[0].mxu0 %v1162
      %v1253 = vpop.f32.mrb[0].mxu0
      %v1254 = vadd.f32 0.0, %v1253
      %v1255 = vpop.f32.mrb[0].mxu0
      %v1256 = vpop.f32.mrb[0].mxu0
      %v1257 = vadd.f32 0.0, %v1256
      %v1258 = vpop.f32.mrb[0].mxu0
      %1259 = vmatprep.mubr.bf16.mxu0 0
      %1260 = vmatmul.mubr.bf16.gmra.mrb[0].mxu0 %v1165
      %v1261 = vpop.f32.mrb[0].mxu0
      %v1262 = vadd.f32 0.0, %v1261
      %v1263 = vpop.f32.mrb[0].mxu0
      %v1264 = vpop.f32.mrb[0].mxu0
      %v1265 = vadd.f32 0.0, %v1264
      %v1266 = vpop.f32.mrb[0].mxu0
      %1267 = vmatprep.mubr.bf16.mxu0 0
      %1268 = vmatmul.mubr.bf16.gmra.mrb[0].mxu0 %v1168
      %v1269 = vpop.f32.mrb[0].mxu0
      %v1270 = vadd.f32 0.0, %v1269
      %v1271 = vpop.f32.mrb[0].mxu0
      %v1272 = vpop.f32.mrb[0].mxu0
      %v1273 = vadd.f32 0.0, %v1272
      %v1274 = vpop.f32.mrb[0].mxu0
      %1275 = vmatprep.mubr.bf16.mxu0 0
      %1276 = vmatmul.mubr.bf16.gmra.mrb[0].mxu0 %v1171
      %v1277 = vpop.f32.mrb[0].mxu0
      %v1278 = vadd.f32 0.0, %v1277
      %v1279 = vpop.f32.mrb[0].mxu0
      %v1280 = vpop.f32.mrb[0].mxu0
      %v1281 = vadd.f32 0.0, %v1280
      %v1282 = vpop.f32.mrb[0].mxu0
      %1283 = vmatprep.mubr.bf16.mxu0 0
      %1284 = vmatmul.mubr.bf16.gmra.mrb[0].mxu0 %v1174
      %v1285 = vpop.f32.mrb[0].mxu0
      %v1286 = vadd.f32 0.0, %v1285
      %v1287 = vpop.f32.mrb[0].mxu0
      %v1288 = vpop.f32.mrb[0].mxu0
      %v1289 = vadd.f32 0.0, %v1288
      %v1290 = vpop.f32.mrb[0].mxu0
      %1291 = vmatprep.mubr.bf16.mxu0 0
      %1292 = vmatmul.mubr.bf16.gmra.mrb[0].mxu0 %v1177
      %v1293 = vpop.f32.mrb[0].mxu0
      %v1294 = vadd.f32 0.0, %v1293
      %v1295 = vpop.f32.mrb[0].mxu0
      %v1296 = vpop.f32.mrb[0].mxu0
      %v1297 = vadd.f32 0.0, %v1296
      %v1298 = vpop.f32.mrb[0].mxu0
      %1299 = vmatprep.mubr.bf16.mxu0 0
      %1300 = vmatmul.mubr.bf16.gmra.mrb[0].mxu0 %v1180
      %v1301 = vpop.f32.mrb[0].mxu0
      %v1302 = vadd.f32 0.0, %v1301
      %v1303 = vpop.f32.mrb[0].mxu0
      %v1304 = vpop.f32.mrb[0].mxu0
      %v1305 = vadd.f32 0.0, %v1304
      %v1306 = vpop.f32.mrb[0].mxu0
      %1307 = vmatprep.mubr.bf16.mxu0 0
      %1308 = vmatmul.mubr.bf16.gmra.mrb[0].mxu0 %v1183
      %v1309 = vpop.f32.mrb[0].mxu0
      %v1310 = vadd.f32 0.0, %v1309
      %v1311 = vpop.f32.mrb[0].mxu0
      %v1312 = vpop.f32.mrb[0].mxu0
      %v1313 = vadd.f32 0.0, %v1312
      %v1314 = vpop.f32.mrb[0].mxu0
      %1315 = vmatprep.mubr.bf16.mxu0 0
      %1316 = vmatmul.mubr.bf16.gmra.mrb[0].mxu0 %v1186
      %v1317 = vpop.f32.mrb[0].mxu0
      %v1318 = vadd.f32 0.0, %v1317
      %v1319 = vpop.f32.mrb[0].mxu0
      %v1320 = vpop.f32.mrb[0].mxu0
      %v1321 = vadd.f32 0.0, %v1320
      %v1322 = vpop.f32.mrb[0].mxu0
      %1323 = vmatprep.mubr.bf16.mxu0 0
      %1324 = vmatmul.mubr.bf16.gmra.mrb[0].mxu0 %v1189
      %v1325 = vpop.f32.mrb[0].mxu0
      %v1326 = vadd.f32 0.0, %v1325
      %v1327 = vpop.f32.mrb[0].mxu0
      %v1328 = vpop.f32.mrb[0].mxu0
      %v1329 = vadd.f32 0.0, %v1328
      %v1330 = vpop.f32.mrb[0].mxu0
      %1331 = vmatprep.mubr.bf16.mxu0 0
      %1332 = vmatmul.mubr.bf16.gmra.mrb[0].mxu0 %v1192
      %v1333 = vpop.f32.mrb[0].mxu0
      %v1334 = vadd.f32 0.0, %v1333
      %v1335 = vpop.f32.mrb[0].mxu0
      %v1336 = vpop.f32.mrb[0].mxu0
      %v1337 = vadd.f32 0.0, %v1336
      %v1338 = vpop.f32.mrb[0].mxu0
      %1339 = vmatprep.mubr.bf16.mxu0 0
      %1340 = vmatmul.mubr.bf16.gmra.mrb[0].mxu0 %v1195
      %v1341 = vpop.f32.mrb[0].mxu0
      %v1342 = vadd.f32 0.0, %v1341
      %v1343 = vpop.f32.mrb[0].mxu0
      %v1344 = vpop.f32.mrb[0].mxu0
      %v1345 = vadd.f32 0.0, %v1344
      %v1346 = vpop.f32.mrb[0].mxu0
      %1347 = vmatprep.mubr.bf16.mxu0 0
      %1348 = vmatmul.mubr.bf16.gmra.mrb[0].mxu0 %v1198
      %v1349 = vpop.f32.mrb[0].mxu0
      %v1350 = vadd.f32 0.0, %v1349
      %v1351 = vpop.f32.mrb[0].mxu0
      %v1352 = vpop.f32.mrb[0].mxu0
      %v1353 = vadd.f32 0.0, %v1352
      %v1354 = vpop.f32.mrb[0].mxu0
      %1355 = vmatprep.mubr.bf16.mxu0 0
      %1356 = vmatmul.mubr.bf16.gmra.mrb[0].mxu0 %v1201
      %v1357 = vpop.f32.mrb[0].mxu0
      %v1358 = vadd.f32 0.0, %v1357
      %v1359 = vpop.f32.mrb[0].mxu0
      %v1360 = vpop.f32.mrb[0].mxu0
      %v1361 = vadd.f32 0.0, %v1360
      %v1362 = vpop.f32.mrb[0].mxu0
      %1363 = vdwg.mxu0
      %v1364 = vadd.f32 %v964, %v1238
      %v1365 = vadd.f32 %v967, %v1241
      %v1366 = vadd.f32 %v972, %v1246
      %v1367 = vadd.f32 %v975, %v1249
      %v1368 = vadd.f32 %v980, %v1254
      %v1369 = vadd.f32 %v983, %v1257
      %v1370 = vadd.f32 %v988, %v1262
      %v1371 = vadd.f32 %v991, %v1265
      %v1372 = vadd.f32 %v996, %v1270
      %v1373 = vadd.f32 %v999, %v1273
      %v1374 = vadd.f32 %v1004, %v1278
      %v1375 = vadd.f32 %v1007, %v1281
      %v1376 = vadd.f32 %v1012, %v1286
      %v1377 = vadd.f32 %v1015, %v1289
      %v1378 = vadd.f32 %v1020, %v1294
      %v1379 = vadd.f32 %v1023, %v1297
      %v1380 = vadd.f32 %v1028, %v1302
      %v1381 = vadd.f32 %v1031, %v1305
      %v1382 = vadd.f32 %v1036, %v1310
      %v1383 = vadd.f32 %v1039, %v1313
      %v1384 = vadd.f32 %v1044, %v1318
      %v1385 = vadd.f32 %v1047, %v1321
      %v1386 = vadd.f32 %v1052, %v1326
      %v1387 = vadd.f32 %v1055, %v1329
      %v1388 = vadd.f32 %v1060, %v1334
      %v1389 = vadd.f32 %v1063, %v1337
      %v1390 = vadd.f32 %v1068, %v1342
      %v1391 = vadd.f32 %v1071, %v1345
      %v1392 = vadd.f32 %v1076, %v1350
      %v1393 = vadd.f32 %v1079, %v1353
      %v1394 = vadd.f32 %v1084, %v1358
      %v1395 = vadd.f32 %v1087, %v1361
      %v1396 = vld [vmem:[%s510] sm:$0xff]
      %v1397 = vld [vmem:[%s510 + $0x8] sm:$0xff]
      %v1398 = vld [vmem:[%s510 + $0x18] sm:$0xff]
      %v1399 = vld [vmem:[%s510 + $0x20] sm:$0xff]
      %v1400 = vld [vmem:[%s510 + $0x30] sm:$0xff]
      %v1401 = vld [vmem:[%s510 + $0x38] sm:$0xff]
      %v1402 = vld [vmem:[%s510 + $0x48] sm:$0xff]
      %v1403 = vld [vmem:[%s510 + $0x50] sm:$0xff]
      %v1404 = vld [vmem:[%s510 + $0x60] sm:$0xff]
      %v1405 = vld [vmem:[%s510 + $0x68] sm:$0xff]
      %v1406 = vld [vmem:[%s510 + $0x78] sm:$0xff]
      %v1407 = vld [vmem:[%s510 + $0x80] sm:$0xff]
      %v1408 = vld [vmem:[%s510 + $0x90] sm:$0xff]
      %v1409 = vld [vmem:[%s510 + $0x98] sm:$0xff]
      %v1410 = vld [vmem:[%s510 + $0xa8] sm:$0xff]
      %v1411 = vld [vmem:[%s510 + $0xb0] sm:$0xff]
      %v1412 = vld [vmem:[%s510 + $0xc0] sm:$0xff]
      %v1413 = vld [vmem:[%s510 + $0xc8] sm:$0xff]
      %v1414 = vld [vmem:[%s510 + $0xd8] sm:$0xff]
      %v1415 = vld [vmem:[%s510 + $0xe0] sm:$0xff]
      %v1416 = vld [vmem:[%s510 + $0xf0] sm:$0xff]
      %v1417 = vld [vmem:[%s510 + $0xf8] sm:$0xff]
      %v1418 = vld [vmem:[%s510 + $0x108] sm:$0xff]
      %v1419 = vld [vmem:[%s510 + $0x110] sm:$0xff]
      %v1420 = vld [vmem:[%s510 + $0x120] sm:$0xff]
      %v1421 = vld [vmem:[%s510 + $0x128] sm:$0xff]
      %v1422 = vld [vmem:[%s510 + $0x138] sm:$0xff]
      %v1423 = vld [vmem:[%s510 + $0x140] sm:$0xff]
      %v1424 = vld [vmem:[%s510 + $0x150] sm:$0xff]
      %v1425 = vld [vmem:[%s510 + $0x158] sm:$0xff]
      %v1426 = vld [vmem:[%s510 + $0x168] sm:$0xff]
      %v1427 = vld [vmem:[%s510 + $0x170] sm:$0xff]
      %v1428 = vpack.c.bf16 %v1397, %v1396
      %v1429 = vpack.c.bf16 %v1399, %v1398
      %v1430 = vpack.c.bf16 %v1401, %v1400
      %v1431 = vpack.c.bf16 %v1403, %v1402
      %v1432 = vpack.c.bf16 %v1405, %v1404
      %v1433 = vpack.c.bf16 %v1407, %v1406
      %v1434 = vpack.c.bf16 %v1409, %v1408
      %v1435 = vpack.c.bf16 %v1411, %v1410
      %v1436 = vpack.c.bf16 %v1413, %v1412
      %v1437 = vpack.c.bf16 %v1415, %v1414
      %v1438 = vpack.c.bf16 %v1417, %v1416
      %v1439 = vpack.c.bf16 %v1419, %v1418
      %v1440 = vpack.c.bf16 %v1421, %v1420
      %v1441 = vpack.c.bf16 %v1423, %v1422
      %v1442 = vpack.c.bf16 %v1425, %v1424
      %v1443 = vpack.c.bf16 %v1427, %v1426
      %s1444 = scalar_lea.vmem %s3, 48
      %v1445 = vld [vmem:[%s1444] sm:$0xf]
      %v1446 = vld [vmem:[%s1444 + $0x4] sm:$0xf]
      %v1447 = vld [vmem:[%s1444 + $0x8] sm:$0xf]
      %v1448 = vld [vmem:[%s1444 + $0xc] sm:$0xf]
      %v1453 = vunpack.c.l.b16 %v1445
      %v1454 = vunpack.c.l.b16 %v1446
      %v1455 = vunpack.c.l.b16 %v1447
      %v1456 = vunpack.c.l.b16 %v1448
      %v1457 = vpack.c.b16 %v1454, %v1453
      %v1458 = vpack.c.b16 %v1456, %v1455
      %v1462 = vsel %vm280, %v1428, 0
      %v1465 = vsel %vm280, %v1429, 0
      %v1468 = vsel %vm280, %v1430, 0
      %v1471 = vsel %vm280, %v1431, 0
      %v1474 = vsel %vm280, %v1432, 0
      %v1477 = vsel %vm280, %v1433, 0
      %v1480 = vsel %vm280, %v1434, 0
      %v1483 = vsel %vm280, %v1435, 0
      %v1486 = vsel %vm280, %v1436, 0
      %v1489 = vsel %vm280, %v1437, 0
      %v1492 = vsel %vm280, %v1438, 0
      %v1495 = vsel %vm280, %v1439, 0
      %v1498 = vsel %vm280, %v1440, 0
      %v1501 = vsel %vm280, %v1441, 0
      %v1504 = vsel %vm280, %v1442, 0
      %v1507 = vsel %vm280, %v1443, 0
      %1509 = vmatprep.subr.bf16.mxu0 0
      %1510 = vmatpush1.bf16.msra.mxu0 %v1457
      %1511 = vmatprep.subr.bf16.mxu0 0
      %1512 = vmatpush1.bf16.msra.mxu0 %v1458
      %1513 = vmatprep.subr.bf16.mxu0 0
      %1514 = vmatpush1.bf16.msra.mxu0 0
      %1515 = vmatprep.subr.bf16.mxu0 0
      %1516 = vmatpush1.bf16.msra.mxu0 0
      %1517 = vmatprep.subr.bf16.mxu0 0
      %1518 = vmatpush1.bf16.msra.mxu0 0
      %1519 = vmatprep.subr.bf16.mxu0 0
      %1520 = vmatpush1.bf16.msra.mxu0 0
      %1521 = vmatprep.subr.bf16.mxu0 0
      %1522 = vmatpush1.bf16.msra.mxu0 0
      %1523 = vmatprep.subr.bf16.mxu0 0
      %1524 = vmatpush1.bf16.msra.mxu0 0
      %1525 = vmatprep.subr.bf16.mxu0 0
      %1526 = vmatpush1.bf16.msra.mxu0 0
      %1527 = vmatprep.subr.bf16.mxu0 0
      %1528 = vmatpush1.bf16.msra.mxu0 0
      %1529 = vmatprep.subr.bf16.mxu0 0
      %1530 = vmatpush1.bf16.msra.mxu0 0
      %1531 = vmatprep.subr.bf16.mxu0 0
      %1532 = vmatpush1.bf16.msra.mxu0 0
      %1533 = vmatprep.subr.bf16.mxu0 0
      %1534 = vmatpush1.bf16.msra.mxu0 0
      %1535 = vmatprep.subr.bf16.mxu0 0
      %1536 = vmatpush1.bf16.msra.mxu0 0
      %1537 = vmatprep.subr.bf16.mxu0 0
      %1538 = vmatpush1.bf16.msra.mxu0 0
      %1539 = vmatprep.subr.bf16.mxu0 0
      %1540 = vmatpush1.bf16.msra.mxu0 0
      %1541 = vmatprep.mubr.bf16.mxu0 0
      %1542 = vmatmul.mubr.bf16.gmra.mrb[0].mxu0 %v1462
      %v1543 = vpop.f32.mrb[0].mxu0
      %v1544 = vadd.f32 0.0, %v1543
      %v1545 = vpop.f32.mrb[0].mxu0
      %v1546 = vpop.f32.mrb[0].mxu0
      %v1547 = vadd.f32 0.0, %v1546
      %v1548 = vpop.f32.mrb[0].mxu0
      %1549 = vmatprep.mubr.bf16.mxu0 0
      %1550 = vmatmul.mubr.bf16.gmra.mrb[0].mxu0 %v1465
      %v1551 = vpop.f32.mrb[0].mxu0
      %v1552 = vadd.f32 0.0, %v1551
      %v1553 = vpop.f32.mrb[0].mxu0
      %v1554 = vpop.f32.mrb[0].mxu0
      %v1555 = vadd.f32 0.0, %v1554
      %v1556 = vpop.f32.mrb[0].mxu0
      %1557 = vmatprep.mubr.bf16.mxu0 0
      %1558 = vmatmul.mubr.bf16.gmra.mrb[0].mxu0 %v1468
      %v1559 = vpop.f32.mrb[0].mxu0
      %v1560 = vadd.f32 0.0, %v1559
      %v1561 = vpop.f32.mrb[0].mxu0
      %v1562 = vpop.f32.mrb[0].mxu0
      %v1563 = vadd.f32 0.0, %v1562
      %v1564 = vpop.f32.mrb[0].mxu0
      %1565 = vmatprep.mubr.bf16.mxu0 0
      %1566 = vmatmul.mubr.bf16.gmra.mrb[0].mxu0 %v1471
      %v1567 = vpop.f32.mrb[0].mxu0
      %v1568 = vadd.f32 0.0, %v1567
      %v1569 = vpop.f32.mrb[0].mxu0
      %v1570 = vpop.f32.mrb[0].mxu0
      %v1571 = vadd.f32 0.0, %v1570
      %v1572 = vpop.f32.mrb[0].mxu0
      %1573 = vmatprep.mubr.bf16.mxu0 0
      %1574 = vmatmul.mubr.bf16.gmra.mrb[0].mxu0 %v1474
      %v1575 = vpop.f32.mrb[0].mxu0
      %v1576 = vadd.f32 0.0, %v1575
      %v1577 = vpop.f32.mrb[0].mxu0
      %v1578 = vpop.f32.mrb[0].mxu0
      %v1579 = vadd.f32 0.0, %v1578
      %v1580 = vpop.f32.mrb[0].mxu0
      %1581 = vmatprep.mubr.bf16.mxu0 0
      %1582 = vmatmul.mubr.bf16.gmra.mrb[0].mxu0 %v1477
      %v1583 = vpop.f32.mrb[0].mxu0
      %v1584 = vadd.f32 0.0, %v1583
      %v1585 = vpop.f32.mrb[0].mxu0
      %v1586 = vpop.f32.mrb[0].mxu0
      %v1587 = vadd.f32 0.0, %v1586
      %v1588 = vpop.f32.mrb[0].mxu0
      %1589 = vmatprep.mubr.bf16.mxu0 0
      %1590 = vmatmul.mubr.bf16.gmra.mrb[0].mxu0 %v1480
      %v1591 = vpop.f32.mrb[0].mxu0
      %v1592 = vadd.f32 0.0, %v1591
      %v1593 = vpop.f32.mrb[0].mxu0
      %v1594 = vpop.f32.mrb[0].mxu0
      %v1595 = vadd.f32 0.0, %v1594
      %v1596 = vpop.f32.mrb[0].mxu0
      %1597 = vmatprep.mubr.bf16.mxu0 0
      %1598 = vmatmul.mubr.bf16.gmra.mrb[0].mxu0 %v1483
      %v1599 = vpop.f32.mrb[0].mxu0
      %v1600 = vadd.f32 0.0, %v1599
      %v1601 = vpop.f32.mrb[0].mxu0
      %v1602 = vpop.f32.mrb[0].mxu0
      %v1603 = vadd.f32 0.0, %v1602
      %v1604 = vpop.f32.mrb[0].mxu0
      %1605 = vmatprep.mubr.bf16.mxu0 0
      %1606 = vmatmul.mubr.bf16.gmra.mrb[0].mxu0 %v1486
      %v1607 = vpop.f32.mrb[0].mxu0
      %v1608 = vadd.f32 0.0, %v1607
      %v1609 = vpop.f32.mrb[0].mxu0
      %v1610 = vpop.f32.mrb[0].mxu0
      %v1611 = vadd.f32 0.0, %v1610
      %v1612 = vpop.f32.mrb[0].mxu0
      %1613 = vmatprep.mubr.bf16.mxu0 0
      %1614 = vmatmul.mubr.bf16.gmra.mrb[0].mxu0 %v1489
      %v1615 = vpop.f32.mrb[0].mxu0
      %v1616 = vadd.f32 0.0, %v1615
      %v1617 = vpop.f32.mrb[0].mxu0
      %v1618 = vpop.f32.mrb[0].mxu0
      %v1619 = vadd.f32 0.0, %v1618
      %v1620 = vpop.f32.mrb[0].mxu0
      %1621 = vmatprep.mubr.bf16.mxu0 0
      %1622 = vmatmul.mubr.bf16.gmra.mrb[0].mxu0 %v1492
      %v1623 = vpop.f32.mrb[0].mxu0
      %v1624 = vadd.f32 0.0, %v1623
      %v1625 = vpop.f32.mrb[0].mxu0
      %v1626 = vpop.f32.mrb[0].mxu0
      %v1627 = vadd.f32 0.0, %v1626
      %v1628 = vpop.f32.mrb[0].mxu0
      %1629 = vmatprep.mubr.bf16.mxu0 0
      %1630 = vmatmul.mubr.bf16.gmra.mrb[0].mxu0 %v1495
      %v1631 = vpop.f32.mrb[0].mxu0
      %v1632 = vadd.f32 0.0, %v1631
      %v1633 = vpop.f32.mrb[0].mxu0
      %v1634 = vpop.f32.mrb[0].mxu0
      %v1635 = vadd.f32 0.0, %v1634
      %v1636 = vpop.f32.mrb[0].mxu0
      %1637 = vmatprep.mubr.bf16.mxu0 0
      %1638 = vmatmul.mubr.bf16.gmra.mrb[0].mxu0 %v1498
      %v1639 = vpop.f32.mrb[0].mxu0
      %v1640 = vadd.f32 0.0, %v1639
      %v1641 = vpop.f32.mrb[0].mxu0
      %v1642 = vpop.f32.mrb[0].mxu0
      %v1643 = vadd.f32 0.0, %v1642
      %v1644 = vpop.f32.mrb[0].mxu0
      %1645 = vmatprep.mubr.bf16.mxu0 0
      %1646 = vmatmul.mubr.bf16.gmra.mrb[0].mxu0 %v1501
      %v1647 = vpop.f32.mrb[0].mxu0
      %v1648 = vadd.f32 0.0, %v1647
      %v1649 = vpop.f32.mrb[0].mxu0
      %v1650 = vpop.f32.mrb[0].mxu0
      %v1651 = vadd.f32 0.0, %v1650
      %v1652 = vpop.f32.mrb[0].mxu0
      %1653 = vmatprep.mubr.bf16.mxu0 0
      %1654 = vmatmul.mubr.bf16.gmra.mrb[0].mxu0 %v1504
      %v1655 = vpop.f32.mrb[0].mxu0
      %v1656 = vadd.f32 0.0, %v1655
      %v1657 = vpop.f32.mrb[0].mxu0
      %v1658 = vpop.f32.mrb[0].mxu0
      %v1659 = vadd.f32 0.0, %v1658
      %v1660 = vpop.f32.mrb[0].mxu0
      %1661 = vmatprep.mubr.bf16.mxu0 0
      %1662 = vmatmul.mubr.bf16.gmra.mrb[0].mxu0 %v1507
      %v1663 = vpop.f32.mrb[0].mxu0
      %v1664 = vadd.f32 0.0, %v1663
      %v1665 = vpop.f32.mrb[0].mxu0
      %v1666 = vpop.f32.mrb[0].mxu0
      %v1667 = vadd.f32 0.0, %v1666
      %v1668 = vpop.f32.mrb[0].mxu0
      %1669 = vdwg.mxu0
      %v1670 = vadd.f32 %v1364, %v1544
      %v1671 = vadd.f32 %v1365, %v1547
      %v1672 = vadd.f32 %v1366, %v1552
      %v1673 = vadd.f32 %v1367, %v1555
      %v1674 = vadd.f32 %v1368, %v1560
      %v1675 = vadd.f32 %v1369, %v1563
      %v1676 = vadd.f32 %v1370, %v1568
      %v1677 = vadd.f32 %v1371, %v1571
      %v1678 = vadd.f32 %v1372, %v1576
      %v1679 = vadd.f32 %v1373, %v1579
      %v1680 = vadd.f32 %v1374, %v1584
      %v1681 = vadd.f32 %v1375, %v1587
      %v1682 = vadd.f32 %v1376, %v1592
      %v1683 = vadd.f32 %v1377, %v1595
      %v1684 = vadd.f32 %v1378, %v1600
      %v1685 = vadd.f32 %v1379, %v1603
      %v1686 = vadd.f32 %v1380, %v1608
      %v1687 = vadd.f32 %v1381, %v1611
      %v1688 = vadd.f32 %v1382, %v1616
      %v1689 = vadd.f32 %v1383, %v1619
      %v1690 = vadd.f32 %v1384, %v1624
      %v1691 = vadd.f32 %v1385, %v1627
      %v1692 = vadd.f32 %v1386, %v1632
      %v1693 = vadd.f32 %v1387, %v1635
      %v1694 = vadd.f32 %v1388, %v1640
      %v1695 = vadd.f32 %v1389, %v1643
      %v1696 = vadd.f32 %v1390, %v1648
      %v1697 = vadd.f32 %v1391, %v1651
      %v1698 = vadd.f32 %v1392, %v1656
      %v1699 = vadd.f32 %v1393, %v1659
      %v1700 = vadd.f32 %v1394, %v1664
      %v1701 = vadd.f32 %v1395, %v1667
      %v1702 = vld [vmem:[%s510 + $0x1] sm:$0xff]
      %v1703 = vld [vmem:[%s510 + $0x9] sm:$0xff]
      %v1704 = vld [vmem:[%s510 + $0x19] sm:$0xff]
      %v1705 = vld [vmem:[%s510 + $0x21] sm:$0xff]
      %v1706 = vld [vmem:[%s510 + $0x31] sm:$0xff]
      %v1707 = vld [vmem:[%s510 + $0x39] sm:$0xff]
      %v1708 = vld [vmem:[%s510 + $0x49] sm:$0xff]
      %v1709 = vld [vmem:[%s510 + $0x51] sm:$0xff]
      %v1710 = vld [vmem:[%s510 + $0x61] sm:$0xff]
      %v1711 = vld [vmem:[%s510 + $0x69] sm:$0xff]
      %v1712 = vld [vmem:[%s510 + $0x79] sm:$0xff]
      %v1713 = vld [vmem:[%s510 + $0x81] sm:$0xff]
      %v1714 = vld [vmem:[%s510 + $0x91] sm:$0xff]
      %v1715 = vld [vmem:[%s510 + $0x99] sm:$0xff]
      %v1716 = vld [vmem:[%s510 + $0xa9] sm:$0xff]
      %v1717 = vld [vmem:[%s510 + $0xb1] sm:$0xff]
      %v1718 = vld [vmem:[%s510 + $0xc1] sm:$0xff]
      %v1719 = vld [vmem:[%s510 + $0xc9] sm:$0xff]
      %v1720 = vld [vmem:[%s510 + $0xd9] sm:$0xff]
      %v1721 = vld [vmem:[%s510 + $0xe1] sm:$0xff]
      %v1722 = vld [vmem:[%s510 + $0xf1] sm:$0xff]
      %v1723 = vld [vmem:[%s510 + $0xf9] sm:$0xff]
      %v1724 = vld [vmem:[%s510 + $0x109] sm:$0xff]
      %v1725 = vld [vmem:[%s510 + $0x111] sm:$0xff]
      %v1726 = vld [vmem:[%s510 + $0x121] sm:$0xff]
      %v1727 = vld [vmem:[%s510 + $0x129] sm:$0xff]
      %v1728 = vld [vmem:[%s510 + $0x139] sm:$0xff]
      %v1729 = vld [vmem:[%s510 + $0x141] sm:$0xff]
      %v1730 = vld [vmem:[%s510 + $0x151] sm:$0xff]
      %v1731 = vld [vmem:[%s510 + $0x159] sm:$0xff]
      %v1732 = vld [vmem:[%s510 + $0x169] sm:$0xff]
      %v1733 = vld [vmem:[%s510 + $0x171] sm:$0xff]
      %v1734 = vpack.c.bf16 %v1703, %v1702
      %v1735 = vpack.c.bf16 %v1705, %v1704
      %v1736 = vpack.c.bf16 %v1707, %v1706
      %v1737 = vpack.c.bf16 %v1709, %v1708
      %v1738 = vpack.c.bf16 %v1711, %v1710
      %v1739 = vpack.c.bf16 %v1713, %v1712
      %v1740 = vpack.c.bf16 %v1715, %v1714
      %v1741 = vpack.c.bf16 %v1717, %v1716
      %v1742 = vpack.c.bf16 %v1719, %v1718
      %v1743 = vpack.c.bf16 %v1721, %v1720
      %v1744 = vpack.c.bf16 %v1723, %v1722
      %v1745 = vpack.c.bf16 %v1725, %v1724
      %v1746 = vpack.c.bf16 %v1727, %v1726
      %v1747 = vpack.c.bf16 %v1729, %v1728
      %v1748 = vpack.c.bf16 %v1731, %v1730
      %v1749 = vpack.c.bf16 %v1733, %v1732
      %s1750 = scalar_lea.vmem %s3, 64
      %v1751 = vld [vmem:[%s1750] sm:$0xf]
      %v1752 = vld [vmem:[%s1750 + $0x4] sm:$0xf]
      %v1753 = vld [vmem:[%s1750 + $0x8] sm:$0xf]
      %v1754 = vld [vmem:[%s1750 + $0xc] sm:$0xf]
      %v1759 = vunpack.c.l.b16 %v1751
      %v1760 = vunpack.c.l.b16 %v1752
      %v1761 = vunpack.c.l.b16 %v1753
      %v1762 = vunpack.c.l.b16 %v1754
      %v1763 = vpack.c.b16 %v1760, %v1759
      %v1764 = vpack.c.b16 %v1762, %v1761
      %v1768 = vsel %vm280, %v1734, 0
      %v1771 = vsel %vm280, %v1735, 0
      %v1774 = vsel %vm280, %v1736, 0
      %v1777 = vsel %vm280, %v1737, 0
      %v1780 = vsel %vm280, %v1738, 0
      %v1783 = vsel %vm280, %v1739, 0
      %v1786 = vsel %vm280, %v1740, 0
      %v1789 = vsel %vm280, %v1741, 0
      %v1792 = vsel %vm280, %v1742, 0
      %v1795 = vsel %vm280, %v1743, 0
      %v1798 = vsel %vm280, %v1744, 0
      %v1801 = vsel %vm280, %v1745, 0
      %v1804 = vsel %vm280, %v1746, 0
      %v1807 = vsel %vm280, %v1747, 0
      %v1810 = vsel %vm280, %v1748, 0
      %v1813 = vsel %vm280, %v1749, 0
      %1815 = vmatprep.subr.bf16.mxu0 0
      %1816 = vmatpush1.bf16.msra.mxu0 %v1763
      %1817 = vmatprep.subr.bf16.mxu0 0
      %1818 = vmatpush1.bf16.msra.mxu0 %v1764
      %1819 = vmatprep.subr.bf16.mxu0 0
      %1820 = vmatpush1.bf16.msra.mxu0 0
      %1821 = vmatprep.subr.bf16.mxu0 0
      %1822 = vmatpush1.bf16.msra.mxu0 0
      %1823 = vmatprep.subr.bf16.mxu0 0
      %1824 = vmatpush1.bf16.msra.mxu0 0
      %1825 = vmatprep.subr.bf16.mxu0 0
      %1826 = vmatpush1.bf16.msra.mxu0 0
      %1827 = vmatprep.subr.bf16.mxu0 0
      %1828 = vmatpush1.bf16.msra.mxu0 0
      %1829 = vmatprep.subr.bf16.mxu0 0
      %1830 = vmatpush1.bf16.msra.mxu0 0
      %1831 = vmatprep.subr.bf16.mxu0 0
      %1832 = vmatpush1.bf16.msra.mxu0 0
      %1833 = vmatprep.subr.bf16.mxu0 0
      %1834 = vmatpush1.bf16.msra.mxu0 0
      %1835 = vmatprep.subr.bf16.mxu0 0
      %1836 = vmatpush1.bf16.msra.mxu0 0
      %1837 = vmatprep.subr.bf16.mxu0 0
      %1838 = vmatpush1.bf16.msra.mxu0 0
      %1839 = vmatprep.subr.bf16.mxu0 0
      %1840 = vmatpush1.bf16.msra.mxu0 0
      %1841 = vmatprep.subr.bf16.mxu0 0
      %1842 = vmatpush1.bf16.msra.mxu0 0
      %1843 = vmatprep.subr.bf16.mxu0 0
      %1844 = vmatpush1.bf16.msra.mxu0 0
      %1845 = vmatprep.subr.bf16.mxu0 0
      %1846 = vmatpush1.bf16.msra.mxu0 0
      %1847 = vmatprep.mubr.bf16.mxu0 0
      %1848 = vmatmul.mubr.bf16.gmra.mrb[0].mxu0 %v1768
      %v1849 = vpop.f32.mrb[0].mxu0
      %v1850 = vadd.f32 0.0, %v1849
      %v1851 = vpop.f32.mrb[0].mxu0
      %v1852 = vpop.f32.mrb[0].mxu0
      %v1853 = vadd.f32 0.0, %v1852
      %v1854 = vpop.f32.mrb[0].mxu0
      %1855 = vmatprep.mubr.bf16.mxu0 0
      %1856 = vmatmul.mubr.bf16.gmra.mrb[0].mxu0 %v1771
      %v1857 = vpop.f32.mrb[0].mxu0
      %v1858 = vadd.f32 0.0, %v1857
      %v1859 = vpop.f32.mrb[0].mxu0
      %v1860 = vpop.f32.mrb[0].mxu0
      %v1861 = vadd.f32 0.0, %v1860
      %v1862 = vpop.f32.mrb[0].mxu0
      %1863 = vmatprep.mubr.bf16.mxu0 0
      %1864 = vmatmul.mubr.bf16.gmra.mrb[0].mxu0 %v1774
      %v1865 = vpop.f32.mrb[0].mxu0
      %v1866 = vadd.f32 0.0, %v1865
      %v1867 = vpop.f32.mrb[0].mxu0
      %v1868 = vpop.f32.mrb[0].mxu0
      %v1869 = vadd.f32 0.0, %v1868
      %v1870 = vpop.f32.mrb[0].mxu0
      %1871 = vmatprep.mubr.bf16.mxu0 0
      %1872 = vmatmul.mubr.bf16.gmra.mrb[0].mxu0 %v1777
      %v1873 = vpop.f32.mrb[0].mxu0
      %v1874 = vadd.f32 0.0, %v1873
      %v1875 = vpop.f32.mrb[0].mxu0
      %v1876 = vpop.f32.mrb[0].mxu0
      %v1877 = vadd.f32 0.0, %v1876
      %v1878 = vpop.f32.mrb[0].mxu0
      %1879 = vmatprep.mubr.bf16.mxu0 0
      %1880 = vmatmul.mubr.bf16.gmra.mrb[0].mxu0 %v1780
      %v1881 = vpop.f32.mrb[0].mxu0
      %v1882 = vadd.f32 0.0, %v1881
      %v1883 = vpop.f32.mrb[0].mxu0
      %v1884 = vpop.f32.mrb[0].mxu0
      %v1885 = vadd.f32 0.0, %v1884
      %v1886 = vpop.f32.mrb[0].mxu0
      %1887 = vmatprep.mubr.bf16.mxu0 0
      %1888 = vmatmul.mubr.bf16.gmra.mrb[0].mxu0 %v1783
      %v1889 = vpop.f32.mrb[0].mxu0
      %v1890 = vadd.f32 0.0, %v1889
      %v1891 = vpop.f32.mrb[0].mxu0
      %v1892 = vpop.f32.mrb[0].mxu0
      %v1893 = vadd.f32 0.0, %v1892
      %v1894 = vpop.f32.mrb[0].mxu0
      %1895 = vmatprep.mubr.bf16.mxu0 0
      %1896 = vmatmul.mubr.bf16.gmra.mrb[0].mxu0 %v1786
      %v1897 = vpop.f32.mrb[0].mxu0
      %v1898 = vadd.f32 0.0, %v1897
      %v1899 = vpop.f32.mrb[0].mxu0
      %v1900 = vpop.f32.mrb[0].mxu0
      %v1901 = vadd.f32 0.0, %v1900
      %v1902 = vpop.f32.mrb[0].mxu0
      %1903 = vmatprep.mubr.bf16.mxu0 0
      %1904 = vmatmul.mubr.bf16.gmra.mrb[0].mxu0 %v1789
      %v1905 = vpop.f32.mrb[0].mxu0
      %v1906 = vadd.f32 0.0, %v1905
      %v1907 = vpop.f32.mrb[0].mxu0
      %v1908 = vpop.f32.mrb[0].mxu0
      %v1909 = vadd.f32 0.0, %v1908
      %v1910 = vpop.f32.mrb[0].mxu0
      %1911 = vmatprep.mubr.bf16.mxu0 0
      %1912 = vmatmul.mubr.bf16.gmra.mrb[0].mxu0 %v1792
      %v1913 = vpop.f32.mrb[0].mxu0
      %v1914 = vadd.f32 0.0, %v1913
      %v1915 = vpop.f32.mrb[0].mxu0
      %v1916 = vpop.f32.mrb[0].mxu0
      %v1917 = vadd.f32 0.0, %v1916
      %v1918 = vpop.f32.mrb[0].mxu0
      %1919 = vmatprep.mubr.bf16.mxu0 0
      %1920 = vmatmul.mubr.bf16.gmra.mrb[0].mxu0 %v1795
      %v1921 = vpop.f32.mrb[0].mxu0
      %v1922 = vadd.f32 0.0, %v1921
      %v1923 = vpop.f32.mrb[0].mxu0
      %v1924 = vpop.f32.mrb[0].mxu0
      %v1925 = vadd.f32 0.0, %v1924
      %v1926 = vpop.f32.mrb[0].mxu0
      %1927 = vmatprep.mubr.bf16.mxu0 0
      %1928 = vmatmul.mubr.bf16.gmra.mrb[0].mxu0 %v1798
      %v1929 = vpop.f32.mrb[0].mxu0
      %v1930 = vadd.f32 0.0, %v1929
      %v1931 = vpop.f32.mrb[0].mxu0
      %v1932 = vpop.f32.mrb[0].mxu0
      %v1933 = vadd.f32 0.0, %v1932
      %v1934 = vpop.f32.mrb[0].mxu0
      %1935 = vmatprep.mubr.bf16.mxu0 0
      %1936 = vmatmul.mubr.bf16.gmra.mrb[0].mxu0 %v1801
      %v1937 = vpop.f32.mrb[0].mxu0
      %v1938 = vadd.f32 0.0, %v1937
      %v1939 = vpop.f32.mrb[0].mxu0
      %v1940 = vpop.f32.mrb[0].mxu0
      %v1941 = vadd.f32 0.0, %v1940
      %v1942 = vpop.f32.mrb[0].mxu0
      %1943 = vmatprep.mubr.bf16.mxu0 0
      %1944 = vmatmul.mubr.bf16.gmra.mrb[0].mxu0 %v1804
      %v1945 = vpop.f32.mrb[0].mxu0
      %v1946 = vadd.f32 0.0, %v1945
      %v1947 = vpop.f32.mrb[0].mxu0
      %v1948 = vpop.f32.mrb[0].mxu0
      %v1949 = vadd.f32 0.0, %v1948
      %v1950 = vpop.f32.mrb[0].mxu0
      %1951 = vmatprep.mubr.bf16.mxu0 0
      %1952 = vmatmul.mubr.bf16.gmra.mrb[0].mxu0 %v1807
      %v1953 = vpop.f32.mrb[0].mxu0
      %v1954 = vadd.f32 0.0, %v1953
      %v1955 = vpop.f32.mrb[0].mxu0
      %v1956 = vpop.f32.mrb[0].mxu0
      %v1957 = vadd.f32 0.0, %v1956
      %v1958 = vpop.f32.mrb[0].mxu0
      %1959 = vmatprep.mubr.bf16.mxu0 0
      %1960 = vmatmul.mubr.bf16.gmra.mrb[0].mxu0 %v1810
      %v1961 = vpop.f32.mrb[0].mxu0
      %v1962 = vadd.f32 0.0, %v1961
      %v1963 = vpop.f32.mrb[0].mxu0
      %v1964 = vpop.f32.mrb[0].mxu0
      %v1965 = vadd.f32 0.0, %v1964
      %v1966 = vpop.f32.mrb[0].mxu0
      %1967 = vmatprep.mubr.bf16.mxu0 0
      %1968 = vmatmul.mubr.bf16.gmra.mrb[0].mxu0 %v1813
      %v1969 = vpop.f32.mrb[0].mxu0
      %v1970 = vadd.f32 0.0, %v1969
      %v1971 = vpop.f32.mrb[0].mxu0
      %v1972 = vpop.f32.mrb[0].mxu0
      %v1973 = vadd.f32 0.0, %v1972
      %v1974 = vpop.f32.mrb[0].mxu0
      %1975 = vdwg.mxu0
      %v1976 = vadd.f32 %v1670, %v1850
      %v1977 = vadd.f32 %v1671, %v1853
      %v1978 = vadd.f32 %v1672, %v1858
      %v1979 = vadd.f32 %v1673, %v1861
      %v1980 = vadd.f32 %v1674, %v1866
      %v1981 = vadd.f32 %v1675, %v1869
      %v1982 = vadd.f32 %v1676, %v1874
      %v1983 = vadd.f32 %v1677, %v1877
      %v1984 = vadd.f32 %v1678, %v1882
      %v1985 = vadd.f32 %v1679, %v1885
      %v1986 = vadd.f32 %v1680, %v1890
      %v1987 = vadd.f32 %v1681, %v1893
      %v1988 = vadd.f32 %v1682, %v1898
      %v1989 = vadd.f32 %v1683, %v1901
      %v1990 = vadd.f32 %v1684, %v1906
      %v1991 = vadd.f32 %v1685, %v1909
      %v1992 = vadd.f32 %v1686, %v1914
      %v1993 = vadd.f32 %v1687, %v1917
      %v1994 = vadd.f32 %v1688, %v1922
      %v1995 = vadd.f32 %v1689, %v1925
      %v1996 = vadd.f32 %v1690, %v1930
      %v1997 = vadd.f32 %v1691, %v1933
      %v1998 = vadd.f32 %v1692, %v1938
      %v1999 = vadd.f32 %v1693, %v1941
      %v2000 = vadd.f32 %v1694, %v1946
      %v2001 = vadd.f32 %v1695, %v1949
      %v2002 = vadd.f32 %v1696, %v1954
      %v2003 = vadd.f32 %v1697, %v1957
      %v2004 = vadd.f32 %v1698, %v1962
      %v2005 = vadd.f32 %v1699, %v1965
      %v2006 = vadd.f32 %v1700, %v1970
      %v2007 = vadd.f32 %v1701, %v1973
      %v2008 = vld [vmem:[%s510 + $0x2] sm:$0xff]
      %v2009 = vld [vmem:[%s510 + $0xa] sm:$0xff]
      %v2010 = vld [vmem:[%s510 + $0x1a] sm:$0xff]
      %v2011 = vld [vmem:[%s510 + $0x22] sm:$0xff]
      %v2012 = vld [vmem:[%s510 + $0x32] sm:$0xff]
      %v2013 = vld [vmem:[%s510 + $0x3a] sm:$0xff]
      %v2014 = vld [vmem:[%s510 + $0x4a] sm:$0xff]
      %v2015 = vld [vmem:[%s510 + $0x52] sm:$0xff]
      %v2016 = vld [vmem:[%s510 + $0x62] sm:$0xff]
      %v2017 = vld [vmem:[%s510 + $0x6a] sm:$0xff]
      %v2018 = vld [vmem:[%s510 + $0x7a] sm:$0xff]
      %v2019 = vld [vmem:[%s510 + $0x82] sm:$0xff]
      %v2020 = vld [vmem:[%s510 + $0x92] sm:$0xff]
      %v2021 = vld [vmem:[%s510 + $0x9a] sm:$0xff]
      %v2022 = vld [vmem:[%s510 + $0xaa] sm:$0xff]
      %v2023 = vld [vmem:[%s510 + $0xb2] sm:$0xff]
      %v2024 = vld [vmem:[%s510 + $0xc2] sm:$0xff]
      %v2025 = vld [vmem:[%s510 + $0xca] sm:$0xff]
      %v2026 = vld [vmem:[%s510 + $0xda] sm:$0xff]
      %v2027 = vld [vmem:[%s510 + $0xe2] sm:$0xff]
      %v2028 = vld [vmem:[%s510 + $0xf2] sm:$0xff]
      %v2029 = vld [vmem:[%s510 + $0xfa] sm:$0xff]
      %v2030 = vld [vmem:[%s510 + $0x10a] sm:$0xff]
      %v2031 = vld [vmem:[%s510 + $0x112] sm:$0xff]
      %v2032 = vld [vmem:[%s510 + $0x122] sm:$0xff]
      %v2033 = vld [vmem:[%s510 + $0x12a] sm:$0xff]
      %v2034 = vld [vmem:[%s510 + $0x13a] sm:$0xff]
      %v2035 = vld [vmem:[%s510 + $0x142] sm:$0xff]
      %v2036 = vld [vmem:[%s510 + $0x152] sm:$0xff]
      %v2037 = vld [vmem:[%s510 + $0x15a] sm:$0xff]
      %v2038 = vld [vmem:[%s510 + $0x16a] sm:$0xff]
      %v2039 = vld [vmem:[%s510 + $0x172] sm:$0xff]
      %v2040 = vpack.c.bf16 %v2009, %v2008
      %v2041 = vpack.c.bf16 %v2011, %v2010
      %v2042 = vpack.c.bf16 %v2013, %v2012
      %v2043 = vpack.c.bf16 %v2015, %v2014
      %v2044 = vpack.c.bf16 %v2017, %v2016
      %v2045 = vpack.c.bf16 %v2019, %v2018
      %v2046 = vpack.c.bf16 %v2021, %v2020
      %v2047 = vpack.c.bf16 %v2023, %v2022
      %v2048 = vpack.c.bf16 %v2025, %v2024
      %v2049 = vpack.c.bf16 %v2027, %v2026
      %v2050 = vpack.c.bf16 %v2029, %v2028
      %v2051 = vpack.c.bf16 %v2031, %v2030
      %v2052 = vpack.c.bf16 %v2033, %v2032
      %v2053 = vpack.c.bf16 %v2035, %v2034
      %v2054 = vpack.c.bf16 %v2037, %v2036
      %v2055 = vpack.c.bf16 %v2039, %v2038
      %s2056 = scalar_lea.vmem %s3, 80
      %v2057 = vld [vmem:[%s2056] sm:$0xf]
      %v2058 = vld [vmem:[%s2056 + $0x4] sm:$0xf]
      %v2059 = vld [vmem:[%s2056 + $0x8] sm:$0xf]
      %v2060 = vld [vmem:[%s2056 + $0xc] sm:$0xf]
      %v2065 = vunpack.c.l.b16 %v2057
      %v2066 = vunpack.c.l.b16 %v2058
      %v2067 = vunpack.c.l.b16 %v2059
      %v2068 = vunpack.c.l.b16 %v2060
      %v2069 = vpack.c.b16 %v2066, %v2065
      %v2070 = vpack.c.b16 %v2068, %v2067
      %v2074 = vsel %vm280, %v2040, 0
      %v2077 = vsel %vm280, %v2041, 0
      %v2080 = vsel %vm280, %v2042, 0
      %v2083 = vsel %vm280, %v2043, 0
      %v2086 = vsel %vm280, %v2044, 0
      %v2089 = vsel %vm280, %v2045, 0
      %v2092 = vsel %vm280, %v2046, 0
      %v2095 = vsel %vm280, %v2047, 0
      %v2098 = vsel %vm280, %v2048, 0
      %v2101 = vsel %vm280, %v2049, 0
      %v2104 = vsel %vm280, %v2050, 0
      %v2107 = vsel %vm280, %v2051, 0
      %v2110 = vsel %vm280, %v2052, 0
      %v2113 = vsel %vm280, %v2053, 0
      %v2116 = vsel %vm280, %v2054, 0
      %v2119 = vsel %vm280, %v2055, 0
      %2121 = vmatprep.subr.bf16.mxu0 0
      %2122 = vmatpush1.bf16.msra.mxu0 %v2069
      %2123 = vmatprep.subr.bf16.mxu0 0
      %2124 = vmatpush1.bf16.msra.mxu0 %v2070
      %2125 = vmatprep.subr.bf16.mxu0 0
      %2126 = vmatpush1.bf16.msra.mxu0 0
      %2127 = vmatprep.subr.bf16.mxu0 0
      %2128 = vmatpush1.bf16.msra.mxu0 0
      %2129 = vmatprep.subr.bf16.mxu0 0
      %2130 = vmatpush1.bf16.msra.mxu0 0
      %2131 = vmatprep.subr.bf16.mxu0 0
      %2132 = vmatpush1.bf16.msra.mxu0 0
      %2133 = vmatprep.subr.bf16.mxu0 0
      %2134 = vmatpush1.bf16.msra.mxu0 0
      %2135 = vmatprep.subr.bf16.mxu0 0
      %2136 = vmatpush1.bf16.msra.mxu0 0
      %2137 = vmatprep.subr.bf16.mxu0 0
      %2138 = vmatpush1.bf16.msra.mxu0 0
      %2139 = vmatprep.subr.bf16.mxu0 0
      %2140 = vmatpush1.bf16.msra.mxu0 0
      %2141 = vmatprep.subr.bf16.mxu0 0
      %2142 = vmatpush1.bf16.msra.mxu0 0
      %2143 = vmatprep.subr.bf16.mxu0 0
      %2144 = vmatpush1.bf16.msra.mxu0 0
      %2145 = vmatprep.subr.bf16.mxu0 0
      %2146 = vmatpush1.bf16.msra.mxu0 0
      %2147 = vmatprep.subr.bf16.mxu0 0
      %2148 = vmatpush1.bf16.msra.mxu0 0
      %2149 = vmatprep.subr.bf16.mxu0 0
      %2150 = vmatpush1.bf16.msra.mxu0 0
      %2151 = vmatprep.subr.bf16.mxu0 0
      %2152 = vmatpush1.bf16.msra.mxu0 0
      %2153 = vmatprep.mubr.bf16.mxu0 0
      %2154 = vmatmul.mubr.bf16.gmra.mrb[0].mxu0 %v2074
      %v2155 = vpop.f32.mrb[0].mxu0
      %v2156 = vadd.f32 0.0, %v2155
      %v2157 = vpop.f32.mrb[0].mxu0
      %v2158 = vpop.f32.mrb[0].mxu0
      %v2159 = vadd.f32 0.0, %v2158
      %v2160 = vpop.f32.mrb[0].mxu0
      %2161 = vmatprep.mubr.bf16.mxu0 0
      %2162 = vmatmul.mubr.bf16.gmra.mrb[0].mxu0 %v2077
      %v2163 = vpop.f32.mrb[0].mxu0
      %v2164 = vadd.f32 0.0, %v2163
      %v2165 = vpop.f32.mrb[0].mxu0
      %v2166 = vpop.f32.mrb[0].mxu0
      %v2167 = vadd.f32 0.0, %v2166
      %v2168 = vpop.f32.mrb[0].mxu0
      %2169 = vmatprep.mubr.bf16.mxu0 0
      %2170 = vmatmul.mubr.bf16.gmra.mrb[0].mxu0 %v2080
      %v2171 = vpop.f32.mrb[0].mxu0
      %v2172 = vadd.f32 0.0, %v2171
      %v2173 = vpop.f32.mrb[0].mxu0
      %v2174 = vpop.f32.mrb[0].mxu0
      %v2175 = vadd.f32 0.0, %v2174
      %v2176 = vpop.f32.mrb[0].mxu0
      %2177 = vmatprep.mubr.bf16.mxu0 0
      %2178 = vmatmul.mubr.bf16.gmra.mrb[0].mxu0 %v2083
      %v2179 = vpop.f32.mrb[0].mxu0
      %v2180 = vadd.f32 0.0, %v2179
      %v2181 = vpop.f32.mrb[0].mxu0
      %v2182 = vpop.f32.mrb[0].mxu0
      %v2183 = vadd.f32 0.0, %v2182
      %v2184 = vpop.f32.mrb[0].mxu0
      %2185 = vmatprep.mubr.bf16.mxu0 0
      %2186 = vmatmul.mubr.bf16.gmra.mrb[0].mxu0 %v2086
      %v2187 = vpop.f32.mrb[0].mxu0
      %v2188 = vadd.f32 0.0, %v2187
      %v2189 = vpop.f32.mrb[0].mxu0
      %v2190 = vpop.f32.mrb[0].mxu0
      %v2191 = vadd.f32 0.0, %v2190
      %v2192 = vpop.f32.mrb[0].mxu0
      %2193 = vmatprep.mubr.bf16.mxu0 0
      %2194 = vmatmul.mubr.bf16.gmra.mrb[0].mxu0 %v2089
      %v2195 = vpop.f32.mrb[0].mxu0
      %v2196 = vadd.f32 0.0, %v2195
      %v2197 = vpop.f32.mrb[0].mxu0
      %v2198 = vpop.f32.mrb[0].mxu0
      %v2199 = vadd.f32 0.0, %v2198
      %v2200 = vpop.f32.mrb[0].mxu0
      %2201 = vmatprep.mubr.bf16.mxu0 0
      %2202 = vmatmul.mubr.bf16.gmra.mrb[0].mxu0 %v2092
      %v2203 = vpop.f32.mrb[0].mxu0
      %v2204 = vadd.f32 0.0, %v2203
      %v2205 = vpop.f32.mrb[0].mxu0
      %v2206 = vpop.f32.mrb[0].mxu0
      %v2207 = vadd.f32 0.0, %v2206
      %v2208 = vpop.f32.mrb[0].mxu0
      %2209 = vmatprep.mubr.bf16.mxu0 0
      %2210 = vmatmul.mubr.bf16.gmra.mrb[0].mxu0 %v2095
      %v2211 = vpop.f32.mrb[0].mxu0
      %v2212 = vadd.f32 0.0, %v2211
      %v2213 = vpop.f32.mrb[0].mxu0
      %v2214 = vpop.f32.mrb[0].mxu0
      %v2215 = vadd.f32 0.0, %v2214
      %v2216 = vpop.f32.mrb[0].mxu0
      %2217 = vmatprep.mubr.bf16.mxu0 0
      %2218 = vmatmul.mubr.bf16.gmra.mrb[0].mxu0 %v2098
      %v2219 = vpop.f32.mrb[0].mxu0
      %v2220 = vadd.f32 0.0, %v2219
      %v2221 = vpop.f32.mrb[0].mxu0
      %v2222 = vpop.f32.mrb[0].mxu0
      %v2223 = vadd.f32 0.0, %v2222
      %v2224 = vpop.f32.mrb[0].mxu0
      %2225 = vmatprep.mubr.bf16.mxu0 0
      %2226 = vmatmul.mubr.bf16.gmra.mrb[0].mxu0 %v2101
      %v2227 = vpop.f32.mrb[0].mxu0
      %v2228 = vadd.f32 0.0, %v2227
      %v2229 = vpop.f32.mrb[0].mxu0
      %v2230 = vpop.f32.mrb[0].mxu0
      %v2231 = vadd.f32 0.0, %v2230
      %v2232 = vpop.f32.mrb[0].mxu0
      %2233 = vmatprep.mubr.bf16.mxu0 0
      %2234 = vmatmul.mubr.bf16.gmra.mrb[0].mxu0 %v2104
      %v2235 = vpop.f32.mrb[0].mxu0
      %v2236 = vadd.f32 0.0, %v2235
      %v2237 = vpop.f32.mrb[0].mxu0
      %v2238 = vpop.f32.mrb[0].mxu0
      %v2239 = vadd.f32 0.0, %v2238
      %v2240 = vpop.f32.mrb[0].mxu0
      %2241 = vmatprep.mubr.bf16.mxu0 0
      %2242 = vmatmul.mubr.bf16.gmra.mrb[0].mxu0 %v2107
      %v2243 = vpop.f32.mrb[0].mxu0
      %v2244 = vadd.f32 0.0, %v2243
      %v2245 = vpop.f32.mrb[0].mxu0
      %v2246 = vpop.f32.mrb[0].mxu0
      %v2247 = vadd.f32 0.0, %v2246
      %v2248 = vpop.f32.mrb[0].mxu0
      %2249 = vmatprep.mubr.bf16.mxu0 0
      %2250 = vmatmul.mubr.bf16.gmra.mrb[0].mxu0 %v2110
      %v2251 = vpop.f32.mrb[0].mxu0
      %v2252 = vadd.f32 0.0, %v2251
      %v2253 = vpop.f32.mrb[0].mxu0
      %v2254 = vpop.f32.mrb[0].mxu0
      %v2255 = vadd.f32 0.0, %v2254
      %v2256 = vpop.f32.mrb[0].mxu0
      %2257 = vmatprep.mubr.bf16.mxu0 0
      %2258 = vmatmul.mubr.bf16.gmra.mrb[0].mxu0 %v2113
      %v2259 = vpop.f32.mrb[0].mxu0
      %v2260 = vadd.f32 0.0, %v2259
      %v2261 = vpop.f32.mrb[0].mxu0
      %v2262 = vpop.f32.mrb[0].mxu0
      %v2263 = vadd.f32 0.0, %v2262
      %v2264 = vpop.f32.mrb[0].mxu0
      %2265 = vmatprep.mubr.bf16.mxu0 0
      %2266 = vmatmul.mubr.bf16.gmra.mrb[0].mxu0 %v2116
      %v2267 = vpop.f32.mrb[0].mxu0
      %v2268 = vadd.f32 0.0, %v2267
      %v2269 = vpop.f32.mrb[0].mxu0
      %v2270 = vpop.f32.mrb[0].mxu0
      %v2271 = vadd.f32 0.0, %v2270
      %v2272 = vpop.f32.mrb[0].mxu0
      %2273 = vmatprep.mubr.bf16.mxu0 0
      %2274 = vmatmul.mubr.bf16.gmra.mrb[0].mxu0 %v2119
      %v2275 = vpop.f32.mrb[0].mxu0
      %v2276 = vadd.f32 0.0, %v2275
      %v2277 = vpop.f32.mrb[0].mxu0
      %v2278 = vpop.f32.mrb[0].mxu0
      %v2279 = vadd.f32 0.0, %v2278
      %v2280 = vpop.f32.mrb[0].mxu0
      %2281 = vdwg.mxu0
      %v2282 = vadd.f32 %v1976, %v2156
      %v2283 = vadd.f32 %v1977, %v2159
      %v2284 = vadd.f32 %v1978, %v2164
      %v2285 = vadd.f32 %v1979, %v2167
      %v2286 = vadd.f32 %v1980, %v2172
      %v2287 = vadd.f32 %v1981, %v2175
      %v2288 = vadd.f32 %v1982, %v2180
      %v2289 = vadd.f32 %v1983, %v2183
      %v2290 = vadd.f32 %v1984, %v2188
      %v2291 = vadd.f32 %v1985, %v2191
      %v2292 = vadd.f32 %v1986, %v2196
      %v2293 = vadd.f32 %v1987, %v2199
      %v2294 = vadd.f32 %v1988, %v2204
      %v2295 = vadd.f32 %v1989, %v2207
      %v2296 = vadd.f32 %v1990, %v2212
      %v2297 = vadd.f32 %v1991, %v2215
      %v2298 = vadd.f32 %v1992, %v2220
      %v2299 = vadd.f32 %v1993, %v2223
      %v2300 = vadd.f32 %v1994, %v2228
      %v2301 = vadd.f32 %v1995, %v2231
      %v2302 = vadd.f32 %v1996, %v2236
      %v2303 = vadd.f32 %v1997, %v2239
      %v2304 = vadd.f32 %v1998, %v2244
      %v2305 = vadd.f32 %v1999, %v2247
      %v2306 = vadd.f32 %v2000, %v2252
      %v2307 = vadd.f32 %v2001, %v2255
      %v2308 = vadd.f32 %v2002, %v2260
      %v2309 = vadd.f32 %v2003, %v2263
      %v2310 = vadd.f32 %v2004, %v2268
      %v2311 = vadd.f32 %v2005, %v2271
      %v2312 = vadd.f32 %v2006, %v2276
      %v2313 = vadd.f32 %v2007, %v2279
      %s2314 = scalar_lea.vmem [#allocation2], 48
      %v2315 = vld [vmem:[%s2314] sm:$0xff]
      %v2316 = vld [vmem:[%s2314 + $0x8] sm:$0xff]
      %v2317 = vld [vmem:[%s2314 + $0x18] sm:$0xff]
      %v2318 = vld [vmem:[%s2314 + $0x20] sm:$0xff]
      %v2319 = vld [vmem:[%s2314 + $0x30] sm:$0xff]
      %v2320 = vld [vmem:[%s2314 + $0x38] sm:$0xff]
      %v2321 = vld [vmem:[%s2314 + $0x48] sm:$0xff]
      %v2322 = vld [vmem:[%s2314 + $0x50] sm:$0xff]
      %v2323 = vld [vmem:[%s2314 + $0x60] sm:$0xff]
      %v2324 = vld [vmem:[%s2314 + $0x68] sm:$0xff]
      %v2325 = vld [vmem:[%s2314 + $0x78] sm:$0xff]
      %v2326 = vld [vmem:[%s2314 + $0x80] sm:$0xff]
      %v2327 = vld [vmem:[%s2314 + $0x90] sm:$0xff]
      %v2328 = vld [vmem:[%s2314 + $0x98] sm:$0xff]
      %v2329 = vld [vmem:[%s2314 + $0xa8] sm:$0xff]
      %v2330 = vld [vmem:[%s2314 + $0xb0] sm:$0xff]
      %v2331 = vld [vmem:[%s2314 + $0xc0] sm:$0xff]
      %v2332 = vld [vmem:[%s2314 + $0xc8] sm:$0xff]
      %v2333 = vld [vmem:[%s2314 + $0xd8] sm:$0xff]
      %v2334 = vld [vmem:[%s2314 + $0xe0] sm:$0xff]
      %v2335 = vld [vmem:[%s2314 + $0xf0] sm:$0xff]
      %v2336 = vld [vmem:[%s2314 + $0xf8] sm:$0xff]
      %v2337 = vld [vmem:[%s2314 + $0x108] sm:$0xff]
      %v2338 = vld [vmem:[%s2314 + $0x110] sm:$0xff]
      %v2339 = vld [vmem:[%s2314 + $0x120] sm:$0xff]
      %v2340 = vld [vmem:[%s2314 + $0x128] sm:$0xff]
      %v2341 = vld [vmem:[%s2314 + $0x138] sm:$0xff]
      %v2342 = vld [vmem:[%s2314 + $0x140] sm:$0xff]
      %v2343 = vld [vmem:[%s2314 + $0x150] sm:$0xff]
      %v2344 = vld [vmem:[%s2314 + $0x158] sm:$0xff]
      %v2345 = vld [vmem:[%s2314 + $0x168] sm:$0xff]
      %v2346 = vld [vmem:[%s2314 + $0x170] sm:$0xff]
      %v2347 = vpack.c.bf16 %v2316, %v2315
      %v2348 = vpack.c.bf16 %v2318, %v2317
      %v2349 = vpack.c.bf16 %v2320, %v2319
      %v2350 = vpack.c.bf16 %v2322, %v2321
      %v2351 = vpack.c.bf16 %v2324, %v2323
      %v2352 = vpack.c.bf16 %v2326, %v2325
      %v2353 = vpack.c.bf16 %v2328, %v2327
      %v2354 = vpack.c.bf16 %v2330, %v2329
      %v2355 = vpack.c.bf16 %v2332, %v2331
      %v2356 = vpack.c.bf16 %v2334, %v2333
      %v2357 = vpack.c.bf16 %v2336, %v2335
      %v2358 = vpack.c.bf16 %v2338, %v2337
      %v2359 = vpack.c.bf16 %v2340, %v2339
      %v2360 = vpack.c.bf16 %v2342, %v2341
      %v2361 = vpack.c.bf16 %v2344, %v2343
      %v2362 = vpack.c.bf16 %v2346, %v2345
      %s2363 = scalar_lea.vmem %s3, 96
      %v2364 = vld [vmem:[%s2363] sm:$0xf]
      %v2365 = vld [vmem:[%s2363 + $0x4] sm:$0xf]
      %v2366 = vld [vmem:[%s2363 + $0x8] sm:$0xf]
      %v2367 = vld [vmem:[%s2363 + $0xc] sm:$0xf]
      %v2372 = vunpack.c.l.b16 %v2364
      %v2373 = vunpack.c.l.b16 %v2365
      %v2374 = vunpack.c.l.b16 %v2366
      %v2375 = vunpack.c.l.b16 %v2367
      %v2376 = vpack.c.b16 %v2373, %v2372
      %v2377 = vpack.c.b16 %v2375, %v2374
      %v2381 = vsel %vm280, %v2347, 0
      %v2384 = vsel %vm280, %v2348, 0
      %v2387 = vsel %vm280, %v2349, 0
      %v2390 = vsel %vm280, %v2350, 0
      %v2393 = vsel %vm280, %v2351, 0
      %v2396 = vsel %vm280, %v2352, 0
      %v2399 = vsel %vm280, %v2353, 0
      %v2402 = vsel %vm280, %v2354, 0
      %v2405 = vsel %vm280, %v2355, 0
      %v2408 = vsel %vm280, %v2356, 0
      %v2411 = vsel %vm280, %v2357, 0
      %v2414 = vsel %vm280, %v2358, 0
      %v2417 = vsel %vm280, %v2359, 0
      %v2420 = vsel %vm280, %v2360, 0
      %v2423 = vsel %vm280, %v2361, 0
      %v2426 = vsel %vm280, %v2362, 0
      %2428 = vmatprep.subr.bf16.mxu0 0
      %2429 = vmatpush1.bf16.msra.mxu0 %v2376
      %2430 = vmatprep.subr.bf16.mxu0 0
      %2431 = vmatpush1.bf16.msra.mxu0 %v2377
      %2432 = vmatprep.subr.bf16.mxu0 0
      %2433 = vmatpush1.bf16.msra.mxu0 0
      %2434 = vmatprep.subr.bf16.mxu0 0
      %2435 = vmatpush1.bf16.msra.mxu0 0
      %2436 = vmatprep.subr.bf16.mxu0 0
      %2437 = vmatpush1.bf16.msra.mxu0 0
      %2438 = vmatprep.subr.bf16.mxu0 0
      %2439 = vmatpush1.bf16.msra.mxu0 0
      %2440 = vmatprep.subr.bf16.mxu0 0
      %2441 = vmatpush1.bf16.msra.mxu0 0
      %2442 = vmatprep.subr.bf16.mxu0 0
      %2443 = vmatpush1.bf16.msra.mxu0 0
      %2444 = vmatprep.subr.bf16.mxu0 0
      %2445 = vmatpush1.bf16.msra.mxu0 0
      %2446 = vmatprep.subr.bf16.mxu0 0
      %2447 = vmatpush1.bf16.msra.mxu0 0
      %2448 = vmatprep.subr.bf16.mxu0 0
      %2449 = vmatpush1.bf16.msra.mxu0 0
      %2450 = vmatprep.subr.bf16.mxu0 0
      %2451 = vmatpush1.bf16.msra.mxu0 0
      %2452 = vmatprep.subr.bf16.mxu0 0
      %2453 = vmatpush1.bf16.msra.mxu0 0
      %2454 = vmatprep.subr.bf16.mxu0 0
      %2455 = vmatpush1.bf16.msra.mxu0 0
      %2456 = vmatprep.subr.bf16.mxu0 0
      %2457 = vmatpush1.bf16.msra.mxu0 0
      %2458 = vmatprep.subr.bf16.mxu0 0
      %2459 = vmatpush1.bf16.msra.mxu0 0
      %2460 = vmatprep.mubr.bf16.mxu0 0
      %2461 = vmatmul.mubr.bf16.gmra.mrb[0].mxu0 %v2381
      %v2462 = vpop.f32.mrb[0].mxu0
      %v2463 = vadd.f32 0.0, %v2462
      %v2464 = vpop.f32.mrb[0].mxu0
      %v2465 = vpop.f32.mrb[0].mxu0
      %v2466 = vadd.f32 0.0, %v2465
      %v2467 = vpop.f32.mrb[0].mxu0
      %2468 = vmatprep.mubr.bf16.mxu0 0
      %2469 = vmatmul.mubr.bf16.gmra.mrb[0].mxu0 %v2384
      %v2470 = vpop.f32.mrb[0].mxu0
      %v2471 = vadd.f32 0.0, %v2470
      %v2472 = vpop.f32.mrb[0].mxu0
      %v2473 = vpop.f32.mrb[0].mxu0
      %v2474 = vadd.f32 0.0, %v2473
      %v2475 = vpop.f32.mrb[0].mxu0
      %2476 = vmatprep.mubr.bf16.mxu0 0
      %2477 = vmatmul.mubr.bf16.gmra.mrb[0].mxu0 %v2387
      %v2478 = vpop.f32.mrb[0].mxu0
      %v2479 = vadd.f32 0.0, %v2478
      %v2480 = vpop.f32.mrb[0].mxu0
      %v2481 = vpop.f32.mrb[0].mxu0
      %v2482 = vadd.f32 0.0, %v2481
      %v2483 = vpop.f32.mrb[0].mxu0
      %2484 = vmatprep.mubr.bf16.mxu0 0
      %2485 = vmatmul.mubr.bf16.gmra.mrb[0].mxu0 %v2390
      %v2486 = vpop.f32.mrb[0].mxu0
      %v2487 = vadd.f32 0.0, %v2486
      %v2488 = vpop.f32.mrb[0].mxu0
      %v2489 = vpop.f32.mrb[0].mxu0
      %v2490 = vadd.f32 0.0, %v2489
      %v2491 = vpop.f32.mrb[0].mxu0
      %2492 = vmatprep.mubr.bf16.mxu0 0
      %2493 = vmatmul.mubr.bf16.gmra.mrb[0].mxu0 %v2393
      %v2494 = vpop.f32.mrb[0].mxu0
      %v2495 = vadd.f32 0.0, %v2494
      %v2496 = vpop.f32.mrb[0].mxu0
      %v2497 = vpop.f32.mrb[0].mxu0
      %v2498 = vadd.f32 0.0, %v2497
      %v2499 = vpop.f32.mrb[0].mxu0
      %2500 = vmatprep.mubr.bf16.mxu0 0
      %2501 = vmatmul.mubr.bf16.gmra.mrb[0].mxu0 %v2396
      %v2502 = vpop.f32.mrb[0].mxu0
      %v2503 = vadd.f32 0.0, %v2502
      %v2504 = vpop.f32.mrb[0].mxu0
      %v2505 = vpop.f32.mrb[0].mxu0
      %v2506 = vadd.f32 0.0, %v2505
      %v2507 = vpop.f32.mrb[0].mxu0
      %2508 = vmatprep.mubr.bf16.mxu0 0
      %2509 = vmatmul.mubr.bf16.gmra.mrb[0].mxu0 %v2399
      %v2510 = vpop.f32.mrb[0].mxu0
      %v2511 = vadd.f32 0.0, %v2510
      %v2512 = vpop.f32.mrb[0].mxu0
      %v2513 = vpop.f32.mrb[0].mxu0
      %v2514 = vadd.f32 0.0, %v2513
      %v2515 = vpop.f32.mrb[0].mxu0
      %2516 = vmatprep.mubr.bf16.mxu0 0
      %2517 = vmatmul.mubr.bf16.gmra.mrb[0].mxu0 %v2402
      %v2518 = vpop.f32.mrb[0].mxu0
      %v2519 = vadd.f32 0.0, %v2518
      %v2520 = vpop.f32.mrb[0].mxu0
      %v2521 = vpop.f32.mrb[0].mxu0
      %v2522 = vadd.f32 0.0, %v2521
      %v2523 = vpop.f32.mrb[0].mxu0
      %2524 = vmatprep.mubr.bf16.mxu0 0
      %2525 = vmatmul.mubr.bf16.gmra.mrb[0].mxu0 %v2405
      %v2526 = vpop.f32.mrb[0].mxu0
      %v2527 = vadd.f32 0.0, %v2526
      %v2528 = vpop.f32.mrb[0].mxu0
      %v2529 = vpop.f32.mrb[0].mxu0
      %v2530 = vadd.f32 0.0, %v2529
      %v2531 = vpop.f32.mrb[0].mxu0
      %2532 = vmatprep.mubr.bf16.mxu0 0
      %2533 = vmatmul.mubr.bf16.gmra.mrb[0].mxu0 %v2408
      %v2534 = vpop.f32.mrb[0].mxu0
      %v2535 = vadd.f32 0.0, %v2534
      %v2536 = vpop.f32.mrb[0].mxu0
      %v2537 = vpop.f32.mrb[0].mxu0
      %v2538 = vadd.f32 0.0, %v2537
      %v2539 = vpop.f32.mrb[0].mxu0
      %2540 = vmatprep.mubr.bf16.mxu0 0
      %2541 = vmatmul.mubr.bf16.gmra.mrb[0].mxu0 %v2411
      %v2542 = vpop.f32.mrb[0].mxu0
      %v2543 = vadd.f32 0.0, %v2542
      %v2544 = vpop.f32.mrb[0].mxu0
      %v2545 = vpop.f32.mrb[0].mxu0
      %v2546 = vadd.f32 0.0, %v2545
      %v2547 = vpop.f32.mrb[0].mxu0
      %2548 = vmatprep.mubr.bf16.mxu0 0
      %2549 = vmatmul.mubr.bf16.gmra.mrb[0].mxu0 %v2414
      %v2550 = vpop.f32.mrb[0].mxu0
      %v2551 = vadd.f32 0.0, %v2550
      %v2552 = vpop.f32.mrb[0].mxu0
      %v2553 = vpop.f32.mrb[0].mxu0
      %v2554 = vadd.f32 0.0, %v2553
      %v2555 = vpop.f32.mrb[0].mxu0
      %2556 = vmatprep.mubr.bf16.mxu0 0
      %2557 = vmatmul.mubr.bf16.gmra.mrb[0].mxu0 %v2417
      %v2558 = vpop.f32.mrb[0].mxu0
      %v2559 = vadd.f32 0.0, %v2558
      %v2560 = vpop.f32.mrb[0].mxu0
      %v2561 = vpop.f32.mrb[0].mxu0
      %v2562 = vadd.f32 0.0, %v2561
      %v2563 = vpop.f32.mrb[0].mxu0
      %2564 = vmatprep.mubr.bf16.mxu0 0
      %2565 = vmatmul.mubr.bf16.gmra.mrb[0].mxu0 %v2420
      %v2566 = vpop.f32.mrb[0].mxu0
      %v2567 = vadd.f32 0.0, %v2566
      %v2568 = vpop.f32.mrb[0].mxu0
      %v2569 = vpop.f32.mrb[0].mxu0
      %v2570 = vadd.f32 0.0, %v2569
      %v2571 = vpop.f32.mrb[0].mxu0
      %2572 = vmatprep.mubr.bf16.mxu0 0
      %2573 = vmatmul.mubr.bf16.gmra.mrb[0].mxu0 %v2423
      %v2574 = vpop.f32.mrb[0].mxu0
      %v2575 = vadd.f32 0.0, %v2574
      %v2576 = vpop.f32.mrb[0].mxu0
      %v2577 = vpop.f32.mrb[0].mxu0
      %v2578 = vadd.f32 0.0, %v2577
      %v2579 = vpop.f32.mrb[0].mxu0
      %2580 = vmatprep.mubr.bf16.mxu0 0
      %2581 = vmatmul.mubr.bf16.gmra.mrb[0].mxu0 %v2426
      %v2582 = vpop.f32.mrb[0].mxu0
      %v2583 = vadd.f32 0.0, %v2582
      %v2584 = vpop.f32.mrb[0].mxu0
      %v2585 = vpop.f32.mrb[0].mxu0
      %v2586 = vadd.f32 0.0, %v2585
      %v2587 = vpop.f32.mrb[0].mxu0
      %2588 = vdwg.mxu0
      %v2589 = vadd.f32 %v2282, %v2463
      %v2590 = vadd.f32 %v2283, %v2466
      %v2591 = vadd.f32 %v2284, %v2471
      %v2592 = vadd.f32 %v2285, %v2474
      %v2593 = vadd.f32 %v2286, %v2479
      %v2594 = vadd.f32 %v2287, %v2482
      %v2595 = vadd.f32 %v2288, %v2487
      %v2596 = vadd.f32 %v2289, %v2490
      %v2597 = vadd.f32 %v2290, %v2495
      %v2598 = vadd.f32 %v2291, %v2498
      %v2599 = vadd.f32 %v2292, %v2503
      %v2600 = vadd.f32 %v2293, %v2506
      %v2601 = vadd.f32 %v2294, %v2511
      %v2602 = vadd.f32 %v2295, %v2514
      %v2603 = vadd.f32 %v2296, %v2519
      %v2604 = vadd.f32 %v2297, %v2522
      %v2605 = vadd.f32 %v2298, %v2527
      %v2606 = vadd.f32 %v2299, %v2530
      %v2607 = vadd.f32 %v2300, %v2535
      %v2608 = vadd.f32 %v2301, %v2538
      %v2609 = vadd.f32 %v2302, %v2543
      %v2610 = vadd.f32 %v2303, %v2546
      %v2611 = vadd.f32 %v2304, %v2551
      %v2612 = vadd.f32 %v2305, %v2554
      %v2613 = vadd.f32 %v2306, %v2559
      %v2614 = vadd.f32 %v2307, %v2562
      %v2615 = vadd.f32 %v2308, %v2567
      %v2616 = vadd.f32 %v2309, %v2570
      %v2617 = vadd.f32 %v2310, %v2575
      %v2618 = vadd.f32 %v2311, %v2578
      %v2619 = vadd.f32 %v2312, %v2583
      %v2620 = vadd.f32 %v2313, %v2586
      %v2621 = vld [vmem:[%s2314 + $0x1] sm:$0xff]
      %v2622 = vld [vmem:[%s2314 + $0x9] sm:$0xff]
      %v2623 = vld [vmem:[%s2314 + $0x19] sm:$0xff]
      %v2624 = vld [vmem:[%s2314 + $0x21] sm:$0xff]
      %v2625 = vld [vmem:[%s2314 + $0x31] sm:$0xff]
      %v2626 = vld [vmem:[%s2314 + $0x39] sm:$0xff]
      %v2627 = vld [vmem:[%s2314 + $0x49] sm:$0xff]
      %v2628 = vld [vmem:[%s2314 + $0x51] sm:$0xff]
      %v2629 = vld [vmem:[%s2314 + $0x61] sm:$0xff]
      %v2630 = vld [vmem:[%s2314 + $0x69] sm:$0xff]
      %v2631 = vld [vmem:[%s2314 + $0x79] sm:$0xff]
      %v2632 = vld [vmem:[%s2314 + $0x81] sm:$0xff]
      %v2633 = vld [vmem:[%s2314 + $0x91] sm:$0xff]
      %v2634 = vld [vmem:[%s2314 + $0x99] sm:$0xff]
      %v2635 = vld [vmem:[%s2314 + $0xa9] sm:$0xff]
      %v2636 = vld [vmem:[%s2314 + $0xb1] sm:$0xff]
      %v2637 = vld [vmem:[%s2314 + $0xc1] sm:$0xff]
      %v2638 = vld [vmem:[%s2314 + $0xc9] sm:$0xff]
      %v2639 = vld [vmem:[%s2314 + $0xd9] sm:$0xff]
      %v2640 = vld [vmem:[%s2314 + $0xe1] sm:$0xff]
      %v2641 = vld [vmem:[%s2314 + $0xf1] sm:$0xff]
      %v2642 = vld [vmem:[%s2314 + $0xf9] sm:$0xff]
      %v2643 = vld [vmem:[%s2314 + $0x109] sm:$0xff]
      %v2644 = vld [vmem:[%s2314 + $0x111] sm:$0xff]
      %v2645 = vld [vmem:[%s2314 + $0x121] sm:$0xff]
      %v2646 = vld [vmem:[%s2314 + $0x129] sm:$0xff]
      %v2647 = vld [vmem:[%s2314 + $0x139] sm:$0xff]
      %v2648 = vld [vmem:[%s2314 + $0x141] sm:$0xff]
      %v2649 = vld [vmem:[%s2314 + $0x151] sm:$0xff]
      %v2650 = vld [vmem:[%s2314 + $0x159] sm:$0xff]
      %v2651 = vld [vmem:[%s2314 + $0x169] sm:$0xff]
      %v2652 = vld [vmem:[%s2314 + $0x171] sm:$0xff]
      %v2653 = vpack.c.bf16 %v2622, %v2621
      %v2654 = vpack.c.bf16 %v2624, %v2623
      %v2655 = vpack.c.bf16 %v2626, %v2625
      %v2656 = vpack.c.bf16 %v2628, %v2627
      %v2657 = vpack.c.bf16 %v2630, %v2629
      %v2658 = vpack.c.bf16 %v2632, %v2631
      %v2659 = vpack.c.bf16 %v2634, %v2633
      %v2660 = vpack.c.bf16 %v2636, %v2635
      %v2661 = vpack.c.bf16 %v2638, %v2637
      %v2662 = vpack.c.bf16 %v2640, %v2639
      %v2663 = vpack.c.bf16 %v2642, %v2641
      %v2664 = vpack.c.bf16 %v2644, %v2643
      %v2665 = vpack.c.bf16 %v2646, %v2645
      %v2666 = vpack.c.bf16 %v2648, %v2647
      %v2667 = vpack.c.bf16 %v2650, %v2649
      %v2668 = vpack.c.bf16 %v2652, %v2651
      %s2669 = scalar_lea.vmem %s3, 112
      %v2670 = vld [vmem:[%s2669] sm:$0xf]
      %v2671 = vld [vmem:[%s2669 + $0x4] sm:$0xf]
      %v2672 = vld [vmem:[%s2669 + $0x8] sm:$0xf]
      %v2673 = vld [vmem:[%s2669 + $0xc] sm:$0xf]
      %v2678 = vunpack.c.l.b16 %v2670
      %v2679 = vunpack.c.l.b16 %v2671
      %v2680 = vunpack.c.l.b16 %v2672
      %v2681 = vunpack.c.l.b16 %v2673
      %v2682 = vpack.c.b16 %v2679, %v2678
      %v2683 = vpack.c.b16 %v2681, %v2680
      %v2687 = vsel %vm280, %v2653, 0
      %v2690 = vsel %vm280, %v2654, 0
      %v2693 = vsel %vm280, %v2655, 0
      %v2696 = vsel %vm280, %v2656, 0
      %v2699 = vsel %vm280, %v2657, 0
      %v2702 = vsel %vm280, %v2658, 0
      %v2705 = vsel %vm280, %v2659, 0
      %v2708 = vsel %vm280, %v2660, 0
      %v2711 = vsel %vm280, %v2661, 0
      %v2714 = vsel %vm280, %v2662, 0
      %v2717 = vsel %vm280, %v2663, 0
      %v2720 = vsel %vm280, %v2664, 0
      %v2723 = vsel %vm280, %v2665, 0
      %v2726 = vsel %vm280, %v2666, 0
      %v2729 = vsel %vm280, %v2667, 0
      %v2732 = vsel %vm280, %v2668, 0
      %2734 = vmatprep.subr.bf16.mxu0 0
      %2735 = vmatpush1.bf16.msra.mxu0 %v2682
      %2736 = vmatprep.subr.bf16.mxu0 0
      %2737 = vmatpush1.bf16.msra.mxu0 %v2683
      %2738 = vmatprep.subr.bf16.mxu0 0
      %2739 = vmatpush1.bf16.msra.mxu0 0
      %2740 = vmatprep.subr.bf16.mxu0 0
      %2741 = vmatpush1.bf16.msra.mxu0 0
      %2742 = vmatprep.subr.bf16.mxu0 0
      %2743 = vmatpush1.bf16.msra.mxu0 0
      %2744 = vmatprep.subr.bf16.mxu0 0
      %2745 = vmatpush1.bf16.msra.mxu0 0
      %2746 = vmatprep.subr.bf16.mxu0 0
      %2747 = vmatpush1.bf16.msra.mxu0 0
      %2748 = vmatprep.subr.bf16.mxu0 0
      %2749 = vmatpush1.bf16.msra.mxu0 0
      %2750 = vmatprep.subr.bf16.mxu0 0
      %2751 = vmatpush1.bf16.msra.mxu0 0
      %2752 = vmatprep.subr.bf16.mxu0 0
      %2753 = vmatpush1.bf16.msra.mxu0 0
      %2754 = vmatprep.subr.bf16.mxu0 0
      %2755 = vmatpush1.bf16.msra.mxu0 0
      %2756 = vmatprep.subr.bf16.mxu0 0
      %2757 = vmatpush1.bf16.msra.mxu0 0
      %2758 = vmatprep.subr.bf16.mxu0 0
      %2759 = vmatpush1.bf16.msra.mxu0 0
      %2760 = vmatprep.subr.bf16.mxu0 0
      %2761 = vmatpush1.bf16.msra.mxu0 0
      %2762 = vmatprep.subr.bf16.mxu0 0
      %2763 = vmatpush1.bf16.msra.mxu0 0
      %2764 = vmatprep.subr.bf16.mxu0 0
      %2765 = vmatpush1.bf16.msra.mxu0 0
      %2766 = vmatprep.mubr.bf16.mxu0 0
      %2767 = vmatmul.mubr.bf16.gmra.mrb[0].mxu0 %v2687
      %v2768 = vpop.f32.mrb[0].mxu0
      %v2769 = vadd.f32 0.0, %v2768
      %v2770 = vpop.f32.mrb[0].mxu0
      %v2771 = vpop.f32.mrb[0].mxu0
      %v2772 = vadd.f32 0.0, %v2771
      %v2773 = vpop.f32.mrb[0].mxu0
      %2774 = vmatprep.mubr.bf16.mxu0 0
      %2775 = vmatmul.mubr.bf16.gmra.mrb[0].mxu0 %v2690
      %v2776 = vpop.f32.mrb[0].mxu0
      %v2777 = vadd.f32 0.0, %v2776
      %v2778 = vpop.f32.mrb[0].mxu0
      %v2779 = vpop.f32.mrb[0].mxu0
      %v2780 = vadd.f32 0.0, %v2779
      %v2781 = vpop.f32.mrb[0].mxu0
      %2782 = vmatprep.mubr.bf16.mxu0 0
      %2783 = vmatmul.mubr.bf16.gmra.mrb[0].mxu0 %v2693
      %v2784 = vpop.f32.mrb[0].mxu0
      %v2785 = vadd.f32 0.0, %v2784
      %v2786 = vpop.f32.mrb[0].mxu0
      %v2787 = vpop.f32.mrb[0].mxu0
      %v2788 = vadd.f32 0.0, %v2787
      %v2789 = vpop.f32.mrb[0].mxu0
      %2790 = vmatprep.mubr.bf16.mxu0 0
      %2791 = vmatmul.mubr.bf16.gmra.mrb[0].mxu0 %v2696
      %v2792 = vpop.f32.mrb[0].mxu0
      %v2793 = vadd.f32 0.0, %v2792
      %v2794 = vpop.f32.mrb[0].mxu0
      %v2795 = vpop.f32.mrb[0].mxu0
      %v2796 = vadd.f32 0.0, %v2795
      %v2797 = vpop.f32.mrb[0].mxu0
      %2798 = vmatprep.mubr.bf16.mxu0 0
      %2799 = vmatmul.mubr.bf16.gmra.mrb[0].mxu0 %v2699
      %v2800 = vpop.f32.mrb[0].mxu0
      %v2801 = vadd.f32 0.0, %v2800
      %v2802 = vpop.f32.mrb[0].mxu0
      %v2803 = vpop.f32.mrb[0].mxu0
      %v2804 = vadd.f32 0.0, %v2803
      %v2805 = vpop.f32.mrb[0].mxu0
      %2806 = vmatprep.mubr.bf16.mxu0 0
      %2807 = vmatmul.mubr.bf16.gmra.mrb[0].mxu0 %v2702
      %v2808 = vpop.f32.mrb[0].mxu0
      %v2809 = vadd.f32 0.0, %v2808
      %v2810 = vpop.f32.mrb[0].mxu0
      %v2811 = vpop.f32.mrb[0].mxu0
      %v2812 = vadd.f32 0.0, %v2811
      %v2813 = vpop.f32.mrb[0].mxu0
      %2814 = vmatprep.mubr.bf16.mxu0 0
      %2815 = vmatmul.mubr.bf16.gmra.mrb[0].mxu0 %v2705
      %v2816 = vpop.f32.mrb[0].mxu0
      %v2817 = vadd.f32 0.0, %v2816
      %v2818 = vpop.f32.mrb[0].mxu0
      %v2819 = vpop.f32.mrb[0].mxu0
      %v2820 = vadd.f32 0.0, %v2819
      %v2821 = vpop.f32.mrb[0].mxu0
      %2822 = vmatprep.mubr.bf16.mxu0 0
      %2823 = vmatmul.mubr.bf16.gmra.mrb[0].mxu0 %v2708
      %v2824 = vpop.f32.mrb[0].mxu0
      %v2825 = vadd.f32 0.0, %v2824
      %v2826 = vpop.f32.mrb[0].mxu0
      %v2827 = vpop.f32.mrb[0].mxu0
      %v2828 = vadd.f32 0.0, %v2827
      %v2829 = vpop.f32.mrb[0].mxu0
      %2830 = vmatprep.mubr.bf16.mxu0 0
      %2831 = vmatmul.mubr.bf16.gmra.mrb[0].mxu0 %v2711
      %v2832 = vpop.f32.mrb[0].mxu0
      %v2833 = vadd.f32 0.0, %v2832
      %v2834 = vpop.f32.mrb[0].mxu0
      %v2835 = vpop.f32.mrb[0].mxu0
      %v2836 = vadd.f32 0.0, %v2835
      %v2837 = vpop.f32.mrb[0].mxu0
      %2838 = vmatprep.mubr.bf16.mxu0 0
      %2839 = vmatmul.mubr.bf16.gmra.mrb[0].mxu0 %v2714
      %v2840 = vpop.f32.mrb[0].mxu0
      %v2841 = vadd.f32 0.0, %v2840
      %v2842 = vpop.f32.mrb[0].mxu0
      %v2843 = vpop.f32.mrb[0].mxu0
      %v2844 = vadd.f32 0.0, %v2843
      %v2845 = vpop.f32.mrb[0].mxu0
      %2846 = vmatprep.mubr.bf16.mxu0 0
      %2847 = vmatmul.mubr.bf16.gmra.mrb[0].mxu0 %v2717
      %v2848 = vpop.f32.mrb[0].mxu0
      %v2849 = vadd.f32 0.0, %v2848
      %v2850 = vpop.f32.mrb[0].mxu0
      %v2851 = vpop.f32.mrb[0].mxu0
      %v2852 = vadd.f32 0.0, %v2851
      %v2853 = vpop.f32.mrb[0].mxu0
      %2854 = vmatprep.mubr.bf16.mxu0 0
      %2855 = vmatmul.mubr.bf16.gmra.mrb[0].mxu0 %v2720
      %v2856 = vpop.f32.mrb[0].mxu0
      %v2857 = vadd.f32 0.0, %v2856
      %v2858 = vpop.f32.mrb[0].mxu0
      %v2859 = vpop.f32.mrb[0].mxu0
      %v2860 = vadd.f32 0.0, %v2859
      %v2861 = vpop.f32.mrb[0].mxu0
      %2862 = vmatprep.mubr.bf16.mxu0 0
      %2863 = vmatmul.mubr.bf16.gmra.mrb[0].mxu0 %v2723
      %v2864 = vpop.f32.mrb[0].mxu0
      %v2865 = vadd.f32 0.0, %v2864
      %v2866 = vpop.f32.mrb[0].mxu0
      %v2867 = vpop.f32.mrb[0].mxu0
      %v2868 = vadd.f32 0.0, %v2867
      %v2869 = vpop.f32.mrb[0].mxu0
      %2870 = vmatprep.mubr.bf16.mxu0 0
      %2871 = vmatmul.mubr.bf16.gmra.mrb[0].mxu0 %v2726
      %v2872 = vpop.f32.mrb[0].mxu0
      %v2873 = vadd.f32 0.0, %v2872
      %v2874 = vpop.f32.mrb[0].mxu0
      %v2875 = vpop.f32.mrb[0].mxu0
      %v2876 = vadd.f32 0.0, %v2875
      %v2877 = vpop.f32.mrb[0].mxu0
      %2878 = vmatprep.mubr.bf16.mxu0 0
      %2879 = vmatmul.mubr.bf16.gmra.mrb[0].mxu0 %v2729
      %v2880 = vpop.f32.mrb[0].mxu0
      %v2881 = vadd.f32 0.0, %v2880
      %v2882 = vpop.f32.mrb[0].mxu0
      %v2883 = vpop.f32.mrb[0].mxu0
      %v2884 = vadd.f32 0.0, %v2883
      %v2885 = vpop.f32.mrb[0].mxu0
      %2886 = vmatprep.mubr.bf16.mxu0 0
      %2887 = vmatmul.mubr.bf16.gmra.mrb[0].mxu0 %v2732
      %v2888 = vpop.f32.mrb[0].mxu0
      %v2889 = vadd.f32 0.0, %v2888
      %v2890 = vpop.f32.mrb[0].mxu0
      %v2891 = vpop.f32.mrb[0].mxu0
      %v2892 = vadd.f32 0.0, %v2891
      %v2893 = vpop.f32.mrb[0].mxu0
      %2894 = vdwg.mxu0
      %v2895 = vadd.f32 %v2589, %v2769
      %v2896 = vadd.f32 %v2590, %v2772
      %v2897 = vadd.f32 %v2591, %v2777
      %v2898 = vadd.f32 %v2592, %v2780
      %v2899 = vadd.f32 %v2593, %v2785
      %v2900 = vadd.f32 %v2594, %v2788
      %v2901 = vadd.f32 %v2595, %v2793
      %v2902 = vadd.f32 %v2596, %v2796
      %v2903 = vadd.f32 %v2597, %v2801
      %v2904 = vadd.f32 %v2598, %v2804
      %v2905 = vadd.f32 %v2599, %v2809
      %v2906 = vadd.f32 %v2600, %v2812
      %v2907 = vadd.f32 %v2601, %v2817
      %v2908 = vadd.f32 %v2602, %v2820
      %v2909 = vadd.f32 %v2603, %v2825
      %v2910 = vadd.f32 %v2604, %v2828
      %v2911 = vadd.f32 %v2605, %v2833
      %v2912 = vadd.f32 %v2606, %v2836
      %v2913 = vadd.f32 %v2607, %v2841
      %v2914 = vadd.f32 %v2608, %v2844
      %v2915 = vadd.f32 %v2609, %v2849
      %v2916 = vadd.f32 %v2610, %v2852
      %v2917 = vadd.f32 %v2611, %v2857
      %v2918 = vadd.f32 %v2612, %v2860
      %v2919 = vadd.f32 %v2613, %v2865
      %v2920 = vadd.f32 %v2614, %v2868
      %v2921 = vadd.f32 %v2615, %v2873
      %v2922 = vadd.f32 %v2616, %v2876
      %v2923 = vadd.f32 %v2617, %v2881
      %v2924 = vadd.f32 %v2618, %v2884
      %v2925 = vadd.f32 %v2619, %v2889
      %v2926 = vadd.f32 %v2620, %v2892
      %v2927 = vld [vmem:[%s2314 + $0x2] sm:$0xff]
      %v2928 = vld [vmem:[%s2314 + $0xa] sm:$0xff]
      %v2929 = vld [vmem:[%s2314 + $0x1a] sm:$0xff]
      %v2930 = vld [vmem:[%s2314 + $0x22] sm:$0xff]
      %v2931 = vld [vmem:[%s2314 + $0x32] sm:$0xff]
      %v2932 = vld [vmem:[%s2314 + $0x3a] sm:$0xff]
      %v2933 = vld [vmem:[%s2314 + $0x4a] sm:$0xff]
      %v2934 = vld [vmem:[%s2314 + $0x52] sm:$0xff]
      %v2935 = vld [vmem:[%s2314 + $0x62] sm:$0xff]
      %v2936 = vld [vmem:[%s2314 + $0x6a] sm:$0xff]
      %v2937 = vld [vmem:[%s2314 + $0x7a] sm:$0xff]
      %v2938 = vld [vmem:[%s2314 + $0x82] sm:$0xff]
      %v2939 = vld [vmem:[%s2314 + $0x92] sm:$0xff]
      %v2940 = vld [vmem:[%s2314 + $0x9a] sm:$0xff]
      %v2941 = vld [vmem:[%s2314 + $0xaa] sm:$0xff]
      %v2942 = vld [vmem:[%s2314 + $0xb2] sm:$0xff]
      %v2943 = vld [vmem:[%s2314 + $0xc2] sm:$0xff]
      %v2944 = vld [vmem:[%s2314 + $0xca] sm:$0xff]
      %v2945 = vld [vmem:[%s2314 + $0xda] sm:$0xff]
      %v2946 = vld [vmem:[%s2314 + $0xe2] sm:$0xff]
      %v2947 = vld [vmem:[%s2314 + $0xf2] sm:$0xff]
      %v2948 = vld [vmem:[%s2314 + $0xfa] sm:$0xff]
      %v2949 = vld [vmem:[%s2314 + $0x10a] sm:$0xff]
      %v2950 = vld [vmem:[%s2314 + $0x112] sm:$0xff]
      %v2951 = vld [vmem:[%s2314 + $0x122] sm:$0xff]
      %v2952 = vld [vmem:[%s2314 + $0x12a] sm:$0xff]
      %v2953 = vld [vmem:[%s2314 + $0x13a] sm:$0xff]
      %v2954 = vld [vmem:[%s2314 + $0x142] sm:$0xff]
      %v2955 = vld [vmem:[%s2314 + $0x152] sm:$0xff]
      %v2956 = vld [vmem:[%s2314 + $0x15a] sm:$0xff]
      %v2957 = vld [vmem:[%s2314 + $0x16a] sm:$0xff]
      %v2958 = vld [vmem:[%s2314 + $0x172] sm:$0xff]
      %v2959 = vpack.c.bf16 %v2928, %v2927
      %v2960 = vpack.c.bf16 %v2930, %v2929
      %v2961 = vpack.c.bf16 %v2932, %v2931
      %v2962 = vpack.c.bf16 %v2934, %v2933
      %v2963 = vpack.c.bf16 %v2936, %v2935
      %v2964 = vpack.c.bf16 %v2938, %v2937
      %v2965 = vpack.c.bf16 %v2940, %v2939
      %v2966 = vpack.c.bf16 %v2942, %v2941
      %v2967 = vpack.c.bf16 %v2944, %v2943
      %v2968 = vpack.c.bf16 %v2946, %v2945
      %v2969 = vpack.c.bf16 %v2948, %v2947
      %v2970 = vpack.c.bf16 %v2950, %v2949
      %v2971 = vpack.c.bf16 %v2952, %v2951
      %v2972 = vpack.c.bf16 %v2954, %v2953
      %v2973 = vpack.c.bf16 %v2956, %v2955
      %v2974 = vpack.c.bf16 %v2958, %v2957
      %s2975 = scalar_lea.vmem %s3, 128
      %v2976 = vld [vmem:[%s2975] sm:$0xf]
      %v2977 = vld [vmem:[%s2975 + $0x4] sm:$0xf]
      %v2978 = vld [vmem:[%s2975 + $0x8] sm:$0xf]
      %v2979 = vld [vmem:[%s2975 + $0xc] sm:$0xf]
      %v2984 = vunpack.c.l.b16 %v2976
      %v2985 = vunpack.c.l.b16 %v2977
      %v2986 = vunpack.c.l.b16 %v2978
      %v2987 = vunpack.c.l.b16 %v2979
      %v2988 = vpack.c.b16 %v2985, %v2984
      %v2989 = vpack.c.b16 %v2987, %v2986
      %v2993 = vsel %vm280, %v2959, 0
      %v2996 = vsel %vm280, %v2960, 0
      %v2999 = vsel %vm280, %v2961, 0
      %v3002 = vsel %vm280, %v2962, 0
      %v3005 = vsel %vm280, %v2963, 0
      %v3008 = vsel %vm280, %v2964, 0
      %v3011 = vsel %vm280, %v2965, 0
      %v3014 = vsel %vm280, %v2966, 0
      %v3017 = vsel %vm280, %v2967, 0
      %v3020 = vsel %vm280, %v2968, 0
      %v3023 = vsel %vm280, %v2969, 0
      %v3026 = vsel %vm280, %v2970, 0
      %v3029 = vsel %vm280, %v2971, 0
      %v3032 = vsel %vm280, %v2972, 0
      %v3035 = vsel %vm280, %v2973, 0
      %v3038 = vsel %vm280, %v2974, 0
      %3040 = vmatprep.subr.bf16.mxu0 0
      %3041 = vmatpush1.bf16.msra.mxu0 %v2988
      %3042 = vmatprep.subr.bf16.mxu0 0
      %3043 = vmatpush1.bf16.msra.mxu0 %v2989
      %3044 = vmatprep.subr.bf16.mxu0 0
      %3045 = vmatpush1.bf16.msra.mxu0 0
      %3046 = vmatprep.subr.bf16.mxu0 0
      %3047 = vmatpush1.bf16.msra.mxu0 0
      %3048 = vmatprep.subr.bf16.mxu0 0
      %3049 = vmatpush1.bf16.msra.mxu0 0
      %3050 = vmatprep.subr.bf16.mxu0 0
      %3051 = vmatpush1.bf16.msra.mxu0 0
      %3052 = vmatprep.subr.bf16.mxu0 0
      %3053 = vmatpush1.bf16.msra.mxu0 0
      %3054 = vmatprep.subr.bf16.mxu0 0
      %3055 = vmatpush1.bf16.msra.mxu0 0
      %3056 = vmatprep.subr.bf16.mxu0 0
      %3057 = vmatpush1.bf16.msra.mxu0 0
      %3058 = vmatprep.subr.bf16.mxu0 0
      %3059 = vmatpush1.bf16.msra.mxu0 0
      %3060 = vmatprep.subr.bf16.mxu0 0
      %3061 = vmatpush1.bf16.msra.mxu0 0
      %3062 = vmatprep.subr.bf16.mxu0 0
      %3063 = vmatpush1.bf16.msra.mxu0 0
      %3064 = vmatprep.subr.bf16.mxu0 0
      %3065 = vmatpush1.bf16.msra.mxu0 0
      %3066 = vmatprep.subr.bf16.mxu0 0
      %3067 = vmatpush1.bf16.msra.mxu0 0
      %3068 = vmatprep.subr.bf16.mxu0 0
      %3069 = vmatpush1.bf16.msra.mxu0 0
      %3070 = vmatprep.subr.bf16.mxu0 0
      %3071 = vmatpush1.bf16.msra.mxu0 0
      %3072 = vmatprep.mubr.bf16.mxu0 0
      %3073 = vmatmul.mubr.bf16.gmra.mrb[0].mxu0 %v2993
      %v3074 = vpop.f32.mrb[0].mxu0
      %v3075 = vadd.f32 0.0, %v3074
      %v3076 = vpop.f32.mrb[0].mxu0
      %v3077 = vpop.f32.mrb[0].mxu0
      %v3078 = vadd.f32 0.0, %v3077
      %v3079 = vpop.f32.mrb[0].mxu0
      %3080 = vmatprep.mubr.bf16.mxu0 0
      %3081 = vmatmul.mubr.bf16.gmra.mrb[0].mxu0 %v2996
      %v3082 = vpop.f32.mrb[0].mxu0
      %v3083 = vadd.f32 0.0, %v3082
      %v3084 = vpop.f32.mrb[0].mxu0
      %v3085 = vpop.f32.mrb[0].mxu0
      %v3086 = vadd.f32 0.0, %v3085
      %v3087 = vpop.f32.mrb[0].mxu0
      %3088 = vmatprep.mubr.bf16.mxu0 0
      %3089 = vmatmul.mubr.bf16.gmra.mrb[0].mxu0 %v2999
      %v3090 = vpop.f32.mrb[0].mxu0
      %v3091 = vadd.f32 0.0, %v3090
      %v3092 = vpop.f32.mrb[0].mxu0
      %v3093 = vpop.f32.mrb[0].mxu0
      %v3094 = vadd.f32 0.0, %v3093
      %v3095 = vpop.f32.mrb[0].mxu0
      %3096 = vmatprep.mubr.bf16.mxu0 0
      %3097 = vmatmul.mubr.bf16.gmra.mrb[0].mxu0 %v3002
      %v3098 = vpop.f32.mrb[0].mxu0
      %v3099 = vadd.f32 0.0, %v3098
      %v3100 = vpop.f32.mrb[0].mxu0
      %v3101 = vpop.f32.mrb[0].mxu0
      %v3102 = vadd.f32 0.0, %v3101
      %v3103 = vpop.f32.mrb[0].mxu0
      %3104 = vmatprep.mubr.bf16.mxu0 0
      %3105 = vmatmul.mubr.bf16.gmra.mrb[0].mxu0 %v3005
      %v3106 = vpop.f32.mrb[0].mxu0
      %v3107 = vadd.f32 0.0, %v3106
      %v3108 = vpop.f32.mrb[0].mxu0
      %v3109 = vpop.f32.mrb[0].mxu0
      %v3110 = vadd.f32 0.0, %v3109
      %v3111 = vpop.f32.mrb[0].mxu0
      %3112 = vmatprep.mubr.bf16.mxu0 0
      %3113 = vmatmul.mubr.bf16.gmra.mrb[0].mxu0 %v3008
      %v3114 = vpop.f32.mrb[0].mxu0
      %v3115 = vadd.f32 0.0, %v3114
      %v3116 = vpop.f32.mrb[0].mxu0
      %v3117 = vpop.f32.mrb[0].mxu0
      %v3118 = vadd.f32 0.0, %v3117
      %v3119 = vpop.f32.mrb[0].mxu0
      %3120 = vmatprep.mubr.bf16.mxu0 0
      %3121 = vmatmul.mubr.bf16.gmra.mrb[0].mxu0 %v3011
      %v3122 = vpop.f32.mrb[0].mxu0
      %v3123 = vadd.f32 0.0, %v3122
      %v3124 = vpop.f32.mrb[0].mxu0
      %v3125 = vpop.f32.mrb[0].mxu0
      %v3126 = vadd.f32 0.0, %v3125
      %v3127 = vpop.f32.mrb[0].mxu0
      %3128 = vmatprep.mubr.bf16.mxu0 0
      %3129 = vmatmul.mubr.bf16.gmra.mrb[0].mxu0 %v3014
      %v3130 = vpop.f32.mrb[0].mxu0
      %v3131 = vadd.f32 0.0, %v3130
      %v3132 = vpop.f32.mrb[0].mxu0
      %v3133 = vpop.f32.mrb[0].mxu0
      %v3134 = vadd.f32 0.0, %v3133
      %v3135 = vpop.f32.mrb[0].mxu0
      %3136 = vmatprep.mubr.bf16.mxu0 0
      %3137 = vmatmul.mubr.bf16.gmra.mrb[0].mxu0 %v3017
      %v3138 = vpop.f32.mrb[0].mxu0
      %v3139 = vadd.f32 0.0, %v3138
      %v3140 = vpop.f32.mrb[0].mxu0
      %v3141 = vpop.f32.mrb[0].mxu0
      %v3142 = vadd.f32 0.0, %v3141
      %v3143 = vpop.f32.mrb[0].mxu0
      %3144 = vmatprep.mubr.bf16.mxu0 0
      %3145 = vmatmul.mubr.bf16.gmra.mrb[0].mxu0 %v3020
      %v3146 = vpop.f32.mrb[0].mxu0
      %v3147 = vadd.f32 0.0, %v3146
      %v3148 = vpop.f32.mrb[0].mxu0
      %v3149 = vpop.f32.mrb[0].mxu0
      %v3150 = vadd.f32 0.0, %v3149
      %v3151 = vpop.f32.mrb[0].mxu0
      %3152 = vmatprep.mubr.bf16.mxu0 0
      %3153 = vmatmul.mubr.bf16.gmra.mrb[0].mxu0 %v3023
      %v3154 = vpop.f32.mrb[0].mxu0
      %v3155 = vadd.f32 0.0, %v3154
      %v3156 = vpop.f32.mrb[0].mxu0
      %v3157 = vpop.f32.mrb[0].mxu0
      %v3158 = vadd.f32 0.0, %v3157
      %v3159 = vpop.f32.mrb[0].mxu0
      %3160 = vmatprep.mubr.bf16.mxu0 0
      %3161 = vmatmul.mubr.bf16.gmra.mrb[0].mxu0 %v3026
      %v3162 = vpop.f32.mrb[0].mxu0
      %v3163 = vadd.f32 0.0, %v3162
      %v3164 = vpop.f32.mrb[0].mxu0
      %v3165 = vpop.f32.mrb[0].mxu0
      %v3166 = vadd.f32 0.0, %v3165
      %v3167 = vpop.f32.mrb[0].mxu0
      %3168 = vmatprep.mubr.bf16.mxu0 0
      %3169 = vmatmul.mubr.bf16.gmra.mrb[0].mxu0 %v3029
      %v3170 = vpop.f32.mrb[0].mxu0
      %v3171 = vadd.f32 0.0, %v3170
      %v3172 = vpop.f32.mrb[0].mxu0
      %v3173 = vpop.f32.mrb[0].mxu0
      %v3174 = vadd.f32 0.0, %v3173
      %v3175 = vpop.f32.mrb[0].mxu0
      %3176 = vmatprep.mubr.bf16.mxu0 0
      %3177 = vmatmul.mubr.bf16.gmra.mrb[0].mxu0 %v3032
      %v3178 = vpop.f32.mrb[0].mxu0
      %v3179 = vadd.f32 0.0, %v3178
      %v3180 = vpop.f32.mrb[0].mxu0
      %v3181 = vpop.f32.mrb[0].mxu0
      %v3182 = vadd.f32 0.0, %v3181
      %v3183 = vpop.f32.mrb[0].mxu0
      %3184 = vmatprep.mubr.bf16.mxu0 0
      %3185 = vmatmul.mubr.bf16.gmra.mrb[0].mxu0 %v3035
      %v3186 = vpop.f32.mrb[0].mxu0
      %v3187 = vadd.f32 0.0, %v3186
      %v3188 = vpop.f32.mrb[0].mxu0
      %v3189 = vpop.f32.mrb[0].mxu0
      %v3190 = vadd.f32 0.0, %v3189
      %v3191 = vpop.f32.mrb[0].mxu0
      %3192 = vmatprep.mubr.bf16.mxu0 0
      %3193 = vmatmul.mubr.bf16.gmra.mrb[0].mxu0 %v3038
      %v3194 = vpop.f32.mrb[0].mxu0
      %v3195 = vadd.f32 0.0, %v3194
      %v3196 = vpop.f32.mrb[0].mxu0
      %v3197 = vpop.f32.mrb[0].mxu0
      %v3198 = vadd.f32 0.0, %v3197
      %v3199 = vpop.f32.mrb[0].mxu0
      %3200 = vdwg.mxu0
      %v3201 = vadd.f32 %v2895, %v3075
      %v3202 = vadd.f32 %v2896, %v3078
      %v3203 = vadd.f32 %v2897, %v3083
      %v3204 = vadd.f32 %v2898, %v3086
      %v3205 = vadd.f32 %v2899, %v3091
      %v3206 = vadd.f32 %v2900, %v3094
      %v3207 = vadd.f32 %v2901, %v3099
      %v3208 = vadd.f32 %v2902, %v3102
      %v3209 = vadd.f32 %v2903, %v3107
      %v3210 = vadd.f32 %v2904, %v3110
      %v3211 = vadd.f32 %v2905, %v3115
      %v3212 = vadd.f32 %v2906, %v3118
      %v3213 = vadd.f32 %v2907, %v3123
      %v3214 = vadd.f32 %v2908, %v3126
      %v3215 = vadd.f32 %v2909, %v3131
      %v3216 = vadd.f32 %v2910, %v3134
      %v3217 = vadd.f32 %v2911, %v3139
      %v3218 = vadd.f32 %v2912, %v3142
      %v3219 = vadd.f32 %v2913, %v3147
      %v3220 = vadd.f32 %v2914, %v3150
      %v3221 = vadd.f32 %v2915, %v3155
      %v3222 = vadd.f32 %v2916, %v3158
      %v3223 = vadd.f32 %v2917, %v3163
      %v3224 = vadd.f32 %v2918, %v3166
      %v3225 = vadd.f32 %v2919, %v3171
      %v3226 = vadd.f32 %v2920, %v3174
      %v3227 = vadd.f32 %v2921, %v3179
      %v3228 = vadd.f32 %v2922, %v3182
      %v3229 = vadd.f32 %v2923, %v3187
      %v3230 = vadd.f32 %v2924, %v3190
      %v3231 = vadd.f32 %v2925, %v3195
      %v3232 = vadd.f32 %v2926, %v3198
      %v3233 = vld [vmem:[%s4] sm:$0x1]
      %v3235 = vlaneseq
      %v3236 = vshrl.u32 %v3235, 7
      %v3237 = vsub.s32 0, %v3236
      %v3238 = vrot.slane %v3233, %v3237
      %v3240 = vadd.f32 %v3201, %v3238
      %v3241 = vadd.f32 %v3202, %v3238
      %v3242 = vadd.f32 %v3203, %v3238
      %v3243 = vadd.f32 %v3204, %v3238
      %v3244 = vadd.f32 %v3205, %v3238
      %v3245 = vadd.f32 %v3206, %v3238
      %v3246 = vadd.f32 %v3207, %v3238
      %v3247 = vadd.f32 %v3208, %v3238
      %v3248 = vadd.f32 %v3209, %v3238
      %v3249 = vadd.f32 %v3210, %v3238
      %v3250 = vadd.f32 %v3211, %v3238
      %v3251 = vadd.f32 %v3212, %v3238
      %v3252 = vadd.f32 %v3213, %v3238
      %v3253 = vadd.f32 %v3214, %v3238
      %v3254 = vadd.f32 %v3215, %v3238
      %v3255 = vadd.f32 %v3216, %v3238
      %v3256 = vadd.f32 %v3217, %v3238
      %v3257 = vadd.f32 %v3218, %v3238
      %v3258 = vadd.f32 %v3219, %v3238
      %v3259 = vadd.f32 %v3220, %v3238
      %v3260 = vadd.f32 %v3221, %v3238
      %v3261 = vadd.f32 %v3222, %v3238
      %v3262 = vadd.f32 %v3223, %v3238
      %v3263 = vadd.f32 %v3224, %v3238
      %v3264 = vadd.f32 %v3225, %v3238
      %v3265 = vadd.f32 %v3226, %v3238
      %v3266 = vadd.f32 %v3227, %v3238
      %v3267 = vadd.f32 %v3228, %v3238
      %v3268 = vadd.f32 %v3229, %v3238
      %v3269 = vadd.f32 %v3230, %v3238
      %v3270 = vadd.f32 %v3231, %v3238
      %v3271 = vadd.f32 %v3232, %v3238
      %v3272 = vmax.f32 %v3240, 0.0
      %v3273 = vmax.f32 %v3241, 0.0
      %v3274 = vmax.f32 %v3242, 0.0
      %v3275 = vmax.f32 %v3243, 0.0
      %v3276 = vmax.f32 %v3244, 0.0
      %v3277 = vmax.f32 %v3245, 0.0
      %v3278 = vmax.f32 %v3246, 0.0
      %v3279 = vmax.f32 %v3247, 0.0
      %v3280 = vmax.f32 %v3248, 0.0
      %v3281 = vmax.f32 %v3249, 0.0
      %v3282 = vmax.f32 %v3250, 0.0
      %v3283 = vmax.f32 %v3251, 0.0
      %v3284 = vmax.f32 %v3252, 0.0
      %v3285 = vmax.f32 %v3253, 0.0
      %v3286 = vmax.f32 %v3254, 0.0
      %v3287 = vmax.f32 %v3255, 0.0
      %v3288 = vmax.f32 %v3256, 0.0
      %v3289 = vmax.f32 %v3257, 0.0
      %v3290 = vmax.f32 %v3258, 0.0
      %v3291 = vmax.f32 %v3259, 0.0
      %v3292 = vmax.f32 %v3260, 0.0
      %v3293 = vmax.f32 %v3261, 0.0
      %v3294 = vmax.f32 %v3262, 0.0
      %v3295 = vmax.f32 %v3263, 0.0
      %v3296 = vmax.f32 %v3264, 0.0
      %v3297 = vmax.f32 %v3265, 0.0
      %v3298 = vmax.f32 %v3266, 0.0
      %v3299 = vmax.f32 %v3267, 0.0
      %v3300 = vmax.f32 %v3268, 0.0
      %v3301 = vmax.f32 %v3269, 0.0
      %v3302 = vmax.f32 %v3270, 0.0
      %v3303 = vmax.f32 %v3271, 0.0
      %v3304 = vpack.c.bf16 %v3273, %v3272
      %v3305 = vpack.c.bf16 %v3275, %v3274
      %v3306 = vpack.c.bf16 %v3277, %v3276
      %v3307 = vpack.c.bf16 %v3279, %v3278
      %v3308 = vpack.c.bf16 %v3281, %v3280
      %v3309 = vpack.c.bf16 %v3283, %v3282
      %v3310 = vpack.c.bf16 %v3285, %v3284
      %v3311 = vpack.c.bf16 %v3287, %v3286
      %v3312 = vpack.c.bf16 %v3289, %v3288
      %v3313 = vpack.c.bf16 %v3291, %v3290
      %v3314 = vpack.c.bf16 %v3293, %v3292
      %v3315 = vpack.c.bf16 %v3295, %v3294
      %v3316 = vpack.c.bf16 %v3297, %v3296
      %v3317 = vpack.c.bf16 %v3299, %v3298
      %v3318 = vpack.c.bf16 %v3301, %v3300
      %v3319 = vpack.c.bf16 %v3303, %v3302
      %v3320 = vld [vmem:[%s5] sm:$0xf]
      %v3321 = vld [vmem:[%s5 + $0x4] sm:$0xf]
      %v3322 = vld [vmem:[%s5 + $0x8] sm:$0x3]
      %v3323 = vld [vmem:[%s6] sm:$0xff]
      %v3324 = vld [vmem:[%s6 + $0x8] sm:$0xff]
      %v3325 = vld [vmem:[%s6 + $0x10] sm:$0x7]
      %3327 = vset.pattern.permute.xlu0 0
      %3328 = vperm.xlu0 %3327, %v3323
      %v3329 = vpop.permute.xlu0 %3328
      %3332 = vset.pattern.permute.xlu0 0
      %3333 = vperm.xlu0 %3332, %v3324
      %v3334 = vpop.permute.xlu0 %3333
      %3337 = vset.pattern.permute.xlu0 0
      %3338 = vperm.xlu0 %3337, %v3325
      %v3339 = vpop.permute.xlu0 %3338
      %v3344 = vunpack.c.l.b16 %v3320
      %v3345 = vunpack.c.l.b16 %v3321
      %v3346 = vunpack.c.l.b16 %v3322
      %v3347 = vpack.c.b16 %v3345, %v3344
      %v3348 = vpack.c.b16 %v3346, %v3346
      %vm3349 = vcmask 523264
      %v3351 = vsel %vm3349, %v3347, 0
      %v3354 = vsel %vm3349, %v3348, 0
      %v3357 = vsel %vm3349, %v3304, 0
      %v3360 = vsel %vm3349, %v3305, 0
      %v3363 = vsel %vm3349, %v3306, 0
      %v3366 = vsel %vm3349, %v3307, 0
      %v3369 = vsel %vm3349, %v3308, 0
      %v3372 = vsel %vm3349, %v3309, 0
      %v3375 = vsel %vm3349, %v3310, 0
      %v3378 = vsel %vm3349, %v3311, 0
      %v3381 = vsel %vm3349, %v3312, 0
      %v3384 = vsel %vm3349, %v3313, 0
      %v3387 = vsel %vm3349, %v3314, 0
      %v3390 = vsel %vm3349, %v3315, 0
      %v3393 = vsel %vm3349, %v3316, 0
      %v3396 = vsel %vm3349, %v3317, 0
      %v3399 = vsel %vm3349, %v3318, 0
      %v3402 = vsel %vm3349, %v3319, 0
      %3404 = vmatprep.subr.bf16.mxu0 0
      %3405 = vmatpush1.bf16.xpose.msra.mxu0 %v3357
      %3406 = vmatprep.subr.bf16.mxu0 0
      %3407 = vmatpush1.bf16.xpose.msra.mxu0 %v3360
      %3408 = vmatprep.subr.bf16.mxu0 0
      %3409 = vmatpush1.bf16.xpose.msra.mxu0 %v3363
      %3410 = vmatprep.subr.bf16.mxu0 0
      %3411 = vmatpush1.bf16.xpose.msra.mxu0 %v3366
      %3412 = vmatprep.subr.bf16.mxu0 0
      %3413 = vmatpush1.bf16.xpose.msra.mxu0 %v3369
      %3414 = vmatprep.subr.bf16.mxu0 0
      %3415 = vmatpush1.bf16.xpose.msra.mxu0 %v3372
      %3416 = vmatprep.subr.bf16.mxu0 0
      %3417 = vmatpush1.bf16.xpose.msra.mxu0 %v3375
      %3418 = vmatprep.subr.bf16.mxu0 0
      %3419 = vmatpush1.bf16.xpose.msra.mxu0 %v3378
      %3420 = vmatprep.subr.bf16.mxu0 0
      %3421 = vmatpush1.bf16.xpose.msra.mxu0 %v3381
      %3422 = vmatprep.subr.bf16.mxu0 0
      %3423 = vmatpush1.bf16.xpose.msra.mxu0 %v3384
      %3424 = vmatprep.subr.bf16.mxu0 0
      %3425 = vmatpush1.bf16.xpose.msra.mxu0 %v3387
      %3426 = vmatprep.subr.bf16.mxu0 0
      %3427 = vmatpush1.bf16.xpose.msra.mxu0 %v3390
      %3428 = vmatprep.subr.bf16.mxu0 0
      %3429 = vmatpush1.bf16.xpose.msra.mxu0 %v3393
      %3430 = vmatprep.subr.bf16.mxu0 0
      %3431 = vmatpush1.bf16.xpose.msra.mxu0 %v3396
      %3432 = vmatprep.subr.bf16.mxu0 0
      %3433 = vmatpush1.bf16.xpose.msra.mxu0 %v3399
      %3434 = vmatprep.subr.bf16.mxu0 0
      %3435 = vmatpush1.bf16.xpose.msra.mxu0 %v3402
      %3436 = vmatprep.mubr.bf16.mxu0 0
      %3437 = vmatmul.mubr.bf16.gmra.mrb[0].mxu0 %v3351
      %v3438 = vpop.f32.mrb[0].mxu0
      %v3439 = vadd.f32 %v3329, %v3438
      %v3440 = vpop.f32.mrb[0].mxu0
      %v3441 = vadd.f32 %v3329, %v3440
      %v3442 = vpop.f32.mrb[0].mxu0
      %v3443 = vadd.f32 %v3334, %v3442
      %v3444 = vpop.f32.mrb[0].mxu0
      %v3445 = vadd.f32 %v3334, %v3444
      %3446 = vmatprep.mubr.bf16.mxu0 0
      %3447 = vmatmul.mubr.bf16.gmra.mrb[0].mxu0 %v3354
      %v3448 = vpop.f32.mrb[0].mxu0
      %v3449 = vadd.f32 %v3339, %v3448
      %v3450 = vpop.f32.mrb[0].mxu0
      %v3451 = vadd.f32 %v3339, %v3450
      %v3452 = vpop.f32.mrb[0].mxu0
      %v3453 = vpop.f32.mrb[0].mxu0
      %3454 = vdwg.mxu0
      %3455 = vst [vmem:[%s278] sm:$0xff] %v3439
      %3456 = vst [vmem:[%s278 + $0x8] sm:$0xff] %v3441
      %3457 = vst [vmem:[%s278 + $0x10] sm:$0xff] %v3443
      %3458 = vst [vmem:[%s278 + $0x18] sm:$0xff] %v3445
      %3459 = vst [vmem:[%s278 + $0x20] sm:$0x7] %v3449
      %3460 = vst [vmem:[%s278 + $0x28] sm:$0x7] %v3451
      %p3461 = scmp.lt.s32.totalorder %s18, 1
      %s3462 = scalar_select %p3461, %s18, 1
      %s3463 = smul.addr %s3462, 6
      %s3464 = smul.addr %s3463, 8
      %s3465 = scalar_lea.vmem %s7, %s3464
      // Predicated region
      $region49: #{seg_head_forward.1} parent=47 // pred_check
        %p3466 = pneg %p188
      $region50: #{seg_head_forward.1} parent=47 // pred_check_branch
        %3468 = sbr.rel (%p3466) target = $region52
      $region51: #{seg_head_forward.1} parent=47 // pred_region
        _
      $region52: #{seg_head_forward.1} parent=47 // pred_fallthru
        _
    $region48: #{seg_head_forward.1} parent=5 // pred_fallthru
      _
    %p3469 = scmp.le.s32.totalorder 2, %s13
    // Predicated region
    $region53: #{seg_head_forward.1} parent=5 // pred_check
      %p3470 = pneg %p3469
    $region54: #{seg_head_forward.1} parent=5 // pred_check_branch
      %3472 = sbr.rel (%p3470) target = $region56
    $region55: #{seg_head_forward.1} parent=5 // pred_region
      %s3473 = ssub.s32 %s13, 2
      // Predicated region
      $region57: #{seg_head_forward.1} parent=55 // pred_check
        %p3474 = pneg %p194
      $region58: #{seg_head_forward.1} parent=55 // pred_check_branch
        %3476 = sbr.rel (%p3474) target = $region60
      $region59: #{seg_head_forward.1} parent=55 // pred_region
        %p3477 = scmp.lt.s32.totalorder %s19, 1
        %s3478 = scalar_select %p3477, %s19, 1
        %s3479 = smul.addr %s3478, 6
        %s3480 = smul.addr %s3479, 8
        %s3481 = scalar_lea.vmem %s7, %s3480
      $region60: #{seg_head_forward.1} parent=55 // pred_fallthru
        _
    $region56: #{seg_head_forward.1} parent=5 // pred_fallthru
      _
  $region6: #{seg_head_forward.1} parent=0 // loop_footer
    %s17 = sadd.s32 1, %s13
  $region7: #{seg_head_forward.1} parent=0 // loop_footer_branch
    %12 = sbr.rel target = $region3
  $region8: #{seg_head_forward.1} parent=0 // loop_exit
    _

</llo_original>
